<compile_context>
chip_gen: v5e
topology: v5e:2x2
jax: 0.10.0
libtpu: 0.0.40
codegen_flags: <defaults>
</compile_context>

<pallas_src>
import jax
import jax.numpy as jnp
from jax.experimental import pallas as pl
from jax.experimental.pallas import tpu as pltpu

# Problem sizes (consistent with the module: 8 latent channels, group_in
# compresses to 4, hidden width 512).
B = 2
H = 16
W = 16
HW = H * W               # 256 pixels -> lane axis inside the kernel
C_IN = 8                 # latent channels (group_in input / group_out output)
C_MID = 512              # hidden width of group_in / group_out
C_COMP = 4               # compressed channels fed to the (surrogate) UNet
NUM_TRAIN_TIMESTEPS = 1000
SNR_GAMMA = 5.0          # set to None for plain mean MSE


# ----------------------------------------------------------------------------
# Single fused kernel.  No grid — whole problem resident in VMEM; per-batch
# scalars (scheduler coefficients, SNR weight) read from SMEM; B=2 statically
# unrolled.  All matmuls: bf16 operands, f32 accumulation (single-pass MXU).
# ----------------------------------------------------------------------------
def _fused_forward_kernel(coef_ref, lat_ref, noi_ref,
                          w13_ref, w24_ref, b13_ref, b24_ref, loss_ref):
    # Packed weights (bf16) and biases (f32); static slices of the refs.
    w1 = w13_ref[:, 0:C_IN]                   # (512, 8)  group_in.0 weight (out,in)
    w3 = w13_ref[:, C_IN:C_IN + C_COMP]       # (512, 4)  group_out.0 weight
    w2 = w24_ref[0:C_COMP, :]                 # (4, 512)  group_in.1 weight
    w4 = w24_ref[C_COMP:C_COMP + C_IN, :]     # (8, 512)  group_out.1 weight
    b1 = b13_ref[:, 0:1]                      # (512, 1)
    b3 = b13_ref[:, 1:2]                      # (512, 1)
    b2 = b24_ref[0:C_COMP, 0:1]               # (4, 1)
    b4 = b24_ref[0:C_IN, 1:2]                 # (8, 1)

    acc = jnp.zeros((1, 1), jnp.float32)
    for b in range(B):                        # static unroll (B == 2)
        a_t = coef_ref[0, b]                  # sqrt(alphas_cumprod[t_b])
        s_t = coef_ref[1, b]                  # sqrt(1 - alphas_cumprod[t_b])
        w_t = coef_ref[2, b]                  # min(snr, gamma) / snr

        x = lat_ref[b]                        # (8, 256) f32, lane-dense
        eps = noi_ref[b]                      # (8, 256) f32

        # DDPM add_noise (scalar broadcast on the VPU).
        noisy = a_t * x + s_t * eps                                       # (8, 256)

        # group_in: Linear(8->512) -> Linear(512->4), transposed: W @ X.
        h1 = jnp.dot(w1, noisy.astype(jnp.bfloat16),
                     preferred_element_type=jnp.float32) + b1             # (512, 256)
        comp = jnp.dot(w2, h1.astype(jnp.bfloat16),
                       preferred_element_type=jnp.float32) + b2           # (4, 256)

        # TODO(synk): UNet2DConditionModel(comp, t, text) — identity surrogate.
        pred_comp = comp

        # group_out: Linear(4->512) -> Linear(512->8).
        h2 = jnp.dot(w3, pred_comp.astype(jnp.bfloat16),
                     preferred_element_type=jnp.float32) + b3             # (512, 256)
        pred = jnp.dot(w4, h2.astype(jnp.bfloat16),
                       preferred_element_type=jnp.float32) + b4           # (8, 256)

        # SNR-weighted squared error vs epsilon target (= noise), reduced.
        diff = pred - eps
        sq = diff * diff                                                  # (8, 256)
        tot = jnp.sum(jnp.sum(sq, axis=1, keepdims=True),
                      axis=0, keepdims=True)                              # (1, 1)
        acc = acc + w_t * tot

    loss_ref[...] = acc * (1.0 / float(B * HW * C_IN))


def fused_forward(coef, lat3, noi3, w13, w24, b13, b24):
    smem = pl.BlockSpec(memory_space=pltpu.MemorySpace.SMEM)
    vmem = pl.BlockSpec(memory_space=pltpu.MemorySpace.VMEM)
    return pl.pallas_call(
        _fused_forward_kernel,
        out_shape=jax.ShapeDtypeStruct((1, 1), jnp.float32),
        in_specs=[smem, vmem, vmem, vmem, vmem, vmem, vmem],
        out_specs=vmem,
    )(coef, lat3, noi3, w13, w24, b13, b24)


# ----------------------------------------------------------------------------
# Glue: DDPM scheduler tables, parameter init (nn.Linear (out,in) layout),
# forward wrapper.
# ----------------------------------------------------------------------------
def ddpm_tables(num_train_timesteps=NUM_TRAIN_TIMESTEPS,
                beta_start=1e-4, beta_end=2e-2):
    # DDPMScheduler defaults: linear beta schedule.
    betas = jnp.linspace(beta_start, beta_end, num_train_timesteps,
                         dtype=jnp.float32)
    alphas_cumprod = jnp.cumprod(1.0 - betas)
    return jnp.sqrt(alphas_cumprod), jnp.sqrt(1.0 - alphas_cumprod)


def init_params(key):
    ks = jax.random.split(key, 8)
    scale = 0.02
    # nn.Linear stores weight as (out_features, in_features).
    w1 = scale * jax.random.normal(ks[0], (C_MID, C_IN), jnp.float32)    # Linear(8, 512)
    b1 = scale * jax.random.normal(ks[1], (C_MID,), jnp.float32)
    w2 = scale * jax.random.normal(ks[2], (C_COMP, C_MID), jnp.float32)  # Linear(512, 4)
    b2 = scale * jax.random.normal(ks[3], (C_COMP,), jnp.float32)
    w3 = scale * jax.random.normal(ks[4], (C_MID, C_COMP), jnp.float32)  # Linear(4, 512)
    b3 = scale * jax.random.normal(ks[5], (C_MID,), jnp.float32)
    w4 = scale * jax.random.normal(ks[6], (C_IN, C_MID), jnp.float32)    # Linear(512, 8)
    b4 = scale * jax.random.normal(ks[7], (C_IN,), jnp.float32)
    return (w1, b1, w2, b2, w3, b3, w4, b4)


def audio_diffusion_forward(latents_nchw, encoder_hidden_states, timesteps,
                            noise_nchw, params, snr_gamma=SNR_GAMMA):
    """Mirrors AudioDiffusion.forward (pre-trained branch, epsilon prediction)."""
    (w1, b1, w2, b2, w3, b3, w4, b4) = params
    sqrt_ac, sqrt_1m_ac = ddpm_tables()

    # Per-timestep scheduler coefficients and SNR-weighted MSE weights.
    a_t = sqrt_ac[timesteps].astype(jnp.float32)          # (B,)
    s_t = sqrt_1m_ac[timesteps].astype(jnp.float32)       # (B,)
    if snr_gamma is None:
        weights = jnp.ones_like(a_t)
    else:
        snr = (a_t / s_t) ** 2
        weights = jnp.minimum(snr, snr_gamma) / snr
    coef = jnp.stack([a_t, s_t, weights], axis=0)          # (3, B) -> SMEM

    # Free reshapes of the contiguous NCHW tensors (no device transpose);
    # HW=256 lands on the lane axis inside the kernel.
    lat3 = latents_nchw.reshape(B, C_IN, HW)
    noi3 = noise_nchw.reshape(B, C_IN, HW)

    # Pack the tiny weights/biases (DMA-descriptor count 13 -> 8) and pre-cast
    # weights to bf16 (single-pass MXU; f32 accumulation in-kernel).
    w13 = jnp.concatenate([w1, w3], axis=1).astype(jnp.bfloat16)   # (512, 12)
    w24 = jnp.concatenate([w2, w4], axis=0).astype(jnp.bfloat16)   # (12, 512)
    b13 = jnp.stack([b1, b3], axis=1).astype(jnp.float32)          # (512, 2)
    b2p = jnp.pad(b2, (0, C_IN - C_COMP))
    b24 = jnp.stack([b2p, b4], axis=1).astype(jnp.float32)         # (8, 2)

    del encoder_hidden_states  # consumed only by the (surrogate) UNet

    loss = fused_forward(coef, lat3, noi3, w13, w24, b13, b24)     # (1, 1)
    return loss[0, 0]


# Pure-JAX reference of the same forward (correctness sanity check).
def reference_forward(latents_nchw, timesteps, noise_nchw, params,
                      snr_gamma=SNR_GAMMA):
    (w1, b1, w2, b2, w3, b3, w4, b4) = params
    sqrt_ac, sqrt_1m_ac = ddpm_tables()
    a_t = sqrt_ac[timesteps].astype(jnp.float32)
    s_t = sqrt_1m_ac[timesteps].astype(jnp.float32)
    noisy = (a_t[:, None, None, None] * latents_nchw
             + s_t[:, None, None, None] * noise_nchw)               # NCHW
    x = jnp.transpose(noisy, (0, 2, 3, 1))                          # NHWC
    h = jnp.dot(x, w1.T) + b1
    comp = jnp.dot(h, w2.T) + b2
    h2 = jnp.dot(comp, w3.T) + b3
    pred = jnp.dot(h2, w4.T) + b4                                   # NHWC
    target = jnp.transpose(noise_nchw, (0, 2, 3, 1))
    per_sample = jnp.mean((pred - target) ** 2, axis=(1, 2, 3))     # (B,)
    if snr_gamma is None:
        return jnp.mean(per_sample)
    snr = (a_t / s_t) ** 2
    w = jnp.minimum(snr, snr_gamma) / snr
    return jnp.mean(per_sample * w)


if __name__ == "__main__":
    key = jax.random.PRNGKey(0)
    k_lat, k_noise, k_t, k_txt, k_par = jax.random.split(key, 5)

    latents = jax.random.normal(k_lat, (B, C_IN, H, W), jnp.float32)    # NCHW
    noise = jax.random.normal(k_noise, (B, C_IN, H, W), jnp.float32)    # NCHW
    timesteps = jax.random.randint(k_t, (B,), 0, NUM_TRAIN_TIMESTEPS)
    # synthetic text-encoder output (seq=8, hidden=32); unused by surrogate UNet.
    encoder_hidden_states = jax.random.normal(k_txt, (B, 8, 32), jnp.float32)

    params = init_params(k_par)

    fwd = jax.jit(audio_diffusion_forward)
    loss = jax.block_until_ready(
        fwd(latents, encoder_hidden_states, timesteps, noise, params))

    ref = reference_forward(latents, timesteps, noise, params)
    assert jnp.isfinite(loss), "loss is not finite"
    assert jnp.allclose(loss, ref, rtol=2e-2, atol=1e-4), (loss, ref)
    print("KERNEL_OK")
</pallas_src>

<mosaic_0001>
module attributes {stable_mosaic.version = 11 : i64} {
  func.func @_fused_forward_kernel(%arg0: memref<3x2xf32, #tpu.memory_space<smem>>, %arg1: memref<2x8x256xf32, #tpu.memory_space<vmem>>, %arg2: memref<2x8x256xf32, #tpu.memory_space<vmem>>, %arg3: memref<512x12xbf16, #tpu.memory_space<vmem>>, %arg4: memref<12x512xbf16, #tpu.memory_space<vmem>>, %arg5: memref<512x2xf32, #tpu.memory_space<vmem>>, %arg6: memref<8x2xf32, #tpu.memory_space<vmem>>, %arg7: memref<1x1xf32, #tpu.memory_space<vmem>>) attributes {dimension_semantics = [], scalar_prefetch = 0 : i64, scratch_operands = 0 : i64, tpu.core_type = #tpu.core_type<tc>} {
    %c0 = arith.constant 0 : index
    %c0_0 = arith.constant 0 : index
    %0 = vector.load %arg3[%c0, %c0_0] : memref<512x12xbf16, #tpu.memory_space<vmem>>, vector<512x8xbf16>
    %c0_1 = arith.constant 0 : index
    %c8 = arith.constant 8 : index
    %1 = vector.load %arg3[%c0_1, %c8] : memref<512x12xbf16, #tpu.memory_space<vmem>>, vector<512x4xbf16>
    %c0_2 = arith.constant 0 : index
    %c0_3 = arith.constant 0 : index
    %2 = vector.load %arg4[%c0_2, %c0_3] : memref<12x512xbf16, #tpu.memory_space<vmem>>, vector<4x512xbf16>
    %c4 = arith.constant 4 : index
    %c0_4 = arith.constant 0 : index
    %3 = vector.load %arg4[%c4, %c0_4] : memref<12x512xbf16, #tpu.memory_space<vmem>>, vector<8x512xbf16>
    %c0_5 = arith.constant 0 : index
    %c0_6 = arith.constant 0 : index
    %4 = vector.load %arg5[%c0_5, %c0_6] : memref<512x2xf32, #tpu.memory_space<vmem>>, vector<512x1xf32>
    %c0_7 = arith.constant 0 : index
    %c1 = arith.constant 1 : index
    %5 = vector.load %arg5[%c0_7, %c1] : memref<512x2xf32, #tpu.memory_space<vmem>>, vector<512x1xf32>
    %c0_8 = arith.constant 0 : index
    %c0_9 = arith.constant 0 : index
    %6 = vector.load %arg6[%c0_8, %c0_9] : memref<8x2xf32, #tpu.memory_space<vmem>>, vector<4x1xf32>
    %c0_10 = arith.constant 0 : index
    %c1_11 = arith.constant 1 : index
    %7 = vector.load %arg6[%c0_10, %c1_11] : memref<8x2xf32, #tpu.memory_space<vmem>>, vector<8x1xf32>
    %cst = arith.constant 0.000000e+00 : f32
    %8 = vector.broadcast %cst : f32 to vector<1x1xf32>
    %c0_12 = arith.constant 0 : index
    %c0_13 = arith.constant 0 : index
    %9 = memref.load %arg0[%c0_12, %c0_13] : memref<3x2xf32, #tpu.memory_space<smem>>
    %c1_14 = arith.constant 1 : index
    %c0_15 = arith.constant 0 : index
    %10 = memref.load %arg0[%c1_14, %c0_15] : memref<3x2xf32, #tpu.memory_space<smem>>
    %c2 = arith.constant 2 : index
    %c0_16 = arith.constant 0 : index
    %11 = memref.load %arg0[%c2, %c0_16] : memref<3x2xf32, #tpu.memory_space<smem>>
    %c0_17 = arith.constant 0 : index
    %c0_18 = arith.constant 0 : index
    %c0_19 = arith.constant 0 : index
    %12 = vector.load %arg1[%c0_17, %c0_18, %c0_19] : memref<2x8x256xf32, #tpu.memory_space<vmem>>, vector<1x8x256xf32>
    %13 = vector.shape_cast %12 : vector<1x8x256xf32> to vector<8x256xf32>
    %c0_20 = arith.constant 0 : index
    %c0_21 = arith.constant 0 : index
    %c0_22 = arith.constant 0 : index
    %14 = vector.load %arg2[%c0_20, %c0_21, %c0_22] : memref<2x8x256xf32, #tpu.memory_space<vmem>>, vector<1x8x256xf32>
    %15 = vector.shape_cast %14 : vector<1x8x256xf32> to vector<8x256xf32>
    %16 = vector.broadcast %9 : f32 to vector<8x256xf32>
    %17 = arith.mulf %16, %13 : vector<8x256xf32>
    %18 = vector.broadcast %10 : f32 to vector<8x256xf32>
    %19 = arith.mulf %18, %15 : vector<8x256xf32>
    %20 = arith.addf %17, %19 : vector<8x256xf32>
    %21 = arith.truncf %20 : vector<8x256xf32> to vector<8x256xbf16>
    %cst_23 = arith.constant dense<0.000000e+00> : vector<512x256xf32>
    %22 = tpu.matmul %0, %21, %cst_23 {dimension_numbers = #tpu.dot_dimension_numbers<[1], [0], [0], [1], [0, 0, 1, 1], [], []>} : vector<512x8xbf16>, vector<8x256xbf16>, vector<512x256xf32> -> vector<512x256xf32>
    %23 = vector.broadcast %4 : vector<512x1xf32> to vector<512x256xf32>
    %24 = arith.addf %22, %23 : vector<512x256xf32>
    %25 = arith.truncf %24 : vector<512x256xf32> to vector<512x256xbf16>
    %cst_24 = arith.constant dense<0.000000e+00> : vector<4x256xf32>
    %26 = tpu.matmul %2, %25, %cst_24 {dimension_numbers = #tpu.dot_dimension_numbers<[1], [0], [0], [1], [0, 0, 1, 1], [], []>} : vector<4x512xbf16>, vector<512x256xbf16>, vector<4x256xf32> -> vector<4x256xf32>
    %27 = vector.broadcast %6 : vector<4x1xf32> to vector<4x256xf32>
    %28 = arith.addf %26, %27 : vector<4x256xf32>
    %29 = arith.truncf %28 : vector<4x256xf32> to vector<4x256xbf16>
    %cst_25 = arith.constant dense<0.000000e+00> : vector<512x256xf32>
    %30 = tpu.matmul %1, %29, %cst_25 {dimension_numbers = #tpu.dot_dimension_numbers<[1], [0], [0], [1], [0, 0, 1, 1], [], []>} : vector<512x4xbf16>, vector<4x256xbf16>, vector<512x256xf32> -> vector<512x256xf32>
    %31 = vector.broadcast %5 : vector<512x1xf32> to vector<512x256xf32>
    %32 = arith.addf %30, %31 : vector<512x256xf32>
    %33 = arith.truncf %32 : vector<512x256xf32> to vector<512x256xbf16>
    %cst_26 = arith.constant dense<0.000000e+00> : vector<8x256xf32>
    %34 = tpu.matmul %3, %33, %cst_26 {dimension_numbers = #tpu.dot_dimension_numbers<[1], [0], [0], [1], [0, 0, 1, 1], [], []>} : vector<8x512xbf16>, vector<512x256xbf16>, vector<8x256xf32> -> vector<8x256xf32>
    %35 = vector.broadcast %7 : vector<8x1xf32> to vector<8x256xf32>
    %36 = arith.addf %34, %35 : vector<8x256xf32>
    %37 = arith.subf %36, %15 : vector<8x256xf32>
    %38 = arith.mulf %37, %37 : vector<8x256xf32>
    %cst_27 = arith.constant dense<0.000000e+00> : vector<8xf32>
    %39 = vector.multi_reduction <add>, %38, %cst_27 [1] : vector<8x256xf32> to vector<8xf32>
    %40 = vector.shape_cast %39 : vector<8xf32> to vector<8x1xf32>
    %cst_28 = arith.constant dense<0.000000e+00> : vector<1xf32>
    %41 = vector.multi_reduction <add>, %40, %cst_28 [0] : vector<8x1xf32> to vector<1xf32>
    %42 = vector.shape_cast %41 : vector<1xf32> to vector<1x1xf32>
    %43 = vector.broadcast %11 : f32 to vector<1x1xf32>
    %44 = arith.mulf %43, %42 : vector<1x1xf32>
    %45 = arith.addf %8, %44 : vector<1x1xf32>
    %c0_29 = arith.constant 0 : index
    %c1_30 = arith.constant 1 : index
    %46 = memref.load %arg0[%c0_29, %c1_30] : memref<3x2xf32, #tpu.memory_space<smem>>
    %c1_31 = arith.constant 1 : index
    %c1_32 = arith.constant 1 : index
    %47 = memref.load %arg0[%c1_31, %c1_32] : memref<3x2xf32, #tpu.memory_space<smem>>
    %c2_33 = arith.constant 2 : index
    %c1_34 = arith.constant 1 : index
    %48 = memref.load %arg0[%c2_33, %c1_34] : memref<3x2xf32, #tpu.memory_space<smem>>
    %c1_35 = arith.constant 1 : index
    %c0_36 = arith.constant 0 : index
    %c0_37 = arith.constant 0 : index
    %49 = vector.load %arg1[%c1_35, %c0_36, %c0_37] : memref<2x8x256xf32, #tpu.memory_space<vmem>>, vector<1x8x256xf32>
    %50 = vector.shape_cast %49 : vector<1x8x256xf32> to vector<8x256xf32>
    %c1_38 = arith.constant 1 : index
    %c0_39 = arith.constant 0 : index
    %c0_40 = arith.constant 0 : index
    %51 = vector.load %arg2[%c1_38, %c0_39, %c0_40] : memref<2x8x256xf32, #tpu.memory_space<vmem>>, vector<1x8x256xf32>
    %52 = vector.shape_cast %51 : vector<1x8x256xf32> to vector<8x256xf32>
    %53 = vector.broadcast %46 : f32 to vector<8x256xf32>
    %54 = arith.mulf %53, %50 : vector<8x256xf32>
    %55 = vector.broadcast %47 : f32 to vector<8x256xf32>
    %56 = arith.mulf %55, %52 : vector<8x256xf32>
    %57 = arith.addf %54, %56 : vector<8x256xf32>
    %58 = arith.truncf %57 : vector<8x256xf32> to vector<8x256xbf16>
    %cst_41 = arith.constant dense<0.000000e+00> : vector<512x256xf32>
    %59 = tpu.matmul %0, %58, %cst_41 {dimension_numbers = #tpu.dot_dimension_numbers<[1], [0], [0], [1], [0, 0, 1, 1], [], []>} : vector<512x8xbf16>, vector<8x256xbf16>, vector<512x256xf32> -> vector<512x256xf32>
    %60 = vector.broadcast %4 : vector<512x1xf32> to vector<512x256xf32>
    %61 = arith.addf %59, %60 : vector<512x256xf32>
    %62 = arith.truncf %61 : vector<512x256xf32> to vector<512x256xbf16>
    %cst_42 = arith.constant dense<0.000000e+00> : vector<4x256xf32>
    %63 = tpu.matmul %2, %62, %cst_42 {dimension_numbers = #tpu.dot_dimension_numbers<[1], [0], [0], [1], [0, 0, 1, 1], [], []>} : vector<4x512xbf16>, vector<512x256xbf16>, vector<4x256xf32> -> vector<4x256xf32>
    %64 = vector.broadcast %6 : vector<4x1xf32> to vector<4x256xf32>
    %65 = arith.addf %63, %64 : vector<4x256xf32>
    %66 = arith.truncf %65 : vector<4x256xf32> to vector<4x256xbf16>
    %cst_43 = arith.constant dense<0.000000e+00> : vector<512x256xf32>
    %67 = tpu.matmul %1, %66, %cst_43 {dimension_numbers = #tpu.dot_dimension_numbers<[1], [0], [0], [1], [0, 0, 1, 1], [], []>} : vector<512x4xbf16>, vector<4x256xbf16>, vector<512x256xf32> -> vector<512x256xf32>
    %68 = vector.broadcast %5 : vector<512x1xf32> to vector<512x256xf32>
    %69 = arith.addf %67, %68 : vector<512x256xf32>
    %70 = arith.truncf %69 : vector<512x256xf32> to vector<512x256xbf16>
    %cst_44 = arith.constant dense<0.000000e+00> : vector<8x256xf32>
    %71 = tpu.matmul %3, %70, %cst_44 {dimension_numbers = #tpu.dot_dimension_numbers<[1], [0], [0], [1], [0, 0, 1, 1], [], []>} : vector<8x512xbf16>, vector<512x256xbf16>, vector<8x256xf32> -> vector<8x256xf32>
    %72 = vector.broadcast %7 : vector<8x1xf32> to vector<8x256xf32>
    %73 = arith.addf %71, %72 : vector<8x256xf32>
    %74 = arith.subf %73, %52 : vector<8x256xf32>
    %75 = arith.mulf %74, %74 : vector<8x256xf32>
    %cst_45 = arith.constant dense<0.000000e+00> : vector<8xf32>
    %76 = vector.multi_reduction <add>, %75, %cst_45 [1] : vector<8x256xf32> to vector<8xf32>
    %77 = vector.shape_cast %76 : vector<8xf32> to vector<8x1xf32>
    %cst_46 = arith.constant dense<0.000000e+00> : vector<1xf32>
    %78 = vector.multi_reduction <add>, %77, %cst_46 [0] : vector<8x1xf32> to vector<1xf32>
    %79 = vector.shape_cast %78 : vector<1xf32> to vector<1x1xf32>
    %80 = vector.broadcast %48 : f32 to vector<1x1xf32>
    %81 = arith.mulf %80, %79 : vector<1x1xf32>
    %82 = arith.addf %45, %81 : vector<1x1xf32>
    %cst_47 = arith.constant 2.44140625E-4 : f32
    %83 = vector.broadcast %cst_47 : f32 to vector<1x1xf32>
    %84 = arith.mulf %82, %83 : vector<1x1xf32>
    %c0_48 = arith.constant 0 : index
    %c0_49 = arith.constant 0 : index
    %85 = vector.load %arg7[%c0_48, %c0_49] : memref<1x1xf32, #tpu.memory_space<vmem>>, vector<1x1xf32>
    tpu.vector_store %arg7[%c0_48, %c0_49], %84 {strides = array<i32>} : memref<1x1xf32, #tpu.memory_space<vmem>>, vector<1x1xf32>,
    return
  }
}

</mosaic_0001>

<llo_original>
// kernel: audio_diffusion_forward.1
$region0: #{audio_diffusion_forward.1}
  #allocation0 [shape = 'u32[]', space=smem, size = 0x4, offset = 0x4, fixed_abs, tag = 'smem constant byte address 0x4 - core index']
  #allocation1 [shape = 'u32[72,128]{1,0:T(1,128)}', space=vmem, size = 0x9000, scoped, tag = 'internal scratch']
  %s0 = inlined_call_operand.vmem [shape: f32[3,2], index: 0, kind: input, shape index: {}]
  %s1 = inlined_call_operand.vmem [shape: f32[2,8,256], index: 1, kind: input, shape index: {}]
  %s2 = inlined_call_operand.vmem [shape: f32[2,8,256], index: 2, kind: input, shape index: {}]
  %s3 = inlined_call_operand.vmem [shape: bf16[512,12], index: 3, kind: input, shape index: {}]
  %s4 = inlined_call_operand.vmem [shape: bf16[12,512], index: 4, kind: input, shape index: {}]
  %s5 = inlined_call_operand.vmem [shape: f32[512,2], index: 5, kind: input, shape index: {}]
  %s6 = inlined_call_operand.vmem [shape: f32[8,2], index: 6, kind: input, shape index: {}]
  %s7 = inlined_call_operand.hbm [shape: f32[1,1], index: 7, kind: output, shape index: {}]
  %s8 = sld [smem:[#allocation0]]
  $region42: #{audio_diffusion_forward.1} parent=0
    _
  %s10 = ssub.s32 1, %s8
  %s11 = scalar_select 0, %s10, %s8
  $region1: #{audio_diffusion_forward.1} parent=0
    #allocation2 [shape = 'u8[2048]{0}', space=smem, size = 0x800, scoped, tag = 'input window, operand 0, single buffered']
    #allocation3 [shape = 's32[1]{0}', space=sflag, size = 0x4, scoped, tag = 'scoped memory for audio_diffusion_forward.1']
    #allocation4 [shape = 's32[1]{0}', space=sflag, size = 0x4, scoped, tag = 'scoped memory for audio_diffusion_forward.1']
    #allocation5 [shape = 'u8[512]{0}', space=vmem, size = 0x400, scoped, tag = 'output window, operand 0, single buffered']
    %12 = vsyncpa [#allocation4], 0
    %13 = vsyncpa [#allocation3], 0
    // Predicated region
    $region2: #{audio_diffusion_forward.1} parent=1 // pred_check
      _
    $region3: #{audio_diffusion_forward.1} parent=1 // pred_check_branch
      %15 = sbr.rel (0) target = $region5
    $region4: #{audio_diffusion_forward.1} parent=1 // pred_region
      %17 = vsyncadd [#allocation4], 0
      %s19 = sshll.u32 %s0, 4
      %s20 = int_to_ptr.vmem [resolvable:$true] %s19
      %22 = dma.vmem_to_smem %s20, 64, [#allocation2], [#allocation4]
    $region5: #{audio_diffusion_forward.1} parent=1 // pred_fallthru
      _
    // Predicated region
    $region6: #{audio_diffusion_forward.1} parent=1 // pred_check
      _
    $region7: #{audio_diffusion_forward.1} parent=1 // pred_check_branch
      %24 = sbr.rel (0) target = $region9
    $region8: #{audio_diffusion_forward.1} parent=1 // pred_region
      _
    $region9: #{audio_diffusion_forward.1} parent=1 // pred_fallthru
      _
    // Predicated region
    $region10: #{audio_diffusion_forward.1} parent=1 // pred_check
      _
    $region11: #{audio_diffusion_forward.1} parent=1 // pred_check_branch
      %26 = sbr.rel (0) target = $region13
    $region12: #{audio_diffusion_forward.1} parent=1 // pred_region
      _
    $region13: #{audio_diffusion_forward.1} parent=1 // pred_fallthru
      _
    // Predicated region
    $region14: #{audio_diffusion_forward.1} parent=1 // pred_check
      _
    $region15: #{audio_diffusion_forward.1} parent=1 // pred_check_branch
      %28 = sbr.rel (0) target = $region17
    $region16: #{audio_diffusion_forward.1} parent=1 // pred_region
      _
    $region17: #{audio_diffusion_forward.1} parent=1 // pred_fallthru
      _
    // Predicated region
    $region18: #{audio_diffusion_forward.1} parent=1 // pred_check
      _
    $region19: #{audio_diffusion_forward.1} parent=1 // pred_check_branch
      %30 = sbr.rel (0) target = $region21
    $region20: #{audio_diffusion_forward.1} parent=1 // pred_region
      _
    $region21: #{audio_diffusion_forward.1} parent=1 // pred_fallthru
      _
    // Predicated region
    $region22: #{audio_diffusion_forward.1} parent=1 // pred_check
      _
    $region23: #{audio_diffusion_forward.1} parent=1 // pred_check_branch
      %32 = sbr.rel (0) target = $region25
    $region24: #{audio_diffusion_forward.1} parent=1 // pred_region
      _
    $region25: #{audio_diffusion_forward.1} parent=1 // pred_fallthru
      _
    // Predicated region
    $region26: #{audio_diffusion_forward.1} parent=1 // pred_check
      _
    $region27: #{audio_diffusion_forward.1} parent=1 // pred_check_branch
      %34 = sbr.rel (0) target = $region29
    $region28: #{audio_diffusion_forward.1} parent=1 // pred_region
      _
    $region29: #{audio_diffusion_forward.1} parent=1 // pred_fallthru
      _
    // Predicated region
    $region30: #{audio_diffusion_forward.1} parent=1 // pred_check
      _
    $region31: #{audio_diffusion_forward.1} parent=1 // pred_check_branch
      %36 = sbr.rel (0) target = $region33
    $region32: #{audio_diffusion_forward.1} parent=1 // pred_region
      %38 = dma.done [#allocation4], 64
    $region33: #{audio_diffusion_forward.1} parent=1 // pred_fallthru
      _
    %39 = sfence
    %v41 = vld [vmem:[%s3] sm:$0xf]
    %v42 = vld [vmem:[%s3 + $0x4] sm:$0xf]
    %v43 = vld [vmem:[%s3 + $0x8] sm:$0xf]
    %v44 = vld [vmem:[%s3 + $0xc] sm:$0xf]
    %v45 = vld [vmem:[%s3 + $0x10] sm:$0xf]
    %v46 = vld [vmem:[%s3 + $0x14] sm:$0xf]
    %v47 = vld [vmem:[%s3 + $0x18] sm:$0xf]
    %v48 = vld [vmem:[%s3 + $0x1c] sm:$0xf]
    %v49 = vld [vmem:[%s3 + $0x20] sm:$0xf]
    %v50 = vld [vmem:[%s3 + $0x24] sm:$0xf]
    %v51 = vld [vmem:[%s3 + $0x28] sm:$0xf]
    %v52 = vld [vmem:[%s3 + $0x2c] sm:$0xf]
    %v53 = vld [vmem:[%s3 + $0x30] sm:$0xf]
    %v54 = vld [vmem:[%s3 + $0x34] sm:$0xf]
    %v55 = vld [vmem:[%s3 + $0x38] sm:$0xf]
    %v56 = vld [vmem:[%s3 + $0x3c] sm:$0xf]
    %v57 = vld [vmem:[%s3 + $0x40] sm:$0xf]
    %v58 = vld [vmem:[%s3 + $0x44] sm:$0xf]
    %v59 = vld [vmem:[%s3 + $0x48] sm:$0xf]
    %v60 = vld [vmem:[%s3 + $0x4c] sm:$0xf]
    %v61 = vld [vmem:[%s3 + $0x50] sm:$0xf]
    %v62 = vld [vmem:[%s3 + $0x54] sm:$0xf]
    %v63 = vld [vmem:[%s3 + $0x58] sm:$0xf]
    %v64 = vld [vmem:[%s3 + $0x5c] sm:$0xf]
    %v65 = vld [vmem:[%s3 + $0x60] sm:$0xf]
    %v66 = vld [vmem:[%s3 + $0x64] sm:$0xf]
    %v67 = vld [vmem:[%s3 + $0x68] sm:$0xf]
    %v68 = vld [vmem:[%s3 + $0x6c] sm:$0xf]
    %v69 = vld [vmem:[%s3 + $0x70] sm:$0xf]
    %v70 = vld [vmem:[%s3 + $0x74] sm:$0xf]
    %v71 = vld [vmem:[%s3 + $0x78] sm:$0xf]
    %v72 = vld [vmem:[%s3 + $0x7c] sm:$0xf]
    %v73 = vld [vmem:[%s3 + $0x80] sm:$0xf]
    %v74 = vld [vmem:[%s3 + $0x84] sm:$0xf]
    %v75 = vld [vmem:[%s3 + $0x88] sm:$0xf]
    %v76 = vld [vmem:[%s3 + $0x8c] sm:$0xf]
    %v77 = vld [vmem:[%s3 + $0x90] sm:$0xf]
    %v78 = vld [vmem:[%s3 + $0x94] sm:$0xf]
    %v79 = vld [vmem:[%s3 + $0x98] sm:$0xf]
    %v80 = vld [vmem:[%s3 + $0x9c] sm:$0xf]
    %v81 = vld [vmem:[%s3 + $0xa0] sm:$0xf]
    %v82 = vld [vmem:[%s3 + $0xa4] sm:$0xf]
    %v83 = vld [vmem:[%s3 + $0xa8] sm:$0xf]
    %v84 = vld [vmem:[%s3 + $0xac] sm:$0xf]
    %v85 = vld [vmem:[%s3 + $0xb0] sm:$0xf]
    %v86 = vld [vmem:[%s3 + $0xb4] sm:$0xf]
    %v87 = vld [vmem:[%s3 + $0xb8] sm:$0xf]
    %v88 = vld [vmem:[%s3 + $0xbc] sm:$0xf]
    %v89 = vld [vmem:[%s3 + $0xc0] sm:$0xf]
    %v90 = vld [vmem:[%s3 + $0xc4] sm:$0xf]
    %v91 = vld [vmem:[%s3 + $0xc8] sm:$0xf]
    %v92 = vld [vmem:[%s3 + $0xcc] sm:$0xf]
    %v93 = vld [vmem:[%s3 + $0xd0] sm:$0xf]
    %v94 = vld [vmem:[%s3 + $0xd4] sm:$0xf]
    %v95 = vld [vmem:[%s3 + $0xd8] sm:$0xf]
    %v96 = vld [vmem:[%s3 + $0xdc] sm:$0xf]
    %v97 = vld [vmem:[%s3 + $0xe0] sm:$0xf]
    %v98 = vld [vmem:[%s3 + $0xe4] sm:$0xf]
    %v99 = vld [vmem:[%s3 + $0xe8] sm:$0xf]
    %v100 = vld [vmem:[%s3 + $0xec] sm:$0xf]
    %v101 = vld [vmem:[%s3 + $0xf0] sm:$0xf]
    %v102 = vld [vmem:[%s3 + $0xf4] sm:$0xf]
    %v103 = vld [vmem:[%s3 + $0xf8] sm:$0xf]
    %v104 = vld [vmem:[%s3 + $0xfc] sm:$0xf]
    %v105 = vld [vmem:[%s4] sm:$0x33]
    %v106 = vld [vmem:[%s4 + $0x8] sm:$0x33]
    %v107 = vld [vmem:[%s4] sm:$0xcc]
    %v108 = vld [vmem:[%s4 + $0x8] sm:$0xcc]
    %v109 = vld [vmem:[%s4 + $0x10] sm:$0x33]
    %v110 = vld [vmem:[%s4 + $0x18] sm:$0x33]
    %v111 = vld [vmem:[%s5] sm:$0xff]
    %v112 = vld [vmem:[%s5 + $0x8] sm:$0xff]
    %v113 = vld [vmem:[%s5 + $0x10] sm:$0xff]
    %v114 = vld [vmem:[%s5 + $0x18] sm:$0xff]
    %v115 = vld [vmem:[%s5 + $0x20] sm:$0xff]
    %v116 = vld [vmem:[%s5 + $0x28] sm:$0xff]
    %v117 = vld [vmem:[%s5 + $0x30] sm:$0xff]
    %v118 = vld [vmem:[%s5 + $0x38] sm:$0xff]
    %v119 = vld [vmem:[%s5 + $0x40] sm:$0xff]
    %v120 = vld [vmem:[%s5 + $0x48] sm:$0xff]
    %v121 = vld [vmem:[%s5 + $0x50] sm:$0xff]
    %v122 = vld [vmem:[%s5 + $0x58] sm:$0xff]
    %v123 = vld [vmem:[%s5 + $0x60] sm:$0xff]
    %v124 = vld [vmem:[%s5 + $0x68] sm:$0xff]
    %v125 = vld [vmem:[%s5 + $0x70] sm:$0xff]
    %v126 = vld [vmem:[%s5 + $0x78] sm:$0xff]
    %v127 = vld [vmem:[%s5 + $0x80] sm:$0xff]
    %v128 = vld [vmem:[%s5 + $0x88] sm:$0xff]
    %v129 = vld [vmem:[%s5 + $0x90] sm:$0xff]
    %v130 = vld [vmem:[%s5 + $0x98] sm:$0xff]
    %v131 = vld [vmem:[%s5 + $0xa0] sm:$0xff]
    %v132 = vld [vmem:[%s5 + $0xa8] sm:$0xff]
    %v133 = vld [vmem:[%s5 + $0xb0] sm:$0xff]
    %v134 = vld [vmem:[%s5 + $0xb8] sm:$0xff]
    %v135 = vld [vmem:[%s5 + $0xc0] sm:$0xff]
    %v136 = vld [vmem:[%s5 + $0xc8] sm:$0xff]
    %v137 = vld [vmem:[%s5 + $0xd0] sm:$0xff]
    %v138 = vld [vmem:[%s5 + $0xd8] sm:$0xff]
    %v139 = vld [vmem:[%s5 + $0xe0] sm:$0xff]
    %v140 = vld [vmem:[%s5 + $0xe8] sm:$0xff]
    %v141 = vld [vmem:[%s5 + $0xf0] sm:$0xff]
    %v142 = vld [vmem:[%s5 + $0xf8] sm:$0xff]
    %v143 = vld [vmem:[%s5 + $0x100] sm:$0xff]
    %v144 = vld [vmem:[%s5 + $0x108] sm:$0xff]
    %v145 = vld [vmem:[%s5 + $0x110] sm:$0xff]
    %v146 = vld [vmem:[%s5 + $0x118] sm:$0xff]
    %v147 = vld [vmem:[%s5 + $0x120] sm:$0xff]
    %v148 = vld [vmem:[%s5 + $0x128] sm:$0xff]
    %v149 = vld [vmem:[%s5 + $0x130] sm:$0xff]
    %v150 = vld [vmem:[%s5 + $0x138] sm:$0xff]
    %v151 = vld [vmem:[%s5 + $0x140] sm:$0xff]
    %v152 = vld [vmem:[%s5 + $0x148] sm:$0xff]
    %v153 = vld [vmem:[%s5 + $0x150] sm:$0xff]
    %v154 = vld [vmem:[%s5 + $0x158] sm:$0xff]
    %v155 = vld [vmem:[%s5 + $0x160] sm:$0xff]
    %v156 = vld [vmem:[%s5 + $0x168] sm:$0xff]
    %v157 = vld [vmem:[%s5 + $0x170] sm:$0xff]
    %v158 = vld [vmem:[%s5 + $0x178] sm:$0xff]
    %v159 = vld [vmem:[%s5 + $0x180] sm:$0xff]
    %v160 = vld [vmem:[%s5 + $0x188] sm:$0xff]
    %v161 = vld [vmem:[%s5 + $0x190] sm:$0xff]
    %v162 = vld [vmem:[%s5 + $0x198] sm:$0xff]
    %v163 = vld [vmem:[%s5 + $0x1a0] sm:$0xff]
    %v164 = vld [vmem:[%s5 + $0x1a8] sm:$0xff]
    %v165 = vld [vmem:[%s5 + $0x1b0] sm:$0xff]
    %v166 = vld [vmem:[%s5 + $0x1b8] sm:$0xff]
    %v167 = vld [vmem:[%s5 + $0x1c0] sm:$0xff]
    %v168 = vld [vmem:[%s5 + $0x1c8] sm:$0xff]
    %v169 = vld [vmem:[%s5 + $0x1d0] sm:$0xff]
    %v170 = vld [vmem:[%s5 + $0x1d8] sm:$0xff]
    %v171 = vld [vmem:[%s5 + $0x1e0] sm:$0xff]
    %v172 = vld [vmem:[%s5 + $0x1e8] sm:$0xff]
    %v173 = vld [vmem:[%s5 + $0x1f0] sm:$0xff]
    %v174 = vld [vmem:[%s5 + $0x1f8] sm:$0xff]
    %v175 = vld [vmem:[%s6] sm:$0xf]
    %v176 = vld [vmem:[%s6] sm:$0xff]
    %s177 = sld [smem:[#allocation2]]
    %s178 = sld [smem:[#allocation2 + $0x80]]
    %s179 = sld [smem:[#allocation2 + $0x100]]
    %v180 = vld [vmem:[%s1] sm:$0xff]
    %v181 = vld [vmem:[%s1 + $0x8] sm:$0xff]
    %v182 = vld [vmem:[%s2] sm:$0xff]
    %v183 = vld [vmem:[%s2 + $0x8] sm:$0xff]
    %v184 = vstv %s177
    %v185 = vmul.f32 %v184, %v180
    %v186 = vmul.f32 %v184, %v181
    %v187 = vstv %s178
    %v188 = vmul.f32 %v187, %v182
    %v189 = vmul.f32 %v187, %v183
    %v190 = vadd.f32 %v185, %v188
    %v191 = vadd.f32 %v186, %v189
    %v192 = vpack.c.bf16 %v190, %v190
    %v193 = vpack.c.bf16 %v191, %v191
    %195 = vset.pattern.permute.xlu0 0
    %196 = vperm.xlu0 %195, %v111
    %v197 = vpop.permute.xlu0 %196
    %200 = vset.pattern.permute.xlu0 0
    %201 = vperm.xlu0 %200, %v112
    %v202 = vpop.permute.xlu0 %201
    %205 = vset.pattern.permute.xlu0 0
    %206 = vperm.xlu0 %205, %v113
    %v207 = vpop.permute.xlu0 %206
    %210 = vset.pattern.permute.xlu0 0
    %211 = vperm.xlu0 %210, %v114
    %v212 = vpop.permute.xlu0 %211
    %215 = vset.pattern.permute.xlu0 0
    %216 = vperm.xlu0 %215, %v115
    %v217 = vpop.permute.xlu0 %216
    %220 = vset.pattern.permute.xlu0 0
    %221 = vperm.xlu0 %220, %v116
    %v222 = vpop.permute.xlu0 %221
    %225 = vset.pattern.permute.xlu0 0
    %226 = vperm.xlu0 %225, %v117
    %v227 = vpop.permute.xlu0 %226
    %230 = vset.pattern.permute.xlu0 0
    %231 = vperm.xlu0 %230, %v118
    %v232 = vpop.permute.xlu0 %231
    %235 = vset.pattern.permute.xlu0 0
    %236 = vperm.xlu0 %235, %v119
    %v237 = vpop.permute.xlu0 %236
    %240 = vset.pattern.permute.xlu0 0
    %241 = vperm.xlu0 %240, %v120
    %v242 = vpop.permute.xlu0 %241
    %245 = vset.pattern.permute.xlu0 0
    %246 = vperm.xlu0 %245, %v121
    %v247 = vpop.permute.xlu0 %246
    %250 = vset.pattern.permute.xlu0 0
    %251 = vperm.xlu0 %250, %v122
    %v252 = vpop.permute.xlu0 %251
    %255 = vset.pattern.permute.xlu0 0
    %256 = vperm.xlu0 %255, %v123
    %v257 = vpop.permute.xlu0 %256
    %260 = vset.pattern.permute.xlu0 0
    %261 = vperm.xlu0 %260, %v124
    %v262 = vpop.permute.xlu0 %261
    %265 = vset.pattern.permute.xlu0 0
    %266 = vperm.xlu0 %265, %v125
    %v267 = vpop.permute.xlu0 %266
    %270 = vset.pattern.permute.xlu0 0
    %271 = vperm.xlu0 %270, %v126
    %v272 = vpop.permute.xlu0 %271
    %275 = vset.pattern.permute.xlu0 0
    %276 = vperm.xlu0 %275, %v127
    %v277 = vpop.permute.xlu0 %276
    %280 = vset.pattern.permute.xlu0 0
    %281 = vperm.xlu0 %280, %v128
    %v282 = vpop.permute.xlu0 %281
    %285 = vset.pattern.permute.xlu0 0
    %286 = vperm.xlu0 %285, %v129
    %v287 = vpop.permute.xlu0 %286
    %290 = vset.pattern.permute.xlu0 0
    %291 = vperm.xlu0 %290, %v130
    %v292 = vpop.permute.xlu0 %291
    %295 = vset.pattern.permute.xlu0 0
    %296 = vperm.xlu0 %295, %v131
    %v297 = vpop.permute.xlu0 %296
    %300 = vset.pattern.permute.xlu0 0
    %301 = vperm.xlu0 %300, %v132
    %v302 = vpop.permute.xlu0 %301
    %305 = vset.pattern.permute.xlu0 0
    %306 = vperm.xlu0 %305, %v133
    %v307 = vpop.permute.xlu0 %306
    %310 = vset.pattern.permute.xlu0 0
    %311 = vperm.xlu0 %310, %v134
    %v312 = vpop.permute.xlu0 %311
    %315 = vset.pattern.permute.xlu0 0
    %316 = vperm.xlu0 %315, %v135
    %v317 = vpop.permute.xlu0 %316
    %320 = vset.pattern.permute.xlu0 0
    %321 = vperm.xlu0 %320, %v136
    %v322 = vpop.permute.xlu0 %321
    %325 = vset.pattern.permute.xlu0 0
    %326 = vperm.xlu0 %325, %v137
    %v327 = vpop.permute.xlu0 %326
    %330 = vset.pattern.permute.xlu0 0
    %331 = vperm.xlu0 %330, %v138
    %v332 = vpop.permute.xlu0 %331
    %335 = vset.pattern.permute.xlu0 0
    %336 = vperm.xlu0 %335, %v139
    %v337 = vpop.permute.xlu0 %336
    %340 = vset.pattern.permute.xlu0 0
    %341 = vperm.xlu0 %340, %v140
    %v342 = vpop.permute.xlu0 %341
    %345 = vset.pattern.permute.xlu0 0
    %346 = vperm.xlu0 %345, %v141
    %v347 = vpop.permute.xlu0 %346
    %350 = vset.pattern.permute.xlu0 0
    %351 = vperm.xlu0 %350, %v142
    %v352 = vpop.permute.xlu0 %351
    %355 = vset.pattern.permute.xlu0 0
    %356 = vperm.xlu0 %355, %v143
    %v357 = vpop.permute.xlu0 %356
    %360 = vset.pattern.permute.xlu0 0
    %361 = vperm.xlu0 %360, %v144
    %v362 = vpop.permute.xlu0 %361
    %365 = vset.pattern.permute.xlu0 0
    %366 = vperm.xlu0 %365, %v145
    %v367 = vpop.permute.xlu0 %366
    %370 = vset.pattern.permute.xlu0 0
    %371 = vperm.xlu0 %370, %v146
    %v372 = vpop.permute.xlu0 %371
    %375 = vset.pattern.permute.xlu0 0
    %376 = vperm.xlu0 %375, %v147
    %v377 = vpop.permute.xlu0 %376
    %380 = vset.pattern.permute.xlu0 0
    %381 = vperm.xlu0 %380, %v148
    %v382 = vpop.permute.xlu0 %381
    %385 = vset.pattern.permute.xlu0 0
    %386 = vperm.xlu0 %385, %v149
    %v387 = vpop.permute.xlu0 %386
    %390 = vset.pattern.permute.xlu0 0
    %391 = vperm.xlu0 %390, %v150
    %v392 = vpop.permute.xlu0 %391
    %395 = vset.pattern.permute.xlu0 0
    %396 = vperm.xlu0 %395, %v151
    %v397 = vpop.permute.xlu0 %396
    %400 = vset.pattern.permute.xlu0 0
    %401 = vperm.xlu0 %400, %v152
    %v402 = vpop.permute.xlu0 %401
    %405 = vset.pattern.permute.xlu0 0
    %406 = vperm.xlu0 %405, %v153
    %v407 = vpop.permute.xlu0 %406
    %410 = vset.pattern.permute.xlu0 0
    %411 = vperm.xlu0 %410, %v154
    %v412 = vpop.permute.xlu0 %411
    %415 = vset.pattern.permute.xlu0 0
    %416 = vperm.xlu0 %415, %v155
    %v417 = vpop.permute.xlu0 %416
    %420 = vset.pattern.permute.xlu0 0
    %421 = vperm.xlu0 %420, %v156
    %v422 = vpop.permute.xlu0 %421
    %425 = vset.pattern.permute.xlu0 0
    %426 = vperm.xlu0 %425, %v157
    %v427 = vpop.permute.xlu0 %426
    %430 = vset.pattern.permute.xlu0 0
    %431 = vperm.xlu0 %430, %v158
    %v432 = vpop.permute.xlu0 %431
    %435 = vset.pattern.permute.xlu0 0
    %436 = vperm.xlu0 %435, %v159
    %v437 = vpop.permute.xlu0 %436
    %440 = vset.pattern.permute.xlu0 0
    %441 = vperm.xlu0 %440, %v160
    %v442 = vpop.permute.xlu0 %441
    %445 = vset.pattern.permute.xlu0 0
    %446 = vperm.xlu0 %445, %v161
    %v447 = vpop.permute.xlu0 %446
    %450 = vset.pattern.permute.xlu0 0
    %451 = vperm.xlu0 %450, %v162
    %v452 = vpop.permute.xlu0 %451
    %455 = vset.pattern.permute.xlu0 0
    %456 = vperm.xlu0 %455, %v163
    %v457 = vpop.permute.xlu0 %456
    %460 = vset.pattern.permute.xlu0 0
    %461 = vperm.xlu0 %460, %v164
    %v462 = vpop.permute.xlu0 %461
    %465 = vset.pattern.permute.xlu0 0
    %466 = vperm.xlu0 %465, %v165
    %v467 = vpop.permute.xlu0 %466
    %470 = vset.pattern.permute.xlu0 0
    %471 = vperm.xlu0 %470, %v166
    %v472 = vpop.permute.xlu0 %471
    %475 = vset.pattern.permute.xlu0 0
    %476 = vperm.xlu0 %475, %v167
    %v477 = vpop.permute.xlu0 %476
    %480 = vset.pattern.permute.xlu0 0
    %481 = vperm.xlu0 %480, %v168
    %v482 = vpop.permute.xlu0 %481
    %485 = vset.pattern.permute.xlu0 0
    %486 = vperm.xlu0 %485, %v169
    %v487 = vpop.permute.xlu0 %486
    %490 = vset.pattern.permute.xlu0 0
    %491 = vperm.xlu0 %490, %v170
    %v492 = vpop.permute.xlu0 %491
    %495 = vset.pattern.permute.xlu0 0
    %496 = vperm.xlu0 %495, %v171
    %v497 = vpop.permute.xlu0 %496
    %500 = vset.pattern.permute.xlu0 0
    %501 = vperm.xlu0 %500, %v172
    %v502 = vpop.permute.xlu0 %501
    %505 = vset.pattern.permute.xlu0 0
    %506 = vperm.xlu0 %505, %v173
    %v507 = vpop.permute.xlu0 %506
    %510 = vset.pattern.permute.xlu0 0
    %511 = vperm.xlu0 %510, %v174
    %v512 = vpop.permute.xlu0 %511
    %v578 = vunpack.c.l.b16 %v41
    %v579 = vunpack.c.l.b16 %v42
    %v580 = vunpack.c.l.b16 %v43
    %v581 = vunpack.c.l.b16 %v44
    %v582 = vunpack.c.l.b16 %v45
    %v583 = vunpack.c.l.b16 %v46
    %v584 = vunpack.c.l.b16 %v47
    %v585 = vunpack.c.l.b16 %v48
    %v586 = vunpack.c.l.b16 %v49
    %v587 = vunpack.c.l.b16 %v50
    %v588 = vunpack.c.l.b16 %v51
    %v589 = vunpack.c.l.b16 %v52
    %v590 = vunpack.c.l.b16 %v53
    %v591 = vunpack.c.l.b16 %v54
    %v592 = vunpack.c.l.b16 %v55
    %v593 = vunpack.c.l.b16 %v56
    %v594 = vunpack.c.l.b16 %v57
    %v595 = vunpack.c.l.b16 %v58
    %v596 = vunpack.c.l.b16 %v59
    %v597 = vunpack.c.l.b16 %v60
    %v598 = vunpack.c.l.b16 %v61
    %v599 = vunpack.c.l.b16 %v62
    %v600 = vunpack.c.l.b16 %v63
    %v601 = vunpack.c.l.b16 %v64
    %v602 = vunpack.c.l.b16 %v65
    %v603 = vunpack.c.l.b16 %v66
    %v604 = vunpack.c.l.b16 %v67
    %v605 = vunpack.c.l.b16 %v68
    %v606 = vunpack.c.l.b16 %v69
    %v607 = vunpack.c.l.b16 %v70
    %v608 = vunpack.c.l.b16 %v71
    %v609 = vunpack.c.l.b16 %v72
    %v610 = vunpack.c.l.b16 %v73
    %v611 = vunpack.c.l.b16 %v74
    %v612 = vunpack.c.l.b16 %v75
    %v613 = vunpack.c.l.b16 %v76
    %v614 = vunpack.c.l.b16 %v77
    %v615 = vunpack.c.l.b16 %v78
    %v616 = vunpack.c.l.b16 %v79
    %v617 = vunpack.c.l.b16 %v80
    %v618 = vunpack.c.l.b16 %v81
    %v619 = vunpack.c.l.b16 %v82
    %v620 = vunpack.c.l.b16 %v83
    %v621 = vunpack.c.l.b16 %v84
    %v622 = vunpack.c.l.b16 %v85
    %v623 = vunpack.c.l.b16 %v86
    %v624 = vunpack.c.l.b16 %v87
    %v625 = vunpack.c.l.b16 %v88
    %v626 = vunpack.c.l.b16 %v89
    %v627 = vunpack.c.l.b16 %v90
    %v628 = vunpack.c.l.b16 %v91
    %v629 = vunpack.c.l.b16 %v92
    %v630 = vunpack.c.l.b16 %v93
    %v631 = vunpack.c.l.b16 %v94
    %v632 = vunpack.c.l.b16 %v95
    %v633 = vunpack.c.l.b16 %v96
    %v634 = vunpack.c.l.b16 %v97
    %v635 = vunpack.c.l.b16 %v98
    %v636 = vunpack.c.l.b16 %v99
    %v637 = vunpack.c.l.b16 %v100
    %v638 = vunpack.c.l.b16 %v101
    %v639 = vunpack.c.l.b16 %v102
    %v640 = vunpack.c.l.b16 %v103
    %v641 = vunpack.c.l.b16 %v104
    %v642 = vpack.c.b16 %v579, %v578
    %v643 = vpack.c.b16 %v581, %v580
    %v644 = vpack.c.b16 %v583, %v582
    %v645 = vpack.c.b16 %v585, %v584
    %v646 = vpack.c.b16 %v587, %v586
    %v647 = vpack.c.b16 %v589, %v588
    %v648 = vpack.c.b16 %v591, %v590
    %v649 = vpack.c.b16 %v593, %v592
    %v650 = vpack.c.b16 %v595, %v594
    %v651 = vpack.c.b16 %v597, %v596
    %v652 = vpack.c.b16 %v599, %v598
    %v653 = vpack.c.b16 %v601, %v600
    %v654 = vpack.c.b16 %v603, %v602
    %v655 = vpack.c.b16 %v605, %v604
    %v656 = vpack.c.b16 %v607, %v606
    %v657 = vpack.c.b16 %v609, %v608
    %v658 = vpack.c.b16 %v611, %v610
    %v659 = vpack.c.b16 %v613, %v612
    %v660 = vpack.c.b16 %v615, %v614
    %v661 = vpack.c.b16 %v617, %v616
    %v662 = vpack.c.b16 %v619, %v618
    %v663 = vpack.c.b16 %v621, %v620
    %v664 = vpack.c.b16 %v623, %v622
    %v665 = vpack.c.b16 %v625, %v624
    %v666 = vpack.c.b16 %v627, %v626
    %v667 = vpack.c.b16 %v629, %v628
    %v668 = vpack.c.b16 %v631, %v630
    %v669 = vpack.c.b16 %v633, %v632
    %v670 = vpack.c.b16 %v635, %v634
    %v671 = vpack.c.b16 %v637, %v636
    %v672 = vpack.c.b16 %v639, %v638
    %v673 = vpack.c.b16 %v641, %v640
    %vm674 = vcmask 64512
    %v676 = vsel %vm674, %v642, 0
    %v679 = vsel %vm674, %v643, 0
    %v682 = vsel %vm674, %v644, 0
    %v685 = vsel %vm674, %v645, 0
    %v688 = vsel %vm674, %v646, 0
    %v691 = vsel %vm674, %v647, 0
    %v694 = vsel %vm674, %v648, 0
    %v697 = vsel %vm674, %v649, 0
    %v700 = vsel %vm674, %v650, 0
    %v703 = vsel %vm674, %v651, 0
    %v706 = vsel %vm674, %v652, 0
    %v709 = vsel %vm674, %v653, 0
    %v712 = vsel %vm674, %v654, 0
    %v715 = vsel %vm674, %v655, 0
    %v718 = vsel %vm674, %v656, 0
    %v721 = vsel %vm674, %v657, 0
    %v724 = vsel %vm674, %v658, 0
    %v727 = vsel %vm674, %v659, 0
    %v730 = vsel %vm674, %v660, 0
    %v733 = vsel %vm674, %v661, 0
    %v736 = vsel %vm674, %v662, 0
    %v739 = vsel %vm674, %v663, 0
    %v742 = vsel %vm674, %v664, 0
    %v745 = vsel %vm674, %v665, 0
    %v748 = vsel %vm674, %v666, 0
    %v751 = vsel %vm674, %v667, 0
    %v754 = vsel %vm674, %v668, 0
    %v757 = vsel %vm674, %v669, 0
    %v760 = vsel %vm674, %v670, 0
    %v763 = vsel %vm674, %v671, 0
    %v766 = vsel %vm674, %v672, 0
    %v769 = vsel %vm674, %v673, 0
    %vm771 = vcmask 1043456
    %v773 = vsel %vm771, %v192, 0
    %v776 = vsel %vm771, %v193, 0
    %778 = vmatpush.bf16.msra.mxu0 0
    %779 = vmatpush.bf16.msra.mxu0 0
    %780 = vmatpush.bf16.msra.mxu0 0
    %781 = vmatpush.bf16.msra.mxu0 0
    %782 = vmatpush.bf16.msra.mxu0 0
    %783 = vmatpush.bf16.msra.mxu0 0
    %784 = vmatpush.bf16.msra.mxu0 0
    %785 = vmatpush.bf16.msra.mxu0 %v773
    %786 = vmatmul.bf16.gmra.mxu0 %v676
    %v787 = vpop.f32.mrf.mxu0
    %v788 = vadd.f32 %v197, %v787
    %v789 = vpop.f32.mrf.mxu0
    %v790 = vadd.f32 %v202, %v789
    %791 = vmatmul.bf16.gmra.mxu0 %v679
    %v792 = vpop.f32.mrf.mxu0
    %v793 = vadd.f32 %v207, %v792
    %v794 = vpop.f32.mrf.mxu0
    %v795 = vadd.f32 %v212, %v794
    %796 = vmatmul.bf16.gmra.mxu0 %v682
    %v797 = vpop.f32.mrf.mxu0
    %v798 = vadd.f32 %v217, %v797
    %v799 = vpop.f32.mrf.mxu0
    %v800 = vadd.f32 %v222, %v799
    %801 = vmatmul.bf16.gmra.mxu0 %v685
    %v802 = vpop.f32.mrf.mxu0
    %v803 = vadd.f32 %v227, %v802
    %v804 = vpop.f32.mrf.mxu0
    %v805 = vadd.f32 %v232, %v804
    %806 = vmatmul.bf16.gmra.mxu0 %v688
    %v807 = vpop.f32.mrf.mxu0
    %v808 = vadd.f32 %v237, %v807
    %v809 = vpop.f32.mrf.mxu0
    %v810 = vadd.f32 %v242, %v809
    %811 = vmatmul.bf16.gmra.mxu0 %v691
    %v812 = vpop.f32.mrf.mxu0
    %v813 = vadd.f32 %v247, %v812
    %v814 = vpop.f32.mrf.mxu0
    %v815 = vadd.f32 %v252, %v814
    %816 = vmatmul.bf16.gmra.mxu0 %v694
    %v817 = vpop.f32.mrf.mxu0
    %v818 = vadd.f32 %v257, %v817
    %v819 = vpop.f32.mrf.mxu0
    %v820 = vadd.f32 %v262, %v819
    %821 = vmatmul.bf16.gmra.mxu0 %v697
    %v822 = vpop.f32.mrf.mxu0
    %v823 = vadd.f32 %v267, %v822
    %v824 = vpop.f32.mrf.mxu0
    %v825 = vadd.f32 %v272, %v824
    %826 = vmatmul.bf16.gmra.mxu0 %v700
    %v827 = vpop.f32.mrf.mxu0
    %v828 = vadd.f32 %v277, %v827
    %v829 = vpop.f32.mrf.mxu0
    %v830 = vadd.f32 %v282, %v829
    %831 = vmatmul.bf16.gmra.mxu0 %v703
    %v832 = vpop.f32.mrf.mxu0
    %v833 = vadd.f32 %v287, %v832
    %v834 = vpop.f32.mrf.mxu0
    %v835 = vadd.f32 %v292, %v834
    %836 = vmatmul.bf16.gmra.mxu0 %v706
    %v837 = vpop.f32.mrf.mxu0
    %v838 = vadd.f32 %v297, %v837
    %v839 = vpop.f32.mrf.mxu0
    %v840 = vadd.f32 %v302, %v839
    %841 = vmatmul.bf16.gmra.mxu0 %v709
    %v842 = vpop.f32.mrf.mxu0
    %v843 = vadd.f32 %v307, %v842
    %v844 = vpop.f32.mrf.mxu0
    %v845 = vadd.f32 %v312, %v844
    %846 = vmatmul.bf16.gmra.mxu0 %v712
    %v847 = vpop.f32.mrf.mxu0
    %v848 = vadd.f32 %v317, %v847
    %v849 = vpop.f32.mrf.mxu0
    %v850 = vadd.f32 %v322, %v849
    %851 = vmatmul.bf16.gmra.mxu0 %v715
    %v852 = vpop.f32.mrf.mxu0
    %v853 = vadd.f32 %v327, %v852
    %v854 = vpop.f32.mrf.mxu0
    %v855 = vadd.f32 %v332, %v854
    %856 = vmatmul.bf16.gmra.mxu0 %v718
    %v857 = vpop.f32.mrf.mxu0
    %v858 = vadd.f32 %v337, %v857
    %v859 = vpop.f32.mrf.mxu0
    %v860 = vadd.f32 %v342, %v859
    %861 = vmatmul.bf16.gmra.mxu0 %v721
    %v862 = vpop.f32.mrf.mxu0
    %v863 = vadd.f32 %v347, %v862
    %v864 = vpop.f32.mrf.mxu0
    %v865 = vadd.f32 %v352, %v864
    %866 = vmatmul.bf16.gmra.mxu0 %v724
    %v867 = vpop.f32.mrf.mxu0
    %v868 = vadd.f32 %v357, %v867
    %v869 = vpop.f32.mrf.mxu0
    %v870 = vadd.f32 %v362, %v869
    %871 = vmatmul.bf16.gmra.mxu0 %v727
    %v872 = vpop.f32.mrf.mxu0
    %v873 = vadd.f32 %v367, %v872
    %v874 = vpop.f32.mrf.mxu0
    %v875 = vadd.f32 %v372, %v874
    %876 = vmatmul.bf16.gmra.mxu0 %v730
    %v877 = vpop.f32.mrf.mxu0
    %v878 = vadd.f32 %v377, %v877
    %v879 = vpop.f32.mrf.mxu0
    %v880 = vadd.f32 %v382, %v879
    %881 = vmatmul.bf16.gmra.mxu0 %v733
    %v882 = vpop.f32.mrf.mxu0
    %v883 = vadd.f32 %v387, %v882
    %v884 = vpop.f32.mrf.mxu0
    %v885 = vadd.f32 %v392, %v884
    %886 = vmatmul.bf16.gmra.mxu0 %v736
    %v887 = vpop.f32.mrf.mxu0
    %v888 = vadd.f32 %v397, %v887
    %v889 = vpop.f32.mrf.mxu0
    %v890 = vadd.f32 %v402, %v889
    %891 = vmatmul.bf16.gmra.mxu0 %v739
    %v892 = vpop.f32.mrf.mxu0
    %v893 = vadd.f32 %v407, %v892
    %v894 = vpop.f32.mrf.mxu0
    %v895 = vadd.f32 %v412, %v894
    %896 = vmatmul.bf16.gmra.mxu0 %v742
    %v897 = vpop.f32.mrf.mxu0
    %v898 = vadd.f32 %v417, %v897
    %v899 = vpop.f32.mrf.mxu0
    %v900 = vadd.f32 %v422, %v899
    %901 = vmatmul.bf16.gmra.mxu0 %v745
    %v902 = vpop.f32.mrf.mxu0
    %v903 = vadd.f32 %v427, %v902
    %v904 = vpop.f32.mrf.mxu0
    %v905 = vadd.f32 %v432, %v904
    %906 = vmatmul.bf16.gmra.mxu0 %v748
    %v907 = vpop.f32.mrf.mxu0
    %v908 = vadd.f32 %v437, %v907
    %v909 = vpop.f32.mrf.mxu0
    %v910 = vadd.f32 %v442, %v909
    %911 = vmatmul.bf16.gmra.mxu0 %v751
    %v912 = vpop.f32.mrf.mxu0
    %v913 = vadd.f32 %v447, %v912
    %v914 = vpop.f32.mrf.mxu0
    %v915 = vadd.f32 %v452, %v914
    %916 = vmatmul.bf16.gmra.mxu0 %v754
    %v917 = vpop.f32.mrf.mxu0
    %v918 = vadd.f32 %v457, %v917
    %v919 = vpop.f32.mrf.mxu0
    %v920 = vadd.f32 %v462, %v919
    %921 = vmatmul.bf16.gmra.mxu0 %v757
    %v922 = vpop.f32.mrf.mxu0
    %v923 = vadd.f32 %v467, %v922
    %v924 = vpop.f32.mrf.mxu0
    %v925 = vadd.f32 %v472, %v924
    %926 = vmatmul.bf16.gmra.mxu0 %v760
    %v927 = vpop.f32.mrf.mxu0
    %v928 = vadd.f32 %v477, %v927
    %v929 = vpop.f32.mrf.mxu0
    %v930 = vadd.f32 %v482, %v929
    %931 = vmatmul.bf16.gmra.mxu0 %v763
    %v932 = vpop.f32.mrf.mxu0
    %v933 = vadd.f32 %v487, %v932
    %v934 = vpop.f32.mrf.mxu0
    %v935 = vadd.f32 %v492, %v934
    %936 = vmatmul.bf16.gmra.mxu0 %v766
    %v937 = vpop.f32.mrf.mxu0
    %v938 = vadd.f32 %v497, %v937
    %v939 = vpop.f32.mrf.mxu0
    %v940 = vadd.f32 %v502, %v939
    %941 = vmatmul.bf16.gmra.mxu0 %v769
    %v942 = vpop.f32.mrf.mxu0
    %v943 = vadd.f32 %v507, %v942
    %v944 = vpop.f32.mrf.mxu0
    %v945 = vadd.f32 %v512, %v944
    %946 = vdwg.mxu0
    %947 = vmatpush.bf16.msra.mxu0 0
    %948 = vmatpush.bf16.msra.mxu0 0
    %949 = vmatpush.bf16.msra.mxu0 0
    %950 = vmatpush.bf16.msra.mxu0 0
    %951 = vmatpush.bf16.msra.mxu0 0
    %952 = vmatpush.bf16.msra.mxu0 0
    %953 = vmatpush.bf16.msra.mxu0 0
    %954 = vmatpush.bf16.msra.mxu0 %v776
    %955 = vmatmul.bf16.gmra.mxu0 %v676
    %v956 = vpop.f32.mrf.mxu0
    %v957 = vadd.f32 %v197, %v956
    %v958 = vpop.f32.mrf.mxu0
    %v959 = vadd.f32 %v202, %v958
    %960 = vmatmul.bf16.gmra.mxu0 %v679
    %v961 = vpop.f32.mrf.mxu0
    %v962 = vadd.f32 %v207, %v961
    %v963 = vpop.f32.mrf.mxu0
    %v964 = vadd.f32 %v212, %v963
    %965 = vmatmul.bf16.gmra.mxu0 %v682
    %v966 = vpop.f32.mrf.mxu0
    %v967 = vadd.f32 %v217, %v966
    %v968 = vpop.f32.mrf.mxu0
    %v969 = vadd.f32 %v222, %v968
    %970 = vmatmul.bf16.gmra.mxu0 %v685
    %v971 = vpop.f32.mrf.mxu0
    %v972 = vadd.f32 %v227, %v971
    %v973 = vpop.f32.mrf.mxu0
    %v974 = vadd.f32 %v232, %v973
    %975 = vmatmul.bf16.gmra.mxu0 %v688
    %v976 = vpop.f32.mrf.mxu0
    %v977 = vadd.f32 %v237, %v976
    %v978 = vpop.f32.mrf.mxu0
    %v979 = vadd.f32 %v242, %v978
    %980 = vmatmul.bf16.gmra.mxu0 %v691
    %v981 = vpop.f32.mrf.mxu0
    %v982 = vadd.f32 %v247, %v981
    %v983 = vpop.f32.mrf.mxu0
    %v984 = vadd.f32 %v252, %v983
    %985 = vmatmul.bf16.gmra.mxu0 %v694
    %v986 = vpop.f32.mrf.mxu0
    %v987 = vadd.f32 %v257, %v986
    %v988 = vpop.f32.mrf.mxu0
    %v989 = vadd.f32 %v262, %v988
    %990 = vmatmul.bf16.gmra.mxu0 %v697
    %v991 = vpop.f32.mrf.mxu0
    %v992 = vadd.f32 %v267, %v991
    %v993 = vpop.f32.mrf.mxu0
    %v994 = vadd.f32 %v272, %v993
    %995 = vmatmul.bf16.gmra.mxu0 %v700
    %v996 = vpop.f32.mrf.mxu0
    %v997 = vadd.f32 %v277, %v996
    %v998 = vpop.f32.mrf.mxu0
    %v999 = vadd.f32 %v282, %v998
    %1000 = vmatmul.bf16.gmra.mxu0 %v703
    %v1001 = vpop.f32.mrf.mxu0
    %v1002 = vadd.f32 %v287, %v1001
    %v1003 = vpop.f32.mrf.mxu0
    %v1004 = vadd.f32 %v292, %v1003
    %1005 = vmatmul.bf16.gmra.mxu0 %v706
    %v1006 = vpop.f32.mrf.mxu0
    %v1007 = vadd.f32 %v297, %v1006
    %v1008 = vpop.f32.mrf.mxu0
    %v1009 = vadd.f32 %v302, %v1008
    %1010 = vmatmul.bf16.gmra.mxu0 %v709
    %v1011 = vpop.f32.mrf.mxu0
    %v1012 = vadd.f32 %v307, %v1011
    %v1013 = vpop.f32.mrf.mxu0
    %v1014 = vadd.f32 %v312, %v1013
    %1015 = vmatmul.bf16.gmra.mxu0 %v712
    %v1016 = vpop.f32.mrf.mxu0
    %v1017 = vadd.f32 %v317, %v1016
    %v1018 = vpop.f32.mrf.mxu0
    %v1019 = vadd.f32 %v322, %v1018
    %1020 = vmatmul.bf16.gmra.mxu0 %v715
    %v1021 = vpop.f32.mrf.mxu0
    %v1022 = vadd.f32 %v327, %v1021
    %v1023 = vpop.f32.mrf.mxu0
    %v1024 = vadd.f32 %v332, %v1023
    %1025 = vmatmul.bf16.gmra.mxu0 %v718
    %v1026 = vpop.f32.mrf.mxu0
    %v1027 = vadd.f32 %v337, %v1026
    %v1028 = vpop.f32.mrf.mxu0
    %v1029 = vadd.f32 %v342, %v1028
    %1030 = vmatmul.bf16.gmra.mxu0 %v721
    %v1031 = vpop.f32.mrf.mxu0
    %v1032 = vadd.f32 %v347, %v1031
    %v1033 = vpop.f32.mrf.mxu0
    %v1034 = vadd.f32 %v352, %v1033
    %1035 = vmatmul.bf16.gmra.mxu0 %v724
    %v1036 = vpop.f32.mrf.mxu0
    %v1037 = vadd.f32 %v357, %v1036
    %v1038 = vpop.f32.mrf.mxu0
    %v1039 = vadd.f32 %v362, %v1038
    %1040 = vmatmul.bf16.gmra.mxu0 %v727
    %v1041 = vpop.f32.mrf.mxu0
    %v1042 = vadd.f32 %v367, %v1041
    %v1043 = vpop.f32.mrf.mxu0
    %v1044 = vadd.f32 %v372, %v1043
    %1045 = vmatmul.bf16.gmra.mxu0 %v730
    %v1046 = vpop.f32.mrf.mxu0
    %v1047 = vadd.f32 %v377, %v1046
    %v1048 = vpop.f32.mrf.mxu0
    %v1049 = vadd.f32 %v382, %v1048
    %1050 = vmatmul.bf16.gmra.mxu0 %v733
    %v1051 = vpop.f32.mrf.mxu0
    %v1052 = vadd.f32 %v387, %v1051
    %v1053 = vpop.f32.mrf.mxu0
    %v1054 = vadd.f32 %v392, %v1053
    %1055 = vmatmul.bf16.gmra.mxu0 %v736
    %v1056 = vpop.f32.mrf.mxu0
    %v1057 = vadd.f32 %v397, %v1056
    %v1058 = vpop.f32.mrf.mxu0
    %v1059 = vadd.f32 %v402, %v1058
    %1060 = vmatmul.bf16.gmra.mxu0 %v739
    %v1061 = vpop.f32.mrf.mxu0
    %v1062 = vadd.f32 %v407, %v1061
    %v1063 = vpop.f32.mrf.mxu0
    %v1064 = vadd.f32 %v412, %v1063
    %1065 = vmatmul.bf16.gmra.mxu0 %v742
    %v1066 = vpop.f32.mrf.mxu0
    %v1067 = vadd.f32 %v417, %v1066
    %v1068 = vpop.f32.mrf.mxu0
    %v1069 = vadd.f32 %v422, %v1068
    %1070 = vmatmul.bf16.gmra.mxu0 %v745
    %v1071 = vpop.f32.mrf.mxu0
    %v1072 = vadd.f32 %v427, %v1071
    %v1073 = vpop.f32.mrf.mxu0
    %v1074 = vadd.f32 %v432, %v1073
    %1075 = vmatmul.bf16.gmra.mxu0 %v748
    %v1076 = vpop.f32.mrf.mxu0
    %v1077 = vadd.f32 %v437, %v1076
    %v1078 = vpop.f32.mrf.mxu0
    %v1079 = vadd.f32 %v442, %v1078
    %1080 = vmatmul.bf16.gmra.mxu0 %v751
    %v1081 = vpop.f32.mrf.mxu0
    %v1082 = vadd.f32 %v447, %v1081
    %v1083 = vpop.f32.mrf.mxu0
    %v1084 = vadd.f32 %v452, %v1083
    %1085 = vmatmul.bf16.gmra.mxu0 %v754
    %v1086 = vpop.f32.mrf.mxu0
    %v1087 = vadd.f32 %v457, %v1086
    %v1088 = vpop.f32.mrf.mxu0
    %v1089 = vadd.f32 %v462, %v1088
    %1090 = vmatmul.bf16.gmra.mxu0 %v757
    %v1091 = vpop.f32.mrf.mxu0
    %v1092 = vadd.f32 %v467, %v1091
    %v1093 = vpop.f32.mrf.mxu0
    %v1094 = vadd.f32 %v472, %v1093
    %1095 = vmatmul.bf16.gmra.mxu0 %v760
    %v1096 = vpop.f32.mrf.mxu0
    %v1097 = vadd.f32 %v477, %v1096
    %v1098 = vpop.f32.mrf.mxu0
    %v1099 = vadd.f32 %v482, %v1098
    %1100 = vmatmul.bf16.gmra.mxu0 %v763
    %v1101 = vpop.f32.mrf.mxu0
    %v1102 = vadd.f32 %v487, %v1101
    %v1103 = vpop.f32.mrf.mxu0
    %v1104 = vadd.f32 %v492, %v1103
    %1105 = vmatmul.bf16.gmra.mxu0 %v766
    %v1106 = vpop.f32.mrf.mxu0
    %v1107 = vadd.f32 %v497, %v1106
    %v1108 = vpop.f32.mrf.mxu0
    %v1109 = vadd.f32 %v502, %v1108
    %1110 = vmatmul.bf16.gmra.mxu0 %v769
    %v1111 = vpop.f32.mrf.mxu0
    %v1112 = vadd.f32 %v507, %v1111
    %v1113 = vpop.f32.mrf.mxu0
    %v1114 = vadd.f32 %v512, %v1113
    %1115 = vdwg.mxu0
    %v1116 = vpack.c.bf16 %v790, %v788
    %v1117 = vpack.c.bf16 %v959, %v957
    %v1118 = vpack.c.bf16 %v795, %v793
    %v1119 = vpack.c.bf16 %v964, %v962
    %v1120 = vpack.c.bf16 %v800, %v798
    %v1121 = vpack.c.bf16 %v969, %v967
    %v1122 = vpack.c.bf16 %v805, %v803
    %v1123 = vpack.c.bf16 %v974, %v972
    %v1124 = vpack.c.bf16 %v810, %v808
    %v1125 = vpack.c.bf16 %v979, %v977
    %v1126 = vpack.c.bf16 %v815, %v813
    %v1127 = vpack.c.bf16 %v984, %v982
    %v1128 = vpack.c.bf16 %v820, %v818
    %v1129 = vpack.c.bf16 %v989, %v987
    %v1130 = vpack.c.bf16 %v825, %v823
    %v1131 = vpack.c.bf16 %v994, %v992
    %v1132 = vpack.c.bf16 %v830, %v828
    %v1133 = vpack.c.bf16 %v999, %v997
    %v1134 = vpack.c.bf16 %v835, %v833
    %v1135 = vpack.c.bf16 %v1004, %v1002
    %v1136 = vpack.c.bf16 %v840, %v838
    %v1137 = vpack.c.bf16 %v1009, %v1007
    %v1138 = vpack.c.bf16 %v845, %v843
    %v1139 = vpack.c.bf16 %v1014, %v1012
    %v1140 = vpack.c.bf16 %v850, %v848
    %v1141 = vpack.c.bf16 %v1019, %v1017
    %v1142 = vpack.c.bf16 %v855, %v853
    %v1143 = vpack.c.bf16 %v1024, %v1022
    %v1144 = vpack.c.bf16 %v860, %v858
    %v1145 = vpack.c.bf16 %v1029, %v1027
    %v1146 = vpack.c.bf16 %v865, %v863
    %v1147 = vpack.c.bf16 %v1034, %v1032
    %v1148 = vpack.c.bf16 %v870, %v868
    %v1149 = vpack.c.bf16 %v1039, %v1037
    %v1150 = vpack.c.bf16 %v875, %v873
    %v1151 = vpack.c.bf16 %v1044, %v1042
    %v1152 = vpack.c.bf16 %v880, %v878
    %v1153 = vpack.c.bf16 %v1049, %v1047
    %v1154 = vpack.c.bf16 %v885, %v883
    %v1155 = vpack.c.bf16 %v1054, %v1052
    %v1156 = vpack.c.bf16 %v890, %v888
    %v1157 = vpack.c.bf16 %v1059, %v1057
    %v1158 = vpack.c.bf16 %v895, %v893
    %v1159 = vpack.c.bf16 %v1064, %v1062
    %v1160 = vpack.c.bf16 %v900, %v898
    %v1161 = vpack.c.bf16 %v1069, %v1067
    %v1162 = vpack.c.bf16 %v905, %v903
    %v1163 = vpack.c.bf16 %v1074, %v1072
    %v1164 = vpack.c.bf16 %v910, %v908
    %v1165 = vpack.c.bf16 %v1079, %v1077
    %v1166 = vpack.c.bf16 %v915, %v913
    %v1167 = vpack.c.bf16 %v1084, %v1082
    %v1168 = vpack.c.bf16 %v920, %v918
    %v1169 = vpack.c.bf16 %v1089, %v1087
    %v1170 = vpack.c.bf16 %v925, %v923
    %v1171 = vpack.c.bf16 %v1094, %v1092
    %v1172 = vpack.c.bf16 %v930, %v928
    %v1173 = vpack.c.bf16 %v1099, %v1097
    %v1174 = vpack.c.bf16 %v935, %v933
    %v1175 = vpack.c.bf16 %v1104, %v1102
    %v1176 = vpack.c.bf16 %v940, %v938
    %v1177 = vpack.c.bf16 %v1109, %v1107
    %v1178 = vpack.c.bf16 %v945, %v943
    %v1179 = vpack.c.bf16 %v1114, %v1112
    %1181 = vset.pattern.permute.xlu0 0
    %1182 = vperm.xlu0 %1181, %v175
    %v1183 = vpop.permute.xlu0 %1182
    %v1187 = vunpack.c.l.b16 %v105
    %v1188 = vunpack.c.h.b16 %v105
    %v1189 = vunpack.c.l.b16 %v106
    %v1190 = vunpack.c.h.b16 %v106
    %v1191 = vpack.c.b16 %v1187, %v1187
    %v1192 = vpack.c.b16 %v1188, %v1188
    %v1193 = vpack.c.b16 %v1189, %v1189
    %v1194 = vpack.c.b16 %v1190, %v1190
    %1199 = vmatpush.bf16.msra.mxu0 %v1130
    %1200 = vmatpush.bf16.msra.mxu0 %v1128
    %1201 = vmatpush.bf16.msra.mxu0 %v1126
    %1202 = vmatpush.bf16.msra.mxu0 %v1124
    %1203 = vmatpush.bf16.msra.mxu0 %v1122
    %1204 = vmatpush.bf16.msra.mxu0 %v1120
    %1205 = vmatpush.bf16.msra.mxu0 %v1118
    %1206 = vmatpush.bf16.msra.mxu0 %v1116
    %1207 = vmatmul.bf16.gmra.mxu0 %v1191
    %v1208 = vpop.f32.mrf.mxu0
    %v1209 = vadd.f32 %v1183, %v1208
    %v1210 = vpop.f32.mrf.mxu0
    %1211 = vdwg.mxu0
    %1212 = vmatpush.bf16.msra.mxu0 %v1146
    %1213 = vmatpush.bf16.msra.mxu0 %v1144
    %1214 = vmatpush.bf16.msra.mxu0 %v1142
    %1215 = vmatpush.bf16.msra.mxu0 %v1140
    %1216 = vmatpush.bf16.msra.mxu0 %v1138
    %1217 = vmatpush.bf16.msra.mxu0 %v1136
    %1218 = vmatpush.bf16.msra.mxu0 %v1134
    %1219 = vmatpush.bf16.msra.mxu0 %v1132
    %1220 = vmatmul.bf16.gmra.mxu0 %v1192
    %v1221 = vpop.f32.mrf.mxu0
    %v1222 = vadd.f32 %v1209, %v1221
    %v1223 = vpop.f32.mrf.mxu0
    %1224 = vdwg.mxu0
    %1225 = vmatpush.bf16.msra.mxu0 %v1162
    %1226 = vmatpush.bf16.msra.mxu0 %v1160
    %1227 = vmatpush.bf16.msra.mxu0 %v1158
    %1228 = vmatpush.bf16.msra.mxu0 %v1156
    %1229 = vmatpush.bf16.msra.mxu0 %v1154
    %1230 = vmatpush.bf16.msra.mxu0 %v1152
    %1231 = vmatpush.bf16.msra.mxu0 %v1150
    %1232 = vmatpush.bf16.msra.mxu0 %v1148
    %1233 = vmatmul.bf16.gmra.mxu0 %v1193
    %v1234 = vpop.f32.mrf.mxu0
    %v1235 = vadd.f32 %v1222, %v1234
    %v1236 = vpop.f32.mrf.mxu0
    %1237 = vdwg.mxu0
    %1238 = vmatpush.bf16.msra.mxu0 %v1178
    %1239 = vmatpush.bf16.msra.mxu0 %v1176
    %1240 = vmatpush.bf16.msra.mxu0 %v1174
    %1241 = vmatpush.bf16.msra.mxu0 %v1172
    %1242 = vmatpush.bf16.msra.mxu0 %v1170
    %1243 = vmatpush.bf16.msra.mxu0 %v1168
    %1244 = vmatpush.bf16.msra.mxu0 %v1166
    %1245 = vmatpush.bf16.msra.mxu0 %v1164
    %1246 = vmatmul.bf16.gmra.mxu0 %v1194
    %v1247 = vpop.f32.mrf.mxu0
    %v1248 = vadd.f32 %v1235, %v1247
    %v1249 = vpop.f32.mrf.mxu0
    %1250 = vdwg.mxu0
    %1251 = vmatpush.bf16.msra.mxu0 %v1131
    %1252 = vmatpush.bf16.msra.mxu0 %v1129
    %1253 = vmatpush.bf16.msra.mxu0 %v1127
    %1254 = vmatpush.bf16.msra.mxu0 %v1125
    %1255 = vmatpush.bf16.msra.mxu0 %v1123
    %1256 = vmatpush.bf16.msra.mxu0 %v1121
    %1257 = vmatpush.bf16.msra.mxu0 %v1119
    %1258 = vmatpush.bf16.msra.mxu0 %v1117
    %1259 = vmatmul.bf16.gmra.mxu0 %v1191
    %v1260 = vpop.f32.mrf.mxu0
    %v1261 = vadd.f32 %v1183, %v1260
    %v1262 = vpop.f32.mrf.mxu0
    %1263 = vdwg.mxu0
    %1264 = vmatpush.bf16.msra.mxu0 %v1147
    %1265 = vmatpush.bf16.msra.mxu0 %v1145
    %1266 = vmatpush.bf16.msra.mxu0 %v1143
    %1267 = vmatpush.bf16.msra.mxu0 %v1141
    %1268 = vmatpush.bf16.msra.mxu0 %v1139
    %1269 = vmatpush.bf16.msra.mxu0 %v1137
    %1270 = vmatpush.bf16.msra.mxu0 %v1135
    %1271 = vmatpush.bf16.msra.mxu0 %v1133
    %1272 = vmatmul.bf16.gmra.mxu0 %v1192
    %v1273 = vpop.f32.mrf.mxu0
    %v1274 = vadd.f32 %v1261, %v1273
    %v1275 = vpop.f32.mrf.mxu0
    %1276 = vdwg.mxu0
    %1277 = vmatpush.bf16.msra.mxu0 %v1163
    %1278 = vmatpush.bf16.msra.mxu0 %v1161
    %1279 = vmatpush.bf16.msra.mxu0 %v1159
    %1280 = vmatpush.bf16.msra.mxu0 %v1157
    %1281 = vmatpush.bf16.msra.mxu0 %v1155
    %1282 = vmatpush.bf16.msra.mxu0 %v1153
    %1283 = vmatpush.bf16.msra.mxu0 %v1151
    %1284 = vmatpush.bf16.msra.mxu0 %v1149
    %1285 = vmatmul.bf16.gmra.mxu0 %v1193
    %v1286 = vpop.f32.mrf.mxu0
    %v1287 = vadd.f32 %v1274, %v1286
    %v1288 = vpop.f32.mrf.mxu0
    %1289 = vdwg.mxu0
    %1290 = vmatpush.bf16.msra.mxu0 %v1179
    %1291 = vmatpush.bf16.msra.mxu0 %v1177
    %1292 = vmatpush.bf16.msra.mxu0 %v1175
    %1293 = vmatpush.bf16.msra.mxu0 %v1173
    %1294 = vmatpush.bf16.msra.mxu0 %v1171
    %1295 = vmatpush.bf16.msra.mxu0 %v1169
    %1296 = vmatpush.bf16.msra.mxu0 %v1167
    %1297 = vmatpush.bf16.msra.mxu0 %v1165
    %1298 = vmatmul.bf16.gmra.mxu0 %v1194
    %v1299 = vpop.f32.mrf.mxu0
    %v1300 = vadd.f32 %v1287, %v1299
    %v1301 = vpop.f32.mrf.mxu0
    %1302 = vdwg.mxu0
    %v1303 = vpack.c.bf16 %v1248, %v1248
    %v1304 = vpack.c.bf16 %v1300, %v1300
    %1305 = vset.pattern.permute.xlu0 1
    %1306 = vperm.xlu0 %1305, %v111
    %v1307 = vpop.permute.xlu0 %1306
    %1309 = vset.pattern.permute.xlu0 1
    %1310 = vperm.xlu0 %1309, %v112
    %v1311 = vpop.permute.xlu0 %1310
    %1313 = vset.pattern.permute.xlu0 1
    %1314 = vperm.xlu0 %1313, %v113
    %v1315 = vpop.permute.xlu0 %1314
    %1317 = vset.pattern.permute.xlu0 1
    %1318 = vperm.xlu0 %1317, %v114
    %v1319 = vpop.permute.xlu0 %1318
    %1321 = vset.pattern.permute.xlu0 1
    %1322 = vperm.xlu0 %1321, %v115
    %v1323 = vpop.permute.xlu0 %1322
    %1325 = vset.pattern.permute.xlu0 1
    %1326 = vperm.xlu0 %1325, %v116
    %v1327 = vpop.permute.xlu0 %1326
    %1329 = vset.pattern.permute.xlu0 1
    %1330 = vperm.xlu0 %1329, %v117
    %v1331 = vpop.permute.xlu0 %1330
    %1333 = vset.pattern.permute.xlu0 1
    %1334 = vperm.xlu0 %1333, %v118
    %v1335 = vpop.permute.xlu0 %1334
    %1337 = vset.pattern.permute.xlu0 1
    %1338 = vperm.xlu0 %1337, %v119
    %v1339 = vpop.permute.xlu0 %1338
    %1341 = vset.pattern.permute.xlu0 1
    %1342 = vperm.xlu0 %1341, %v120
    %v1343 = vpop.permute.xlu0 %1342
    %1345 = vset.pattern.permute.xlu0 1
    %1346 = vperm.xlu0 %1345, %v121
    %v1347 = vpop.permute.xlu0 %1346
    %1349 = vset.pattern.permute.xlu0 1
    %1350 = vperm.xlu0 %1349, %v122
    %v1351 = vpop.permute.xlu0 %1350
    %1353 = vset.pattern.permute.xlu0 1
    %1354 = vperm.xlu0 %1353, %v123
    %v1355 = vpop.permute.xlu0 %1354
    %1357 = vset.pattern.permute.xlu0 1
    %1358 = vperm.xlu0 %1357, %v124
    %v1359 = vpop.permute.xlu0 %1358
    %1361 = vset.pattern.permute.xlu0 1
    %1362 = vperm.xlu0 %1361, %v125
    %v1363 = vpop.permute.xlu0 %1362
    %1365 = vset.pattern.permute.xlu0 1
    %1366 = vperm.xlu0 %1365, %v126
    %v1367 = vpop.permute.xlu0 %1366
    %1369 = vset.pattern.permute.xlu0 1
    %1370 = vperm.xlu0 %1369, %v127
    %v1371 = vpop.permute.xlu0 %1370
    %1373 = vset.pattern.permute.xlu0 1
    %1374 = vperm.xlu0 %1373, %v128
    %v1375 = vpop.permute.xlu0 %1374
    %1377 = vset.pattern.permute.xlu0 1
    %1378 = vperm.xlu0 %1377, %v129
    %v1379 = vpop.permute.xlu0 %1378
    %1381 = vset.pattern.permute.xlu0 1
    %1382 = vperm.xlu0 %1381, %v130
    %v1383 = vpop.permute.xlu0 %1382
    %1385 = vset.pattern.permute.xlu0 1
    %1386 = vperm.xlu0 %1385, %v131
    %v1387 = vpop.permute.xlu0 %1386
    %1389 = vset.pattern.permute.xlu0 1
    %1390 = vperm.xlu0 %1389, %v132
    %v1391 = vpop.permute.xlu0 %1390
    %1393 = vset.pattern.permute.xlu0 1
    %1394 = vperm.xlu0 %1393, %v133
    %v1395 = vpop.permute.xlu0 %1394
    %1397 = vset.pattern.permute.xlu0 1
    %1398 = vperm.xlu0 %1397, %v134
    %v1399 = vpop.permute.xlu0 %1398
    %1401 = vset.pattern.permute.xlu0 1
    %1402 = vperm.xlu0 %1401, %v135
    %v1403 = vpop.permute.xlu0 %1402
    %1405 = vset.pattern.permute.xlu0 1
    %1406 = vperm.xlu0 %1405, %v136
    %v1407 = vpop.permute.xlu0 %1406
    %1409 = vset.pattern.permute.xlu0 1
    %1410 = vperm.xlu0 %1409, %v137
    %v1411 = vpop.permute.xlu0 %1410
    %1413 = vset.pattern.permute.xlu0 1
    %1414 = vperm.xlu0 %1413, %v138
    %v1415 = vpop.permute.xlu0 %1414
    %1417 = vset.pattern.permute.xlu0 1
    %1418 = vperm.xlu0 %1417, %v139
    %v1419 = vpop.permute.xlu0 %1418
    %1421 = vset.pattern.permute.xlu0 1
    %1422 = vperm.xlu0 %1421, %v140
    %v1423 = vpop.permute.xlu0 %1422
    %1425 = vset.pattern.permute.xlu0 1
    %1426 = vperm.xlu0 %1425, %v141
    %v1427 = vpop.permute.xlu0 %1426
    %1429 = vset.pattern.permute.xlu0 1
    %1430 = vperm.xlu0 %1429, %v142
    %v1431 = vpop.permute.xlu0 %1430
    %1433 = vset.pattern.permute.xlu0 1
    %1434 = vperm.xlu0 %1433, %v143
    %v1435 = vpop.permute.xlu0 %1434
    %1437 = vset.pattern.permute.xlu0 1
    %1438 = vperm.xlu0 %1437, %v144
    %v1439 = vpop.permute.xlu0 %1438
    %1441 = vset.pattern.permute.xlu0 1
    %1442 = vperm.xlu0 %1441, %v145
    %v1443 = vpop.permute.xlu0 %1442
    %1445 = vset.pattern.permute.xlu0 1
    %1446 = vperm.xlu0 %1445, %v146
    %v1447 = vpop.permute.xlu0 %1446
    %1449 = vset.pattern.permute.xlu0 1
    %1450 = vperm.xlu0 %1449, %v147
    %v1451 = vpop.permute.xlu0 %1450
    %1453 = vset.pattern.permute.xlu0 1
    %1454 = vperm.xlu0 %1453, %v148
    %v1455 = vpop.permute.xlu0 %1454
    %1457 = vset.pattern.permute.xlu0 1
    %1458 = vperm.xlu0 %1457, %v149
    %v1459 = vpop.permute.xlu0 %1458
    %1461 = vset.pattern.permute.xlu0 1
    %1462 = vperm.xlu0 %1461, %v150
    %v1463 = vpop.permute.xlu0 %1462
    %1465 = vset.pattern.permute.xlu0 1
    %1466 = vperm.xlu0 %1465, %v151
    %v1467 = vpop.permute.xlu0 %1466
    %1469 = vset.pattern.permute.xlu0 1
    %1470 = vperm.xlu0 %1469, %v152
    %v1471 = vpop.permute.xlu0 %1470
    %1473 = vset.pattern.permute.xlu0 1
    %1474 = vperm.xlu0 %1473, %v153
    %v1475 = vpop.permute.xlu0 %1474
    %1477 = vset.pattern.permute.xlu0 1
    %1478 = vperm.xlu0 %1477, %v154
    %v1479 = vpop.permute.xlu0 %1478
    %1481 = vset.pattern.permute.xlu0 1
    %1482 = vperm.xlu0 %1481, %v155
    %v1483 = vpop.permute.xlu0 %1482
    %1485 = vset.pattern.permute.xlu0 1
    %1486 = vperm.xlu0 %1485, %v156
    %v1487 = vpop.permute.xlu0 %1486
    %1489 = vset.pattern.permute.xlu0 1
    %1490 = vperm.xlu0 %1489, %v157
    %v1491 = vpop.permute.xlu0 %1490
    %1493 = vset.pattern.permute.xlu0 1
    %1494 = vperm.xlu0 %1493, %v158
    %v1495 = vpop.permute.xlu0 %1494
    %1497 = vset.pattern.permute.xlu0 1
    %1498 = vperm.xlu0 %1497, %v159
    %v1499 = vpop.permute.xlu0 %1498
    %1501 = vset.pattern.permute.xlu0 1
    %1502 = vperm.xlu0 %1501, %v160
    %v1503 = vpop.permute.xlu0 %1502
    %1505 = vset.pattern.permute.xlu0 1
    %1506 = vperm.xlu0 %1505, %v161
    %v1507 = vpop.permute.xlu0 %1506
    %1509 = vset.pattern.permute.xlu0 1
    %1510 = vperm.xlu0 %1509, %v162
    %v1511 = vpop.permute.xlu0 %1510
    %1513 = vset.pattern.permute.xlu0 1
    %1514 = vperm.xlu0 %1513, %v163
    %v1515 = vpop.permute.xlu0 %1514
    %1517 = vset.pattern.permute.xlu0 1
    %1518 = vperm.xlu0 %1517, %v164
    %v1519 = vpop.permute.xlu0 %1518
    %1521 = vset.pattern.permute.xlu0 1
    %1522 = vperm.xlu0 %1521, %v165
    %v1523 = vpop.permute.xlu0 %1522
    %1525 = vset.pattern.permute.xlu0 1
    %1526 = vperm.xlu0 %1525, %v166
    %v1527 = vpop.permute.xlu0 %1526
    %1529 = vset.pattern.permute.xlu0 1
    %1530 = vperm.xlu0 %1529, %v167
    %v1531 = vpop.permute.xlu0 %1530
    %1533 = vset.pattern.permute.xlu0 1
    %1534 = vperm.xlu0 %1533, %v168
    %v1535 = vpop.permute.xlu0 %1534
    %1537 = vset.pattern.permute.xlu0 1
    %1538 = vperm.xlu0 %1537, %v169
    %v1539 = vpop.permute.xlu0 %1538
    %1541 = vset.pattern.permute.xlu0 1
    %1542 = vperm.xlu0 %1541, %v170
    %v1543 = vpop.permute.xlu0 %1542
    %1545 = vset.pattern.permute.xlu0 1
    %1546 = vperm.xlu0 %1545, %v171
    %v1547 = vpop.permute.xlu0 %1546
    %1549 = vset.pattern.permute.xlu0 1
    %1550 = vperm.xlu0 %1549, %v172
    %v1551 = vpop.permute.xlu0 %1550
    %1553 = vset.pattern.permute.xlu0 1
    %1554 = vperm.xlu0 %1553, %v173
    %v1555 = vpop.permute.xlu0 %1554
    %1557 = vset.pattern.permute.xlu0 1
    %1558 = vperm.xlu0 %1557, %v174
    %v1559 = vpop.permute.xlu0 %1558
    %1561 = vrot.lane.b32.xlu0 %v642, 120
    %v1562 = vpop.permute.xlu0 %1561
    %1563 = vrot.lane.b32.xlu0 %v643, 120
    %v1564 = vpop.permute.xlu0 %1563
    %1565 = vrot.lane.b32.xlu0 %v644, 120
    %v1566 = vpop.permute.xlu0 %1565
    %1567 = vrot.lane.b32.xlu0 %v645, 120
    %v1568 = vpop.permute.xlu0 %1567
    %1569 = vrot.lane.b32.xlu0 %v646, 120
    %v1570 = vpop.permute.xlu0 %1569
    %1571 = vrot.lane.b32.xlu0 %v647, 120
    %v1572 = vpop.permute.xlu0 %1571
    %1573 = vrot.lane.b32.xlu0 %v648, 120
    %v1574 = vpop.permute.xlu0 %1573
    %1575 = vrot.lane.b32.xlu0 %v649, 120
    %v1576 = vpop.permute.xlu0 %1575
    %1577 = vrot.lane.b32.xlu0 %v650, 120
    %v1578 = vpop.permute.xlu0 %1577
    %1579 = vrot.lane.b32.xlu0 %v651, 120
    %v1580 = vpop.permute.xlu0 %1579
    %1581 = vrot.lane.b32.xlu0 %v652, 120
    %v1582 = vpop.permute.xlu0 %1581
    %1583 = vrot.lane.b32.xlu0 %v653, 120
    %v1584 = vpop.permute.xlu0 %1583
    %1585 = vrot.lane.b32.xlu0 %v654, 120
    %v1586 = vpop.permute.xlu0 %1585
    %1587 = vrot.lane.b32.xlu0 %v655, 120
    %v1588 = vpop.permute.xlu0 %1587
    %1589 = vrot.lane.b32.xlu0 %v656, 120
    %v1590 = vpop.permute.xlu0 %1589
    %1591 = vrot.lane.b32.xlu0 %v657, 120
    %v1592 = vpop.permute.xlu0 %1591
    %1593 = vrot.lane.b32.xlu0 %v658, 120
    %v1594 = vpop.permute.xlu0 %1593
    %1595 = vrot.lane.b32.xlu0 %v659, 120
    %v1596 = vpop.permute.xlu0 %1595
    %1597 = vrot.lane.b32.xlu0 %v660, 120
    %v1598 = vpop.permute.xlu0 %1597
    %1599 = vrot.lane.b32.xlu0 %v661, 120
    %v1600 = vpop.permute.xlu0 %1599
    %1601 = vrot.lane.b32.xlu0 %v662, 120
    %v1602 = vpop.permute.xlu0 %1601
    %1603 = vrot.lane.b32.xlu0 %v663, 120
    %v1604 = vpop.permute.xlu0 %1603
    %1605 = vrot.lane.b32.xlu0 %v664, 120
    %v1606 = vpop.permute.xlu0 %1605
    %1607 = vrot.lane.b32.xlu0 %v665, 120
    %v1608 = vpop.permute.xlu0 %1607
    %1609 = vrot.lane.b32.xlu0 %v666, 120
    %v1610 = vpop.permute.xlu0 %1609
    %1611 = vrot.lane.b32.xlu0 %v667, 120
    %v1612 = vpop.permute.xlu0 %1611
    %1613 = vrot.lane.b32.xlu0 %v668, 120
    %v1614 = vpop.permute.xlu0 %1613
    %1615 = vrot.lane.b32.xlu0 %v669, 120
    %v1616 = vpop.permute.xlu0 %1615
    %1617 = vrot.lane.b32.xlu0 %v670, 120
    %v1618 = vpop.permute.xlu0 %1617
    %1619 = vrot.lane.b32.xlu0 %v671, 120
    %v1620 = vpop.permute.xlu0 %1619
    %1621 = vrot.lane.b32.xlu0 %v672, 120
    %v1622 = vpop.permute.xlu0 %1621
    %1623 = vrot.lane.b32.xlu0 %v673, 120
    %v1624 = vpop.permute.xlu0 %1623
    %vm1625 = vcmask 31744
    %v1627 = vsel %vm1625, %v1562, 0
    %v1630 = vsel %vm1625, %v1564, 0
    %v1633 = vsel %vm1625, %v1566, 0
    %v1636 = vsel %vm1625, %v1568, 0
    %v1639 = vsel %vm1625, %v1570, 0
    %v1642 = vsel %vm1625, %v1572, 0
    %v1645 = vsel %vm1625, %v1574, 0
    %v1648 = vsel %vm1625, %v1576, 0
    %v1651 = vsel %vm1625, %v1578, 0
    %v1654 = vsel %vm1625, %v1580, 0
    %v1657 = vsel %vm1625, %v1582, 0
    %v1660 = vsel %vm1625, %v1584, 0
    %v1663 = vsel %vm1625, %v1586, 0
    %v1666 = vsel %vm1625, %v1588, 0
    %v1669 = vsel %vm1625, %v1590, 0
    %v1672 = vsel %vm1625, %v1592, 0
    %v1675 = vsel %vm1625, %v1594, 0
    %v1678 = vsel %vm1625, %v1596, 0
    %v1681 = vsel %vm1625, %v1598, 0
    %v1684 = vsel %vm1625, %v1600, 0
    %v1687 = vsel %vm1625, %v1602, 0
    %v1690 = vsel %vm1625, %v1604, 0
    %v1693 = vsel %vm1625, %v1606, 0
    %v1696 = vsel %vm1625, %v1608, 0
    %v1699 = vsel %vm1625, %v1610, 0
    %v1702 = vsel %vm1625, %v1612, 0
    %v1705 = vsel %vm1625, %v1614, 0
    %v1708 = vsel %vm1625, %v1616, 0
    %v1711 = vsel %vm1625, %v1618, 0
    %v1714 = vsel %vm1625, %v1620, 0
    %v1717 = vsel %vm1625, %v1622, 0
    %v1720 = vsel %vm1625, %v1624, 0
    %vm1722 = vcmask 1041408
    %v1724 = vsel %vm1722, %v1303, 0
    %v1727 = vsel %vm1722, %v1304, 0
    %1729 = vmatpush.bf16.msra.mxu0 0
    %1730 = vmatpush.bf16.msra.mxu0 0
    %1731 = vmatpush.bf16.msra.mxu0 0
    %1732 = vmatpush.bf16.msra.mxu0 0
    %1733 = vmatpush.bf16.msra.mxu0 0
    %1734 = vmatpush.bf16.msra.mxu0 0
    %1735 = vmatpush.bf16.msra.mxu0 0
    %1736 = vmatpush.bf16.msra.mxu0 %v1724
    %1737 = vmatmul.bf16.gmra.mxu0 %v1627
    %v1738 = vpop.f32.mrf.mxu0
    %v1739 = vadd.f32 %v1307, %v1738
    %v1740 = vpop.f32.mrf.mxu0
    %v1741 = vadd.f32 %v1311, %v1740
    %1742 = vmatmul.bf16.gmra.mxu0 %v1630
    %v1743 = vpop.f32.mrf.mxu0
    %v1744 = vadd.f32 %v1315, %v1743
    %v1745 = vpop.f32.mrf.mxu0
    %v1746 = vadd.f32 %v1319, %v1745
    %1747 = vmatmul.bf16.gmra.mxu0 %v1633
    %v1748 = vpop.f32.mrf.mxu0
    %v1749 = vadd.f32 %v1323, %v1748
    %v1750 = vpop.f32.mrf.mxu0
    %v1751 = vadd.f32 %v1327, %v1750
    %1752 = vmatmul.bf16.gmra.mxu0 %v1636
    %v1753 = vpop.f32.mrf.mxu0
    %v1754 = vadd.f32 %v1331, %v1753
    %v1755 = vpop.f32.mrf.mxu0
    %v1756 = vadd.f32 %v1335, %v1755
    %1757 = vmatmul.bf16.gmra.mxu0 %v1639
    %v1758 = vpop.f32.mrf.mxu0
    %v1759 = vadd.f32 %v1339, %v1758
    %v1760 = vpop.f32.mrf.mxu0
    %v1761 = vadd.f32 %v1343, %v1760
    %1762 = vmatmul.bf16.gmra.mxu0 %v1642
    %v1763 = vpop.f32.mrf.mxu0
    %v1764 = vadd.f32 %v1347, %v1763
    %v1765 = vpop.f32.mrf.mxu0
    %v1766 = vadd.f32 %v1351, %v1765
    %1767 = vmatmul.bf16.gmra.mxu0 %v1645
    %v1768 = vpop.f32.mrf.mxu0
    %v1769 = vadd.f32 %v1355, %v1768
    %v1770 = vpop.f32.mrf.mxu0
    %v1771 = vadd.f32 %v1359, %v1770
    %1772 = vmatmul.bf16.gmra.mxu0 %v1648
    %v1773 = vpop.f32.mrf.mxu0
    %v1774 = vadd.f32 %v1363, %v1773
    %v1775 = vpop.f32.mrf.mxu0
    %v1776 = vadd.f32 %v1367, %v1775
    %1777 = vmatmul.bf16.gmra.mxu0 %v1651
    %v1778 = vpop.f32.mrf.mxu0
    %v1779 = vadd.f32 %v1371, %v1778
    %v1780 = vpop.f32.mrf.mxu0
    %v1781 = vadd.f32 %v1375, %v1780
    %1782 = vmatmul.bf16.gmra.mxu0 %v1654
    %v1783 = vpop.f32.mrf.mxu0
    %v1784 = vadd.f32 %v1379, %v1783
    %v1785 = vpop.f32.mrf.mxu0
    %v1786 = vadd.f32 %v1383, %v1785
    %1787 = vmatmul.bf16.gmra.mxu0 %v1657
    %v1788 = vpop.f32.mrf.mxu0
    %v1789 = vadd.f32 %v1387, %v1788
    %v1790 = vpop.f32.mrf.mxu0
    %v1791 = vadd.f32 %v1391, %v1790
    %1792 = vmatmul.bf16.gmra.mxu0 %v1660
    %v1793 = vpop.f32.mrf.mxu0
    %v1794 = vadd.f32 %v1395, %v1793
    %v1795 = vpop.f32.mrf.mxu0
    %v1796 = vadd.f32 %v1399, %v1795
    %1797 = vmatmul.bf16.gmra.mxu0 %v1663
    %v1798 = vpop.f32.mrf.mxu0
    %v1799 = vadd.f32 %v1403, %v1798
    %v1800 = vpop.f32.mrf.mxu0
    %v1801 = vadd.f32 %v1407, %v1800
    %1802 = vmatmul.bf16.gmra.mxu0 %v1666
    %v1803 = vpop.f32.mrf.mxu0
    %v1804 = vadd.f32 %v1411, %v1803
    %v1805 = vpop.f32.mrf.mxu0
    %v1806 = vadd.f32 %v1415, %v1805
    %1807 = vmatmul.bf16.gmra.mxu0 %v1669
    %v1808 = vpop.f32.mrf.mxu0
    %v1809 = vadd.f32 %v1419, %v1808
    %v1810 = vpop.f32.mrf.mxu0
    %v1811 = vadd.f32 %v1423, %v1810
    %1812 = vmatmul.bf16.gmra.mxu0 %v1672
    %v1813 = vpop.f32.mrf.mxu0
    %v1814 = vadd.f32 %v1427, %v1813
    %v1815 = vpop.f32.mrf.mxu0
    %v1816 = vadd.f32 %v1431, %v1815
    %1817 = vmatmul.bf16.gmra.mxu0 %v1675
    %v1818 = vpop.f32.mrf.mxu0
    %v1819 = vadd.f32 %v1435, %v1818
    %v1820 = vpop.f32.mrf.mxu0
    %v1821 = vadd.f32 %v1439, %v1820
    %1822 = vmatmul.bf16.gmra.mxu0 %v1678
    %v1823 = vpop.f32.mrf.mxu0
    %v1824 = vadd.f32 %v1443, %v1823
    %v1825 = vpop.f32.mrf.mxu0
    %v1826 = vadd.f32 %v1447, %v1825
    %1827 = vmatmul.bf16.gmra.mxu0 %v1681
    %v1828 = vpop.f32.mrf.mxu0
    %v1829 = vadd.f32 %v1451, %v1828
    %v1830 = vpop.f32.mrf.mxu0
    %v1831 = vadd.f32 %v1455, %v1830
    %1832 = vmatmul.bf16.gmra.mxu0 %v1684
    %v1833 = vpop.f32.mrf.mxu0
    %v1834 = vadd.f32 %v1459, %v1833
    %v1835 = vpop.f32.mrf.mxu0
    %v1836 = vadd.f32 %v1463, %v1835
    %1837 = vmatmul.bf16.gmra.mxu0 %v1687
    %v1838 = vpop.f32.mrf.mxu0
    %v1839 = vadd.f32 %v1467, %v1838
    %v1840 = vpop.f32.mrf.mxu0
    %v1841 = vadd.f32 %v1471, %v1840
    %1842 = vmatmul.bf16.gmra.mxu0 %v1690
    %v1843 = vpop.f32.mrf.mxu0
    %v1844 = vadd.f32 %v1475, %v1843
    %v1845 = vpop.f32.mrf.mxu0
    %v1846 = vadd.f32 %v1479, %v1845
    %1847 = vmatmul.bf16.gmra.mxu0 %v1693
    %v1848 = vpop.f32.mrf.mxu0
    %v1849 = vadd.f32 %v1483, %v1848
    %v1850 = vpop.f32.mrf.mxu0
    %v1851 = vadd.f32 %v1487, %v1850
    %1852 = vmatmul.bf16.gmra.mxu0 %v1696
    %v1853 = vpop.f32.mrf.mxu0
    %v1854 = vadd.f32 %v1491, %v1853
    %v1855 = vpop.f32.mrf.mxu0
    %v1856 = vadd.f32 %v1495, %v1855
    %1857 = vmatmul.bf16.gmra.mxu0 %v1699
    %v1858 = vpop.f32.mrf.mxu0
    %v1859 = vadd.f32 %v1499, %v1858
    %v1860 = vpop.f32.mrf.mxu0
    %v1861 = vadd.f32 %v1503, %v1860
    %1862 = vmatmul.bf16.gmra.mxu0 %v1702
    %v1863 = vpop.f32.mrf.mxu0
    %v1864 = vadd.f32 %v1507, %v1863
    %v1865 = vpop.f32.mrf.mxu0
    %v1866 = vadd.f32 %v1511, %v1865
    %1867 = vmatmul.bf16.gmra.mxu0 %v1705
    %v1868 = vpop.f32.mrf.mxu0
    %v1869 = vadd.f32 %v1515, %v1868
    %v1870 = vpop.f32.mrf.mxu0
    %v1871 = vadd.f32 %v1519, %v1870
    %1872 = vmatmul.bf16.gmra.mxu0 %v1708
    %v1873 = vpop.f32.mrf.mxu0
    %v1874 = vadd.f32 %v1523, %v1873
    %v1875 = vpop.f32.mrf.mxu0
    %v1876 = vadd.f32 %v1527, %v1875
    %1877 = vmatmul.bf16.gmra.mxu0 %v1711
    %v1878 = vpop.f32.mrf.mxu0
    %v1879 = vadd.f32 %v1531, %v1878
    %v1880 = vpop.f32.mrf.mxu0
    %v1881 = vadd.f32 %v1535, %v1880
    %1882 = vmatmul.bf16.gmra.mxu0 %v1714
    %v1883 = vpop.f32.mrf.mxu0
    %v1884 = vadd.f32 %v1539, %v1883
    %v1885 = vpop.f32.mrf.mxu0
    %v1886 = vadd.f32 %v1543, %v1885
    %1887 = vmatmul.bf16.gmra.mxu0 %v1717
    %v1888 = vpop.f32.mrf.mxu0
    %v1889 = vadd.f32 %v1547, %v1888
    %v1890 = vpop.f32.mrf.mxu0
    %v1891 = vadd.f32 %v1551, %v1890
    %1892 = vmatmul.bf16.gmra.mxu0 %v1720
    %v1893 = vpop.f32.mrf.mxu0
    %v1894 = vadd.f32 %v1555, %v1893
    %v1895 = vpop.f32.mrf.mxu0
    %v1896 = vadd.f32 %v1559, %v1895
    %1897 = vdwg.mxu0
    %1898 = vmatpush.bf16.msra.mxu0 0
    %1899 = vmatpush.bf16.msra.mxu0 0
    %1900 = vmatpush.bf16.msra.mxu0 0
    %1901 = vmatpush.bf16.msra.mxu0 0
    %1902 = vmatpush.bf16.msra.mxu0 0
    %1903 = vmatpush.bf16.msra.mxu0 0
    %1904 = vmatpush.bf16.msra.mxu0 0
    %1905 = vmatpush.bf16.msra.mxu0 %v1727
    %1906 = vmatmul.bf16.gmra.mxu0 %v1627
    %v1907 = vpop.f32.mrf.mxu0
    %v1908 = vadd.f32 %v1307, %v1907
    %v1909 = vpop.f32.mrf.mxu0
    %v1910 = vadd.f32 %v1311, %v1909
    %1911 = vmatmul.bf16.gmra.mxu0 %v1630
    %v1912 = vpop.f32.mrf.mxu0
    %v1913 = vadd.f32 %v1315, %v1912
    %v1914 = vpop.f32.mrf.mxu0
    %v1915 = vadd.f32 %v1319, %v1914
    %1916 = vmatmul.bf16.gmra.mxu0 %v1633
    %v1917 = vpop.f32.mrf.mxu0
    %v1918 = vadd.f32 %v1323, %v1917
    %v1919 = vpop.f32.mrf.mxu0
    %v1920 = vadd.f32 %v1327, %v1919
    %1921 = vmatmul.bf16.gmra.mxu0 %v1636
    %v1922 = vpop.f32.mrf.mxu0
    %v1923 = vadd.f32 %v1331, %v1922
    %v1924 = vpop.f32.mrf.mxu0
    %v1925 = vadd.f32 %v1335, %v1924
    %1926 = vmatmul.bf16.gmra.mxu0 %v1639
    %v1927 = vpop.f32.mrf.mxu0
    %v1928 = vadd.f32 %v1339, %v1927
    %v1929 = vpop.f32.mrf.mxu0
    %v1930 = vadd.f32 %v1343, %v1929
    %1931 = vmatmul.bf16.gmra.mxu0 %v1642
    %v1932 = vpop.f32.mrf.mxu0
    %v1933 = vadd.f32 %v1347, %v1932
    %v1934 = vpop.f32.mrf.mxu0
    %v1935 = vadd.f32 %v1351, %v1934
    %1936 = vmatmul.bf16.gmra.mxu0 %v1645
    %v1937 = vpop.f32.mrf.mxu0
    %v1938 = vadd.f32 %v1355, %v1937
    %v1939 = vpop.f32.mrf.mxu0
    %v1940 = vadd.f32 %v1359, %v1939
    %1941 = vmatmul.bf16.gmra.mxu0 %v1648
    %v1942 = vpop.f32.mrf.mxu0
    %v1943 = vadd.f32 %v1363, %v1942
    %v1944 = vpop.f32.mrf.mxu0
    %v1945 = vadd.f32 %v1367, %v1944
    %1946 = vmatmul.bf16.gmra.mxu0 %v1651
    %v1947 = vpop.f32.mrf.mxu0
    %v1948 = vadd.f32 %v1371, %v1947
    %v1949 = vpop.f32.mrf.mxu0
    %v1950 = vadd.f32 %v1375, %v1949
    %1951 = vmatmul.bf16.gmra.mxu0 %v1654
    %v1952 = vpop.f32.mrf.mxu0
    %v1953 = vadd.f32 %v1379, %v1952
    %v1954 = vpop.f32.mrf.mxu0
    %v1955 = vadd.f32 %v1383, %v1954
    %1956 = vmatmul.bf16.gmra.mxu0 %v1657
    %v1957 = vpop.f32.mrf.mxu0
    %v1958 = vadd.f32 %v1387, %v1957
    %v1959 = vpop.f32.mrf.mxu0
    %v1960 = vadd.f32 %v1391, %v1959
    %1961 = vmatmul.bf16.gmra.mxu0 %v1660
    %v1962 = vpop.f32.mrf.mxu0
    %v1963 = vadd.f32 %v1395, %v1962
    %v1964 = vpop.f32.mrf.mxu0
    %v1965 = vadd.f32 %v1399, %v1964
    %1966 = vmatmul.bf16.gmra.mxu0 %v1663
    %v1967 = vpop.f32.mrf.mxu0
    %v1968 = vadd.f32 %v1403, %v1967
    %v1969 = vpop.f32.mrf.mxu0
    %v1970 = vadd.f32 %v1407, %v1969
    %1971 = vmatmul.bf16.gmra.mxu0 %v1666
    %v1972 = vpop.f32.mrf.mxu0
    %v1973 = vadd.f32 %v1411, %v1972
    %v1974 = vpop.f32.mrf.mxu0
    %v1975 = vadd.f32 %v1415, %v1974
    %1976 = vmatmul.bf16.gmra.mxu0 %v1669
    %v1977 = vpop.f32.mrf.mxu0
    %v1978 = vadd.f32 %v1419, %v1977
    %v1979 = vpop.f32.mrf.mxu0
    %v1980 = vadd.f32 %v1423, %v1979
    %1981 = vmatmul.bf16.gmra.mxu0 %v1672
    %v1982 = vpop.f32.mrf.mxu0
    %v1983 = vadd.f32 %v1427, %v1982
    %v1984 = vpop.f32.mrf.mxu0
    %v1985 = vadd.f32 %v1431, %v1984
    %1986 = vmatmul.bf16.gmra.mxu0 %v1675
    %v1987 = vpop.f32.mrf.mxu0
    %v1988 = vadd.f32 %v1435, %v1987
    %v1989 = vpop.f32.mrf.mxu0
    %v1990 = vadd.f32 %v1439, %v1989
    %1991 = vmatmul.bf16.gmra.mxu0 %v1678
    %v1992 = vpop.f32.mrf.mxu0
    %v1993 = vadd.f32 %v1443, %v1992
    %v1994 = vpop.f32.mrf.mxu0
    %v1995 = vadd.f32 %v1447, %v1994
    %1996 = vmatmul.bf16.gmra.mxu0 %v1681
    %v1997 = vpop.f32.mrf.mxu0
    %v1998 = vadd.f32 %v1451, %v1997
    %v1999 = vpop.f32.mrf.mxu0
    %v2000 = vadd.f32 %v1455, %v1999
    %2001 = vmatmul.bf16.gmra.mxu0 %v1684
    %v2002 = vpop.f32.mrf.mxu0
    %v2003 = vadd.f32 %v1459, %v2002
    %v2004 = vpop.f32.mrf.mxu0
    %v2005 = vadd.f32 %v1463, %v2004
    %2006 = vmatmul.bf16.gmra.mxu0 %v1687
    %v2007 = vpop.f32.mrf.mxu0
    %v2008 = vadd.f32 %v1467, %v2007
    %v2009 = vpop.f32.mrf.mxu0
    %v2010 = vadd.f32 %v1471, %v2009
    %2011 = vmatmul.bf16.gmra.mxu0 %v1690
    %v2012 = vpop.f32.mrf.mxu0
    %v2013 = vadd.f32 %v1475, %v2012
    %v2014 = vpop.f32.mrf.mxu0
    %v2015 = vadd.f32 %v1479, %v2014
    %2016 = vmatmul.bf16.gmra.mxu0 %v1693
    %v2017 = vpop.f32.mrf.mxu0
    %v2018 = vadd.f32 %v1483, %v2017
    %v2019 = vpop.f32.mrf.mxu0
    %v2020 = vadd.f32 %v1487, %v2019
    %2021 = vmatmul.bf16.gmra.mxu0 %v1696
    %v2022 = vpop.f32.mrf.mxu0
    %v2023 = vadd.f32 %v1491, %v2022
    %v2024 = vpop.f32.mrf.mxu0
    %v2025 = vadd.f32 %v1495, %v2024
    %2026 = vmatmul.bf16.gmra.mxu0 %v1699
    %v2027 = vpop.f32.mrf.mxu0
    %v2028 = vadd.f32 %v1499, %v2027
    %v2029 = vpop.f32.mrf.mxu0
    %v2030 = vadd.f32 %v1503, %v2029
    %2031 = vmatmul.bf16.gmra.mxu0 %v1702
    %v2032 = vpop.f32.mrf.mxu0
    %v2033 = vadd.f32 %v1507, %v2032
    %v2034 = vpop.f32.mrf.mxu0
    %v2035 = vadd.f32 %v1511, %v2034
    %2036 = vmatmul.bf16.gmra.mxu0 %v1705
    %v2037 = vpop.f32.mrf.mxu0
    %v2038 = vadd.f32 %v1515, %v2037
    %v2039 = vpop.f32.mrf.mxu0
    %v2040 = vadd.f32 %v1519, %v2039
    %2041 = vmatmul.bf16.gmra.mxu0 %v1708
    %v2042 = vpop.f32.mrf.mxu0
    %v2043 = vadd.f32 %v1523, %v2042
    %v2044 = vpop.f32.mrf.mxu0
    %v2045 = vadd.f32 %v1527, %v2044
    %2046 = vmatmul.bf16.gmra.mxu0 %v1711
    %v2047 = vpop.f32.mrf.mxu0
    %v2048 = vadd.f32 %v1531, %v2047
    %v2049 = vpop.f32.mrf.mxu0
    %v2050 = vadd.f32 %v1535, %v2049
    %2051 = vmatmul.bf16.gmra.mxu0 %v1714
    %v2052 = vpop.f32.mrf.mxu0
    %v2053 = vadd.f32 %v1539, %v2052
    %v2054 = vpop.f32.mrf.mxu0
    %v2055 = vadd.f32 %v1543, %v2054
    %2056 = vmatmul.bf16.gmra.mxu0 %v1717
    %v2057 = vpop.f32.mrf.mxu0
    %v2058 = vadd.f32 %v1547, %v2057
    %v2059 = vpop.f32.mrf.mxu0
    %v2060 = vadd.f32 %v1551, %v2059
    %2061 = vmatmul.bf16.gmra.mxu0 %v1720
    %v2062 = vpop.f32.mrf.mxu0
    %v2063 = vadd.f32 %v1555, %v2062
    %v2064 = vpop.f32.mrf.mxu0
    %v2065 = vadd.f32 %v1559, %v2064
    %2066 = vdwg.mxu0
    %v2067 = vpack.c.bf16 %v1741, %v1739
    %v2068 = vpack.c.bf16 %v1910, %v1908
    %v2069 = vpack.c.bf16 %v1746, %v1744
    %v2070 = vpack.c.bf16 %v1915, %v1913
    %v2071 = vpack.c.bf16 %v1751, %v1749
    %v2072 = vpack.c.bf16 %v1920, %v1918
    %v2073 = vpack.c.bf16 %v1756, %v1754
    %v2074 = vpack.c.bf16 %v1925, %v1923
    %v2075 = vpack.c.bf16 %v1761, %v1759
    %v2076 = vpack.c.bf16 %v1930, %v1928
    %v2077 = vpack.c.bf16 %v1766, %v1764
    %v2078 = vpack.c.bf16 %v1935, %v1933
    %v2079 = vpack.c.bf16 %v1771, %v1769
    %v2080 = vpack.c.bf16 %v1940, %v1938
    %v2081 = vpack.c.bf16 %v1776, %v1774
    %v2082 = vpack.c.bf16 %v1945, %v1943
    %v2083 = vpack.c.bf16 %v1781, %v1779
    %v2084 = vpack.c.bf16 %v1950, %v1948
    %v2085 = vpack.c.bf16 %v1786, %v1784
    %v2086 = vpack.c.bf16 %v1955, %v1953
    %v2087 = vpack.c.bf16 %v1791, %v1789
    %v2088 = vpack.c.bf16 %v1960, %v1958
    %v2089 = vpack.c.bf16 %v1796, %v1794
    %v2090 = vpack.c.bf16 %v1965, %v1963
    %v2091 = vpack.c.bf16 %v1801, %v1799
    %v2092 = vpack.c.bf16 %v1970, %v1968
    %v2093 = vpack.c.bf16 %v1806, %v1804
    %v2094 = vpack.c.bf16 %v1975, %v1973
    %v2095 = vpack.c.bf16 %v1811, %v1809
    %v2096 = vpack.c.bf16 %v1980, %v1978
    %v2097 = vpack.c.bf16 %v1816, %v1814
    %v2098 = vpack.c.bf16 %v1985, %v1983
    %v2099 = vpack.c.bf16 %v1821, %v1819
    %v2100 = vpack.c.bf16 %v1990, %v1988
    %v2101 = vpack.c.bf16 %v1826, %v1824
    %v2102 = vpack.c.bf16 %v1995, %v1993
    %v2103 = vpack.c.bf16 %v1831, %v1829
    %v2104 = vpack.c.bf16 %v2000, %v1998
    %v2105 = vpack.c.bf16 %v1836, %v1834
    %v2106 = vpack.c.bf16 %v2005, %v2003
    %v2107 = vpack.c.bf16 %v1841, %v1839
    %v2108 = vpack.c.bf16 %v2010, %v2008
    %v2109 = vpack.c.bf16 %v1846, %v1844
    %v2110 = vpack.c.bf16 %v2015, %v2013
    %v2111 = vpack.c.bf16 %v1851, %v1849
    %v2112 = vpack.c.bf16 %v2020, %v2018
    %v2113 = vpack.c.bf16 %v1856, %v1854
    %v2114 = vpack.c.bf16 %v2025, %v2023
    %v2115 = vpack.c.bf16 %v1861, %v1859
    %v2116 = vpack.c.bf16 %v2030, %v2028
    %v2117 = vpack.c.bf16 %v1866, %v1864
    %v2118 = vpack.c.bf16 %v2035, %v2033
    %v2119 = vpack.c.bf16 %v1871, %v1869
    %v2120 = vpack.c.bf16 %v2040, %v2038
    %v2121 = vpack.c.bf16 %v1876, %v1874
    %v2122 = vpack.c.bf16 %v2045, %v2043
    %v2123 = vpack.c.bf16 %v1881, %v1879
    %v2124 = vpack.c.bf16 %v2050, %v2048
    %v2125 = vpack.c.bf16 %v1886, %v1884
    %v2126 = vpack.c.bf16 %v2055, %v2053
    %v2127 = vpack.c.bf16 %v1891, %v1889
    %v2128 = vpack.c.bf16 %v2060, %v2058
    %v2129 = vpack.c.bf16 %v1896, %v1894
    %v2130 = vpack.c.bf16 %v2065, %v2063
    %2132 = vset.pattern.permute.xlu0 1
    %2133 = vperm.xlu0 %2132, %v176
    %v2134 = vpop.permute.xlu0 %2133
    %v2140 = vunpack.c.l.b16 %v107
    %v2141 = vunpack.c.h.b16 %v107
    %v2142 = vunpack.c.l.b16 %v108
    %v2143 = vunpack.c.h.b16 %v108
    %v2144 = vunpack.c.l.b16 %v109
    %v2145 = vunpack.c.h.b16 %v109
    %v2146 = vunpack.c.l.b16 %v110
    %v2147 = vunpack.c.h.b16 %v110
    %v2148 = vpack.c.b16 %v2144, %v2140
    %v2149 = vpack.c.b16 %v2145, %v2141
    %v2150 = vpack.c.b16 %v2146, %v2142
    %v2151 = vpack.c.b16 %v2147, %v2143
    %v2152 = vrot.slane %v2148, 2
    %v2153 = vrot.slane %v2149, 2
    %v2154 = vrot.slane %v2150, 2
    %v2155 = vrot.slane %v2151, 2
    %2160 = vmatpush.bf16.msra.mxu0 %v2081
    %2161 = vmatpush.bf16.msra.mxu0 %v2079
    %2162 = vmatpush.bf16.msra.mxu0 %v2077
    %2163 = vmatpush.bf16.msra.mxu0 %v2075
    %2164 = vmatpush.bf16.msra.mxu0 %v2073
    %2165 = vmatpush.bf16.msra.mxu0 %v2071
    %2166 = vmatpush.bf16.msra.mxu0 %v2069
    %2167 = vmatpush.bf16.msra.mxu0 %v2067
    %2168 = vmatmul.bf16.gmra.mxu0 %v2152
    %v2169 = vpop.f32.mrf.mxu0
    %v2170 = vadd.f32 %v2134, %v2169
    %v2171 = vpop.f32.mrf.mxu0
    %2172 = vdwg.mxu0
    %2173 = vmatpush.bf16.msra.mxu0 %v2097
    %2174 = vmatpush.bf16.msra.mxu0 %v2095
    %2175 = vmatpush.bf16.msra.mxu0 %v2093
    %2176 = vmatpush.bf16.msra.mxu0 %v2091
    %2177 = vmatpush.bf16.msra.mxu0 %v2089
    %2178 = vmatpush.bf16.msra.mxu0 %v2087
    %2179 = vmatpush.bf16.msra.mxu0 %v2085
    %2180 = vmatpush.bf16.msra.mxu0 %v2083
    %2181 = vmatmul.bf16.gmra.mxu0 %v2153
    %v2182 = vpop.f32.mrf.mxu0
    %v2183 = vadd.f32 %v2170, %v2182
    %v2184 = vpop.f32.mrf.mxu0
    %2185 = vdwg.mxu0
    %2186 = vmatpush.bf16.msra.mxu0 %v2113
    %2187 = vmatpush.bf16.msra.mxu0 %v2111
    %2188 = vmatpush.bf16.msra.mxu0 %v2109
    %2189 = vmatpush.bf16.msra.mxu0 %v2107
    %2190 = vmatpush.bf16.msra.mxu0 %v2105
    %2191 = vmatpush.bf16.msra.mxu0 %v2103
    %2192 = vmatpush.bf16.msra.mxu0 %v2101
    %2193 = vmatpush.bf16.msra.mxu0 %v2099
    %2194 = vmatmul.bf16.gmra.mxu0 %v2154
    %v2195 = vpop.f32.mrf.mxu0
    %v2196 = vadd.f32 %v2183, %v2195
    %v2197 = vpop.f32.mrf.mxu0
    %2198 = vdwg.mxu0
    %2199 = vmatpush.bf16.msra.mxu0 %v2129
    %2200 = vmatpush.bf16.msra.mxu0 %v2127
    %2201 = vmatpush.bf16.msra.mxu0 %v2125
    %2202 = vmatpush.bf16.msra.mxu0 %v2123
    %2203 = vmatpush.bf16.msra.mxu0 %v2121
    %2204 = vmatpush.bf16.msra.mxu0 %v2119
    %2205 = vmatpush.bf16.msra.mxu0 %v2117
    %2206 = vmatpush.bf16.msra.mxu0 %v2115
    %2207 = vmatmul.bf16.gmra.mxu0 %v2155
    %v2208 = vpop.f32.mrf.mxu0
    %v2209 = vadd.f32 %v2196, %v2208
    %v2210 = vpop.f32.mrf.mxu0
    %2211 = vdwg.mxu0
    %2212 = vmatpush.bf16.msra.mxu0 %v2082
    %2213 = vmatpush.bf16.msra.mxu0 %v2080
    %2214 = vmatpush.bf16.msra.mxu0 %v2078
    %2215 = vmatpush.bf16.msra.mxu0 %v2076
    %2216 = vmatpush.bf16.msra.mxu0 %v2074
    %2217 = vmatpush.bf16.msra.mxu0 %v2072
    %2218 = vmatpush.bf16.msra.mxu0 %v2070
    %2219 = vmatpush.bf16.msra.mxu0 %v2068
    %2220 = vmatmul.bf16.gmra.mxu0 %v2152
    %v2221 = vpop.f32.mrf.mxu0
    %v2222 = vadd.f32 %v2134, %v2221
    %v2223 = vpop.f32.mrf.mxu0
    %2224 = vdwg.mxu0
    %2225 = vmatpush.bf16.msra.mxu0 %v2098
    %2226 = vmatpush.bf16.msra.mxu0 %v2096
    %2227 = vmatpush.bf16.msra.mxu0 %v2094
    %2228 = vmatpush.bf16.msra.mxu0 %v2092
    %2229 = vmatpush.bf16.msra.mxu0 %v2090
    %2230 = vmatpush.bf16.msra.mxu0 %v2088
    %2231 = vmatpush.bf16.msra.mxu0 %v2086
    %2232 = vmatpush.bf16.msra.mxu0 %v2084
    %2233 = vmatmul.bf16.gmra.mxu0 %v2153
    %v2234 = vpop.f32.mrf.mxu0
    %v2235 = vadd.f32 %v2222, %v2234
    %v2236 = vpop.f32.mrf.mxu0
    %2237 = vdwg.mxu0
    %2238 = vmatpush.bf16.msra.mxu0 %v2114
    %2239 = vmatpush.bf16.msra.mxu0 %v2112
    %2240 = vmatpush.bf16.msra.mxu0 %v2110
    %2241 = vmatpush.bf16.msra.mxu0 %v2108
    %2242 = vmatpush.bf16.msra.mxu0 %v2106
    %2243 = vmatpush.bf16.msra.mxu0 %v2104
    %2244 = vmatpush.bf16.msra.mxu0 %v2102
    %2245 = vmatpush.bf16.msra.mxu0 %v2100
    %2246 = vmatmul.bf16.gmra.mxu0 %v2154
    %v2247 = vpop.f32.mrf.mxu0
    %v2248 = vadd.f32 %v2235, %v2247
    %v2249 = vpop.f32.mrf.mxu0
    %2250 = vdwg.mxu0
    %2251 = vmatpush.bf16.msra.mxu0 %v2130
    %2252 = vmatpush.bf16.msra.mxu0 %v2128
    %2253 = vmatpush.bf16.msra.mxu0 %v2126
    %2254 = vmatpush.bf16.msra.mxu0 %v2124
    %2255 = vmatpush.bf16.msra.mxu0 %v2122
    %2256 = vmatpush.bf16.msra.mxu0 %v2120
    %2257 = vmatpush.bf16.msra.mxu0 %v2118
    %2258 = vmatpush.bf16.msra.mxu0 %v2116
    %2259 = vmatmul.bf16.gmra.mxu0 %v2155
    %v2260 = vpop.f32.mrf.mxu0
    %v2261 = vadd.f32 %v2248, %v2260
    %v2262 = vpop.f32.mrf.mxu0
    %2263 = vdwg.mxu0
    %v2264 = vsub.f32 %v2209, %v182
    %v2265 = vsub.f32 %v2261, %v183
    %v2266 = vmul.f32 %v2264, %v2264
    %v2267 = vmul.f32 %v2265, %v2265
    %v2268 = vadd.f32 %v2266, %v2267
    %2269 = vadd.xlane.f32.xlu0 %v2268
    %v2270 = vpop.xlane.xlu0 %2269
    %v2271 = vrot.slane %v2270, 4
    %v2272 = vadd.f32 %v2270, %v2271
    %v2273 = vrot.slane %v2272, 2
    %v2274 = vadd.f32 %v2272, %v2273
    %v2275 = vrot.slane %v2274, 1
    %v2276 = vadd.f32 %v2274, %v2275
    %v2277 = vstv %s179
    %v2278 = vmul.f32 %v2277, %v2276
    %v2279 = vadd.f32 %v2278, 0.0
    %s2280 = sld [smem:[#allocation2 + $0x1]]
    %s2281 = sld [smem:[#allocation2 + $0x81]]
    %s2282 = sld [smem:[#allocation2 + $0x101]]
    %s2283 = scalar_lea.vmem %s1, 16
    %v2284 = vld [vmem:[%s2283] sm:$0xff]
    %v2285 = vld [vmem:[%s2283 + $0x8] sm:$0xff]
    %s2286 = scalar_lea.vmem %s2, 16
    %v2287 = vld [vmem:[%s2286] sm:$0xff]
    %v2288 = vld [vmem:[%s2286 + $0x8] sm:$0xff]
    %v2289 = vstv %s2280
    %v2290 = vmul.f32 %v2289, %v2284
    %v2291 = vmul.f32 %v2289, %v2285
    %v2292 = vstv %s2281
    %v2293 = vmul.f32 %v2292, %v2287
    %v2294 = vmul.f32 %v2292, %v2288
    %v2295 = vadd.f32 %v2290, %v2293
    %v2296 = vadd.f32 %v2291, %v2294
    %v2297 = vpack.c.bf16 %v2295, %v2295
    %v2298 = vpack.c.bf16 %v2296, %v2296
    %v2300 = vsel %vm771, %v2297, 0
    %v2303 = vsel %vm771, %v2298, 0
    %2305 = vmatpush.bf16.msra.mxu0 0
    %2306 = vmatpush.bf16.msra.mxu0 0
    %2307 = vmatpush.bf16.msra.mxu0 0
    %2308 = vmatpush.bf16.msra.mxu0 0
    %2309 = vmatpush.bf16.msra.mxu0 0
    %2310 = vmatpush.bf16.msra.mxu0 0
    %2311 = vmatpush.bf16.msra.mxu0 0
    %2312 = vmatpush.bf16.msra.mxu0 %v2300
    %2313 = vmatmul.bf16.gmra.mxu0 %v676
    %v2314 = vpop.f32.mrf.mxu0
    %v2315 = vadd.f32 %v197, %v2314
    %v2316 = vpop.f32.mrf.mxu0
    %v2317 = vadd.f32 %v202, %v2316
    %2318 = vmatmul.bf16.gmra.mxu0 %v679
    %v2319 = vpop.f32.mrf.mxu0
    %v2320 = vadd.f32 %v207, %v2319
    %v2321 = vpop.f32.mrf.mxu0
    %v2322 = vadd.f32 %v212, %v2321
    %2323 = vmatmul.bf16.gmra.mxu0 %v682
    %v2324 = vpop.f32.mrf.mxu0
    %v2325 = vadd.f32 %v217, %v2324
    %v2326 = vpop.f32.mrf.mxu0
    %v2327 = vadd.f32 %v222, %v2326
    %2328 = vmatmul.bf16.gmra.mxu0 %v685
    %v2329 = vpop.f32.mrf.mxu0
    %v2330 = vadd.f32 %v227, %v2329
    %v2331 = vpop.f32.mrf.mxu0
    %v2332 = vadd.f32 %v232, %v2331
    %2333 = vmatmul.bf16.gmra.mxu0 %v688
    %v2334 = vpop.f32.mrf.mxu0
    %v2335 = vadd.f32 %v237, %v2334
    %v2336 = vpop.f32.mrf.mxu0
    %v2337 = vadd.f32 %v242, %v2336
    %2338 = vmatmul.bf16.gmra.mxu0 %v691
    %v2339 = vpop.f32.mrf.mxu0
    %v2340 = vadd.f32 %v247, %v2339
    %v2341 = vpop.f32.mrf.mxu0
    %v2342 = vadd.f32 %v252, %v2341
    %2343 = vmatmul.bf16.gmra.mxu0 %v694
    %v2344 = vpop.f32.mrf.mxu0
    %v2345 = vadd.f32 %v257, %v2344
    %v2346 = vpop.f32.mrf.mxu0
    %v2347 = vadd.f32 %v262, %v2346
    %2348 = vmatmul.bf16.gmra.mxu0 %v697
    %v2349 = vpop.f32.mrf.mxu0
    %v2350 = vadd.f32 %v267, %v2349
    %v2351 = vpop.f32.mrf.mxu0
    %v2352 = vadd.f32 %v272, %v2351
    %2353 = vmatmul.bf16.gmra.mxu0 %v700
    %v2354 = vpop.f32.mrf.mxu0
    %v2355 = vadd.f32 %v277, %v2354
    %v2356 = vpop.f32.mrf.mxu0
    %v2357 = vadd.f32 %v282, %v2356
    %2358 = vmatmul.bf16.gmra.mxu0 %v703
    %v2359 = vpop.f32.mrf.mxu0
    %v2360 = vadd.f32 %v287, %v2359
    %v2361 = vpop.f32.mrf.mxu0
    %v2362 = vadd.f32 %v292, %v2361
    %2363 = vmatmul.bf16.gmra.mxu0 %v706
    %v2364 = vpop.f32.mrf.mxu0
    %v2365 = vadd.f32 %v297, %v2364
    %v2366 = vpop.f32.mrf.mxu0
    %v2367 = vadd.f32 %v302, %v2366
    %2368 = vmatmul.bf16.gmra.mxu0 %v709
    %v2369 = vpop.f32.mrf.mxu0
    %v2370 = vadd.f32 %v307, %v2369
    %v2371 = vpop.f32.mrf.mxu0
    %v2372 = vadd.f32 %v312, %v2371
    %2373 = vmatmul.bf16.gmra.mxu0 %v712
    %v2374 = vpop.f32.mrf.mxu0
    %v2375 = vadd.f32 %v317, %v2374
    %v2376 = vpop.f32.mrf.mxu0
    %v2377 = vadd.f32 %v322, %v2376
    %2378 = vmatmul.bf16.gmra.mxu0 %v715
    %v2379 = vpop.f32.mrf.mxu0
    %v2380 = vadd.f32 %v327, %v2379
    %v2381 = vpop.f32.mrf.mxu0
    %v2382 = vadd.f32 %v332, %v2381
    %2383 = vmatmul.bf16.gmra.mxu0 %v718
    %v2384 = vpop.f32.mrf.mxu0
    %v2385 = vadd.f32 %v337, %v2384
    %v2386 = vpop.f32.mrf.mxu0
    %v2387 = vadd.f32 %v342, %v2386
    %2388 = vmatmul.bf16.gmra.mxu0 %v721
    %v2389 = vpop.f32.mrf.mxu0
    %v2390 = vadd.f32 %v347, %v2389
    %v2391 = vpop.f32.mrf.mxu0
    %v2392 = vadd.f32 %v352, %v2391
    %2393 = vmatmul.bf16.gmra.mxu0 %v724
    %v2394 = vpop.f32.mrf.mxu0
    %v2395 = vadd.f32 %v357, %v2394
    %v2396 = vpop.f32.mrf.mxu0
    %v2397 = vadd.f32 %v362, %v2396
    %2398 = vmatmul.bf16.gmra.mxu0 %v727
    %v2399 = vpop.f32.mrf.mxu0
    %v2400 = vadd.f32 %v367, %v2399
    %v2401 = vpop.f32.mrf.mxu0
    %v2402 = vadd.f32 %v372, %v2401
    %2403 = vmatmul.bf16.gmra.mxu0 %v730
    %v2404 = vpop.f32.mrf.mxu0
    %v2405 = vadd.f32 %v377, %v2404
    %v2406 = vpop.f32.mrf.mxu0
    %v2407 = vadd.f32 %v382, %v2406
    %2408 = vmatmul.bf16.gmra.mxu0 %v733
    %v2409 = vpop.f32.mrf.mxu0
    %v2410 = vadd.f32 %v387, %v2409
    %v2411 = vpop.f32.mrf.mxu0
    %v2412 = vadd.f32 %v392, %v2411
    %2413 = vmatmul.bf16.gmra.mxu0 %v736
    %v2414 = vpop.f32.mrf.mxu0
    %v2415 = vadd.f32 %v397, %v2414
    %v2416 = vpop.f32.mrf.mxu0
    %v2417 = vadd.f32 %v402, %v2416
    %2418 = vmatmul.bf16.gmra.mxu0 %v739
    %v2419 = vpop.f32.mrf.mxu0
    %v2420 = vadd.f32 %v407, %v2419
    %v2421 = vpop.f32.mrf.mxu0
    %v2422 = vadd.f32 %v412, %v2421
    %2423 = vmatmul.bf16.gmra.mxu0 %v742
    %v2424 = vpop.f32.mrf.mxu0
    %v2425 = vadd.f32 %v417, %v2424
    %v2426 = vpop.f32.mrf.mxu0
    %v2427 = vadd.f32 %v422, %v2426
    %2428 = vmatmul.bf16.gmra.mxu0 %v745
    %v2429 = vpop.f32.mrf.mxu0
    %v2430 = vadd.f32 %v427, %v2429
    %v2431 = vpop.f32.mrf.mxu0
    %v2432 = vadd.f32 %v432, %v2431
    %2433 = vmatmul.bf16.gmra.mxu0 %v748
    %v2434 = vpop.f32.mrf.mxu0
    %v2435 = vadd.f32 %v437, %v2434
    %v2436 = vpop.f32.mrf.mxu0
    %v2437 = vadd.f32 %v442, %v2436
    %2438 = vmatmul.bf16.gmra.mxu0 %v751
    %v2439 = vpop.f32.mrf.mxu0
    %v2440 = vadd.f32 %v447, %v2439
    %v2441 = vpop.f32.mrf.mxu0
    %v2442 = vadd.f32 %v452, %v2441
    %2443 = vmatmul.bf16.gmra.mxu0 %v754
    %v2444 = vpop.f32.mrf.mxu0
    %v2445 = vadd.f32 %v457, %v2444
    %v2446 = vpop.f32.mrf.mxu0
    %v2447 = vadd.f32 %v462, %v2446
    %2448 = vmatmul.bf16.gmra.mxu0 %v757
    %v2449 = vpop.f32.mrf.mxu0
    %v2450 = vadd.f32 %v467, %v2449
    %v2451 = vpop.f32.mrf.mxu0
    %v2452 = vadd.f32 %v472, %v2451
    %2453 = vmatmul.bf16.gmra.mxu0 %v760
    %v2454 = vpop.f32.mrf.mxu0
    %v2455 = vadd.f32 %v477, %v2454
    %v2456 = vpop.f32.mrf.mxu0
    %v2457 = vadd.f32 %v482, %v2456
    %2458 = vmatmul.bf16.gmra.mxu0 %v763
    %v2459 = vpop.f32.mrf.mxu0
    %v2460 = vadd.f32 %v487, %v2459
    %v2461 = vpop.f32.mrf.mxu0
    %v2462 = vadd.f32 %v492, %v2461
    %2463 = vmatmul.bf16.gmra.mxu0 %v766
    %v2464 = vpop.f32.mrf.mxu0
    %v2465 = vadd.f32 %v497, %v2464
    %v2466 = vpop.f32.mrf.mxu0
    %v2467 = vadd.f32 %v502, %v2466
    %2468 = vmatmul.bf16.gmra.mxu0 %v769
    %v2469 = vpop.f32.mrf.mxu0
    %v2470 = vadd.f32 %v507, %v2469
    %v2471 = vpop.f32.mrf.mxu0
    %v2472 = vadd.f32 %v512, %v2471
    %2473 = vdwg.mxu0
    %2474 = vmatpush.bf16.msra.mxu0 0
    %2475 = vmatpush.bf16.msra.mxu0 0
    %2476 = vmatpush.bf16.msra.mxu0 0
    %2477 = vmatpush.bf16.msra.mxu0 0
    %2478 = vmatpush.bf16.msra.mxu0 0
    %2479 = vmatpush.bf16.msra.mxu0 0
    %2480 = vmatpush.bf16.msra.mxu0 0
    %2481 = vmatpush.bf16.msra.mxu0 %v2303
    %2482 = vmatmul.bf16.gmra.mxu0 %v676
    %v2483 = vpop.f32.mrf.mxu0
    %v2484 = vadd.f32 %v197, %v2483
    %v2485 = vpop.f32.mrf.mxu0
    %v2486 = vadd.f32 %v202, %v2485
    %2487 = vmatmul.bf16.gmra.mxu0 %v679
    %v2488 = vpop.f32.mrf.mxu0
    %v2489 = vadd.f32 %v207, %v2488
    %v2490 = vpop.f32.mrf.mxu0
    %v2491 = vadd.f32 %v212, %v2490
    %2492 = vmatmul.bf16.gmra.mxu0 %v682
    %v2493 = vpop.f32.mrf.mxu0
    %v2494 = vadd.f32 %v217, %v2493
    %v2495 = vpop.f32.mrf.mxu0
    %v2496 = vadd.f32 %v222, %v2495
    %2497 = vmatmul.bf16.gmra.mxu0 %v685
    %v2498 = vpop.f32.mrf.mxu0
    %v2499 = vadd.f32 %v227, %v2498
    %v2500 = vpop.f32.mrf.mxu0
    %v2501 = vadd.f32 %v232, %v2500
    %2502 = vmatmul.bf16.gmra.mxu0 %v688
    %v2503 = vpop.f32.mrf.mxu0
    %v2504 = vadd.f32 %v237, %v2503
    %v2505 = vpop.f32.mrf.mxu0
    %v2506 = vadd.f32 %v242, %v2505
    %2507 = vmatmul.bf16.gmra.mxu0 %v691
    %v2508 = vpop.f32.mrf.mxu0
    %v2509 = vadd.f32 %v247, %v2508
    %v2510 = vpop.f32.mrf.mxu0
    %v2511 = vadd.f32 %v252, %v2510
    %2512 = vmatmul.bf16.gmra.mxu0 %v694
    %v2513 = vpop.f32.mrf.mxu0
    %v2514 = vadd.f32 %v257, %v2513
    %v2515 = vpop.f32.mrf.mxu0
    %v2516 = vadd.f32 %v262, %v2515
    %2517 = vmatmul.bf16.gmra.mxu0 %v697
    %v2518 = vpop.f32.mrf.mxu0
    %v2519 = vadd.f32 %v267, %v2518
    %v2520 = vpop.f32.mrf.mxu0
    %v2521 = vadd.f32 %v272, %v2520
    %2522 = vmatmul.bf16.gmra.mxu0 %v700
    %v2523 = vpop.f32.mrf.mxu0
    %v2524 = vadd.f32 %v277, %v2523
    %v2525 = vpop.f32.mrf.mxu0
    %v2526 = vadd.f32 %v282, %v2525
    %2527 = vmatmul.bf16.gmra.mxu0 %v703
    %v2528 = vpop.f32.mrf.mxu0
    %v2529 = vadd.f32 %v287, %v2528
    %v2530 = vpop.f32.mrf.mxu0
    %v2531 = vadd.f32 %v292, %v2530
    %2532 = vmatmul.bf16.gmra.mxu0 %v706
    %v2533 = vpop.f32.mrf.mxu0
    %v2534 = vadd.f32 %v297, %v2533
    %v2535 = vpop.f32.mrf.mxu0
    %v2536 = vadd.f32 %v302, %v2535
    %2537 = vmatmul.bf16.gmra.mxu0 %v709
    %v2538 = vpop.f32.mrf.mxu0
    %v2539 = vadd.f32 %v307, %v2538
    %v2540 = vpop.f32.mrf.mxu0
    %v2541 = vadd.f32 %v312, %v2540
    %2542 = vmatmul.bf16.gmra.mxu0 %v712
    %v2543 = vpop.f32.mrf.mxu0
    %v2544 = vadd.f32 %v317, %v2543
    %v2545 = vpop.f32.mrf.mxu0
    %v2546 = vadd.f32 %v322, %v2545
    %2547 = vmatmul.bf16.gmra.mxu0 %v715
    %v2548 = vpop.f32.mrf.mxu0
    %v2549 = vadd.f32 %v327, %v2548
    %v2550 = vpop.f32.mrf.mxu0
    %v2551 = vadd.f32 %v332, %v2550
    %2552 = vmatmul.bf16.gmra.mxu0 %v718
    %v2553 = vpop.f32.mrf.mxu0
    %v2554 = vadd.f32 %v337, %v2553
    %v2555 = vpop.f32.mrf.mxu0
    %v2556 = vadd.f32 %v342, %v2555
    %2557 = vmatmul.bf16.gmra.mxu0 %v721
    %v2558 = vpop.f32.mrf.mxu0
    %v2559 = vadd.f32 %v347, %v2558
    %v2560 = vpop.f32.mrf.mxu0
    %v2561 = vadd.f32 %v352, %v2560
    %2562 = vmatmul.bf16.gmra.mxu0 %v724
    %v2563 = vpop.f32.mrf.mxu0
    %v2564 = vadd.f32 %v357, %v2563
    %v2565 = vpop.f32.mrf.mxu0
    %v2566 = vadd.f32 %v362, %v2565
    %2567 = vmatmul.bf16.gmra.mxu0 %v727
    %v2568 = vpop.f32.mrf.mxu0
    %v2569 = vadd.f32 %v367, %v2568
    %v2570 = vpop.f32.mrf.mxu0
    %v2571 = vadd.f32 %v372, %v2570
    %2572 = vmatmul.bf16.gmra.mxu0 %v730
    %v2573 = vpop.f32.mrf.mxu0
    %v2574 = vadd.f32 %v377, %v2573
    %v2575 = vpop.f32.mrf.mxu0
    %v2576 = vadd.f32 %v382, %v2575
    %2577 = vmatmul.bf16.gmra.mxu0 %v733
    %v2578 = vpop.f32.mrf.mxu0
    %v2579 = vadd.f32 %v387, %v2578
    %v2580 = vpop.f32.mrf.mxu0
    %v2581 = vadd.f32 %v392, %v2580
    %2582 = vmatmul.bf16.gmra.mxu0 %v736
    %v2583 = vpop.f32.mrf.mxu0
    %v2584 = vadd.f32 %v397, %v2583
    %v2585 = vpop.f32.mrf.mxu0
    %v2586 = vadd.f32 %v402, %v2585
    %2587 = vmatmul.bf16.gmra.mxu0 %v739
    %v2588 = vpop.f32.mrf.mxu0
    %v2589 = vadd.f32 %v407, %v2588
    %v2590 = vpop.f32.mrf.mxu0
    %v2591 = vadd.f32 %v412, %v2590
    %2592 = vmatmul.bf16.gmra.mxu0 %v742
    %v2593 = vpop.f32.mrf.mxu0
    %v2594 = vadd.f32 %v417, %v2593
    %v2595 = vpop.f32.mrf.mxu0
    %v2596 = vadd.f32 %v422, %v2595
    %2597 = vmatmul.bf16.gmra.mxu0 %v745
    %v2598 = vpop.f32.mrf.mxu0
    %v2599 = vadd.f32 %v427, %v2598
    %v2600 = vpop.f32.mrf.mxu0
    %v2601 = vadd.f32 %v432, %v2600
    %2602 = vmatmul.bf16.gmra.mxu0 %v748
    %v2603 = vpop.f32.mrf.mxu0
    %v2604 = vadd.f32 %v437, %v2603
    %v2605 = vpop.f32.mrf.mxu0
    %v2606 = vadd.f32 %v442, %v2605
    %2607 = vmatmul.bf16.gmra.mxu0 %v751
    %v2608 = vpop.f32.mrf.mxu0
    %v2609 = vadd.f32 %v447, %v2608
    %v2610 = vpop.f32.mrf.mxu0
    %v2611 = vadd.f32 %v452, %v2610
    %2612 = vmatmul.bf16.gmra.mxu0 %v754
    %v2613 = vpop.f32.mrf.mxu0
    %v2614 = vadd.f32 %v457, %v2613
    %v2615 = vpop.f32.mrf.mxu0
    %v2616 = vadd.f32 %v462, %v2615
    %2617 = vmatmul.bf16.gmra.mxu0 %v757
    %v2618 = vpop.f32.mrf.mxu0
    %v2619 = vadd.f32 %v467, %v2618
    %v2620 = vpop.f32.mrf.mxu0
    %v2621 = vadd.f32 %v472, %v2620
    %2622 = vmatmul.bf16.gmra.mxu0 %v760
    %v2623 = vpop.f32.mrf.mxu0
    %v2624 = vadd.f32 %v477, %v2623
    %v2625 = vpop.f32.mrf.mxu0
    %v2626 = vadd.f32 %v482, %v2625
    %2627 = vmatmul.bf16.gmra.mxu0 %v763
    %v2628 = vpop.f32.mrf.mxu0
    %v2629 = vadd.f32 %v487, %v2628
    %v2630 = vpop.f32.mrf.mxu0
    %v2631 = vadd.f32 %v492, %v2630
    %2632 = vmatmul.bf16.gmra.mxu0 %v766
    %v2633 = vpop.f32.mrf.mxu0
    %v2634 = vadd.f32 %v497, %v2633
    %v2635 = vpop.f32.mrf.mxu0
    %v2636 = vadd.f32 %v502, %v2635
    %2637 = vmatmul.bf16.gmra.mxu0 %v769
    %v2638 = vpop.f32.mrf.mxu0
    %v2639 = vadd.f32 %v507, %v2638
    %v2640 = vpop.f32.mrf.mxu0
    %v2641 = vadd.f32 %v512, %v2640
    %2642 = vdwg.mxu0
    %v2643 = vpack.c.bf16 %v2317, %v2315
    %v2644 = vpack.c.bf16 %v2486, %v2484
    %v2645 = vpack.c.bf16 %v2322, %v2320
    %v2646 = vpack.c.bf16 %v2491, %v2489
    %v2647 = vpack.c.bf16 %v2327, %v2325
    %v2648 = vpack.c.bf16 %v2496, %v2494
    %v2649 = vpack.c.bf16 %v2332, %v2330
    %v2650 = vpack.c.bf16 %v2501, %v2499
    %v2651 = vpack.c.bf16 %v2337, %v2335
    %v2652 = vpack.c.bf16 %v2506, %v2504
    %v2653 = vpack.c.bf16 %v2342, %v2340
    %v2654 = vpack.c.bf16 %v2511, %v2509
    %v2655 = vpack.c.bf16 %v2347, %v2345
    %v2656 = vpack.c.bf16 %v2516, %v2514
    %v2657 = vpack.c.bf16 %v2352, %v2350
    %v2658 = vpack.c.bf16 %v2521, %v2519
    %v2659 = vpack.c.bf16 %v2357, %v2355
    %v2660 = vpack.c.bf16 %v2526, %v2524
    %v2661 = vpack.c.bf16 %v2362, %v2360
    %v2662 = vpack.c.bf16 %v2531, %v2529
    %v2663 = vpack.c.bf16 %v2367, %v2365
    %v2664 = vpack.c.bf16 %v2536, %v2534
    %v2665 = vpack.c.bf16 %v2372, %v2370
    %v2666 = vpack.c.bf16 %v2541, %v2539
    %v2667 = vpack.c.bf16 %v2377, %v2375
    %v2668 = vpack.c.bf16 %v2546, %v2544
    %v2669 = vpack.c.bf16 %v2382, %v2380
    %v2670 = vpack.c.bf16 %v2551, %v2549
    %v2671 = vpack.c.bf16 %v2387, %v2385
    %v2672 = vpack.c.bf16 %v2556, %v2554
    %v2673 = vpack.c.bf16 %v2392, %v2390
    %v2674 = vpack.c.bf16 %v2561, %v2559
    %v2675 = vpack.c.bf16 %v2397, %v2395
    %v2676 = vpack.c.bf16 %v2566, %v2564
    %v2677 = vpack.c.bf16 %v2402, %v2400
    %v2678 = vpack.c.bf16 %v2571, %v2569
    %v2679 = vpack.c.bf16 %v2407, %v2405
    %v2680 = vpack.c.bf16 %v2576, %v2574
    %v2681 = vpack.c.bf16 %v2412, %v2410
    %v2682 = vpack.c.bf16 %v2581, %v2579
    %v2683 = vpack.c.bf16 %v2417, %v2415
    %v2684 = vpack.c.bf16 %v2586, %v2584
    %v2685 = vpack.c.bf16 %v2422, %v2420
    %v2686 = vpack.c.bf16 %v2591, %v2589
    %v2687 = vpack.c.bf16 %v2427, %v2425
    %v2688 = vpack.c.bf16 %v2596, %v2594
    %v2689 = vpack.c.bf16 %v2432, %v2430
    %v2690 = vpack.c.bf16 %v2601, %v2599
    %v2691 = vpack.c.bf16 %v2437, %v2435
    %v2692 = vpack.c.bf16 %v2606, %v2604
    %v2693 = vpack.c.bf16 %v2442, %v2440
    %v2694 = vpack.c.bf16 %v2611, %v2609
    %v2695 = vpack.c.bf16 %v2447, %v2445
    %v2696 = vpack.c.bf16 %v2616, %v2614
    %v2697 = vpack.c.bf16 %v2452, %v2450
    %v2698 = vpack.c.bf16 %v2621, %v2619
    %v2699 = vpack.c.bf16 %v2457, %v2455
    %v2700 = vpack.c.bf16 %v2626, %v2624
    %v2701 = vpack.c.bf16 %v2462, %v2460
    %v2702 = vpack.c.bf16 %v2631, %v2629
    %v2703 = vpack.c.bf16 %v2467, %v2465
    %v2704 = vpack.c.bf16 %v2636, %v2634
    %v2705 = vpack.c.bf16 %v2472, %v2470
    %v2706 = vpack.c.bf16 %v2641, %v2639
    %2707 = vmatpush.bf16.msra.mxu0 %v2657
    %2708 = vmatpush.bf16.msra.mxu0 %v2655
    %2709 = vmatpush.bf16.msra.mxu0 %v2653
    %2710 = vmatpush.bf16.msra.mxu0 %v2651
    %2711 = vmatpush.bf16.msra.mxu0 %v2649
    %2712 = vmatpush.bf16.msra.mxu0 %v2647
    %2713 = vmatpush.bf16.msra.mxu0 %v2645
    %2714 = vmatpush.bf16.msra.mxu0 %v2643
    %2715 = vmatmul.bf16.gmra.mxu0 %v1191
    %v2716 = vpop.f32.mrf.mxu0
    %v2717 = vadd.f32 %v1183, %v2716
    %v2718 = vpop.f32.mrf.mxu0
    %2719 = vdwg.mxu0
    %2720 = vmatpush.bf16.msra.mxu0 %v2673
    %2721 = vmatpush.bf16.msra.mxu0 %v2671
    %2722 = vmatpush.bf16.msra.mxu0 %v2669
    %2723 = vmatpush.bf16.msra.mxu0 %v2667
    %2724 = vmatpush.bf16.msra.mxu0 %v2665
    %2725 = vmatpush.bf16.msra.mxu0 %v2663
    %2726 = vmatpush.bf16.msra.mxu0 %v2661
    %2727 = vmatpush.bf16.msra.mxu0 %v2659
    %2728 = vmatmul.bf16.gmra.mxu0 %v1192
    %v2729 = vpop.f32.mrf.mxu0
    %v2730 = vadd.f32 %v2717, %v2729
    %v2731 = vpop.f32.mrf.mxu0
    %2732 = vdwg.mxu0
    %2733 = vmatpush.bf16.msra.mxu0 %v2689
    %2734 = vmatpush.bf16.msra.mxu0 %v2687
    %2735 = vmatpush.bf16.msra.mxu0 %v2685
    %2736 = vmatpush.bf16.msra.mxu0 %v2683
    %2737 = vmatpush.bf16.msra.mxu0 %v2681
    %2738 = vmatpush.bf16.msra.mxu0 %v2679
    %2739 = vmatpush.bf16.msra.mxu0 %v2677
    %2740 = vmatpush.bf16.msra.mxu0 %v2675
    %2741 = vmatmul.bf16.gmra.mxu0 %v1193
    %v2742 = vpop.f32.mrf.mxu0
    %v2743 = vadd.f32 %v2730, %v2742
    %v2744 = vpop.f32.mrf.mxu0
    %2745 = vdwg.mxu0
    %2746 = vmatpush.bf16.msra.mxu0 %v2705
    %2747 = vmatpush.bf16.msra.mxu0 %v2703
    %2748 = vmatpush.bf16.msra.mxu0 %v2701
    %2749 = vmatpush.bf16.msra.mxu0 %v2699
    %2750 = vmatpush.bf16.msra.mxu0 %v2697
    %2751 = vmatpush.bf16.msra.mxu0 %v2695
    %2752 = vmatpush.bf16.msra.mxu0 %v2693
    %2753 = vmatpush.bf16.msra.mxu0 %v2691
    %2754 = vmatmul.bf16.gmra.mxu0 %v1194
    %v2755 = vpop.f32.mrf.mxu0
    %v2756 = vadd.f32 %v2743, %v2755
    %v2757 = vpop.f32.mrf.mxu0
    %2758 = vdwg.mxu0
    %2759 = vmatpush.bf16.msra.mxu0 %v2658
    %2760 = vmatpush.bf16.msra.mxu0 %v2656
    %2761 = vmatpush.bf16.msra.mxu0 %v2654
    %2762 = vmatpush.bf16.msra.mxu0 %v2652
    %2763 = vmatpush.bf16.msra.mxu0 %v2650
    %2764 = vmatpush.bf16.msra.mxu0 %v2648
    %2765 = vmatpush.bf16.msra.mxu0 %v2646
    %2766 = vmatpush.bf16.msra.mxu0 %v2644
    %2767 = vmatmul.bf16.gmra.mxu0 %v1191
    %v2768 = vpop.f32.mrf.mxu0
    %v2769 = vadd.f32 %v1183, %v2768
    %v2770 = vpop.f32.mrf.mxu0
    %2771 = vdwg.mxu0
    %2772 = vmatpush.bf16.msra.mxu0 %v2674
    %2773 = vmatpush.bf16.msra.mxu0 %v2672
    %2774 = vmatpush.bf16.msra.mxu0 %v2670
    %2775 = vmatpush.bf16.msra.mxu0 %v2668
    %2776 = vmatpush.bf16.msra.mxu0 %v2666
    %2777 = vmatpush.bf16.msra.mxu0 %v2664
    %2778 = vmatpush.bf16.msra.mxu0 %v2662
    %2779 = vmatpush.bf16.msra.mxu0 %v2660
    %2780 = vmatmul.bf16.gmra.mxu0 %v1192
    %v2781 = vpop.f32.mrf.mxu0
    %v2782 = vadd.f32 %v2769, %v2781
    %v2783 = vpop.f32.mrf.mxu0
    %2784 = vdwg.mxu0
    %2785 = vmatpush.bf16.msra.mxu0 %v2690
    %2786 = vmatpush.bf16.msra.mxu0 %v2688
    %2787 = vmatpush.bf16.msra.mxu0 %v2686
    %2788 = vmatpush.bf16.msra.mxu0 %v2684
    %2789 = vmatpush.bf16.msra.mxu0 %v2682
    %2790 = vmatpush.bf16.msra.mxu0 %v2680
    %2791 = vmatpush.bf16.msra.mxu0 %v2678
    %2792 = vmatpush.bf16.msra.mxu0 %v2676
    %2793 = vmatmul.bf16.gmra.mxu0 %v1193
    %v2794 = vpop.f32.mrf.mxu0
    %v2795 = vadd.f32 %v2782, %v2794
    %v2796 = vpop.f32.mrf.mxu0
    %2797 = vdwg.mxu0
    %2798 = vmatpush.bf16.msra.mxu0 %v2706
    %2799 = vmatpush.bf16.msra.mxu0 %v2704
    %2800 = vmatpush.bf16.msra.mxu0 %v2702
    %2801 = vmatpush.bf16.msra.mxu0 %v2700
    %2802 = vmatpush.bf16.msra.mxu0 %v2698
    %2803 = vmatpush.bf16.msra.mxu0 %v2696
    %2804 = vmatpush.bf16.msra.mxu0 %v2694
    %2805 = vmatpush.bf16.msra.mxu0 %v2692
    %2806 = vmatmul.bf16.gmra.mxu0 %v1194
    %v2807 = vpop.f32.mrf.mxu0
    %v2808 = vadd.f32 %v2795, %v2807
    %v2809 = vpop.f32.mrf.mxu0
    %2810 = vdwg.mxu0
    %v2811 = vpack.c.bf16 %v2756, %v2756
    %v2812 = vpack.c.bf16 %v2808, %v2808
    %v2814 = vsel %vm1722, %v2811, 0
    %v2817 = vsel %vm1722, %v2812, 0
    %2819 = vmatpush.bf16.msra.mxu0 0
    %2820 = vmatpush.bf16.msra.mxu0 0
    %2821 = vmatpush.bf16.msra.mxu0 0
    %2822 = vmatpush.bf16.msra.mxu0 0
    %2823 = vmatpush.bf16.msra.mxu0 0
    %2824 = vmatpush.bf16.msra.mxu0 0
    %2825 = vmatpush.bf16.msra.mxu0 0
    %2826 = vmatpush.bf16.msra.mxu0 %v2814
    %2827 = vmatmul.bf16.gmra.mxu0 %v1627
    %v2828 = vpop.f32.mrf.mxu0
    %v2829 = vadd.f32 %v1307, %v2828
    %v2830 = vpop.f32.mrf.mxu0
    %v2831 = vadd.f32 %v1311, %v2830
    %2832 = vmatmul.bf16.gmra.mxu0 %v1630
    %v2833 = vpop.f32.mrf.mxu0
    %v2834 = vadd.f32 %v1315, %v2833
    %v2835 = vpop.f32.mrf.mxu0
    %v2836 = vadd.f32 %v1319, %v2835
    %2837 = vmatmul.bf16.gmra.mxu0 %v1633
    %v2838 = vpop.f32.mrf.mxu0
    %v2839 = vadd.f32 %v1323, %v2838
    %v2840 = vpop.f32.mrf.mxu0
    %v2841 = vadd.f32 %v1327, %v2840
    %2842 = vmatmul.bf16.gmra.mxu0 %v1636
    %v2843 = vpop.f32.mrf.mxu0
    %v2844 = vadd.f32 %v1331, %v2843
    %v2845 = vpop.f32.mrf.mxu0
    %v2846 = vadd.f32 %v1335, %v2845
    %2847 = vmatmul.bf16.gmra.mxu0 %v1639
    %v2848 = vpop.f32.mrf.mxu0
    %v2849 = vadd.f32 %v1339, %v2848
    %v2850 = vpop.f32.mrf.mxu0
    %v2851 = vadd.f32 %v1343, %v2850
    %2852 = vmatmul.bf16.gmra.mxu0 %v1642
    %v2853 = vpop.f32.mrf.mxu0
    %v2854 = vadd.f32 %v1347, %v2853
    %v2855 = vpop.f32.mrf.mxu0
    %v2856 = vadd.f32 %v1351, %v2855
    %2857 = vmatmul.bf16.gmra.mxu0 %v1645
    %v2858 = vpop.f32.mrf.mxu0
    %v2859 = vadd.f32 %v1355, %v2858
    %v2860 = vpop.f32.mrf.mxu0
    %v2861 = vadd.f32 %v1359, %v2860
    %2862 = vmatmul.bf16.gmra.mxu0 %v1648
    %v2863 = vpop.f32.mrf.mxu0
    %v2864 = vadd.f32 %v1363, %v2863
    %v2865 = vpop.f32.mrf.mxu0
    %v2866 = vadd.f32 %v1367, %v2865
    %2867 = vmatmul.bf16.gmra.mxu0 %v1651
    %v2868 = vpop.f32.mrf.mxu0
    %v2869 = vadd.f32 %v1371, %v2868
    %v2870 = vpop.f32.mrf.mxu0
    %v2871 = vadd.f32 %v1375, %v2870
    %2872 = vmatmul.bf16.gmra.mxu0 %v1654
    %v2873 = vpop.f32.mrf.mxu0
    %v2874 = vadd.f32 %v1379, %v2873
    %v2875 = vpop.f32.mrf.mxu0
    %v2876 = vadd.f32 %v1383, %v2875
    %2877 = vmatmul.bf16.gmra.mxu0 %v1657
    %v2878 = vpop.f32.mrf.mxu0
    %v2879 = vadd.f32 %v1387, %v2878
    %v2880 = vpop.f32.mrf.mxu0
    %v2881 = vadd.f32 %v1391, %v2880
    %2882 = vmatmul.bf16.gmra.mxu0 %v1660
    %v2883 = vpop.f32.mrf.mxu0
    %v2884 = vadd.f32 %v1395, %v2883
    %v2885 = vpop.f32.mrf.mxu0
    %v2886 = vadd.f32 %v1399, %v2885
    %2887 = vmatmul.bf16.gmra.mxu0 %v1663
    %v2888 = vpop.f32.mrf.mxu0
    %v2889 = vadd.f32 %v1403, %v2888
    %v2890 = vpop.f32.mrf.mxu0
    %v2891 = vadd.f32 %v1407, %v2890
    %2892 = vmatmul.bf16.gmra.mxu0 %v1666
    %v2893 = vpop.f32.mrf.mxu0
    %v2894 = vadd.f32 %v1411, %v2893
    %v2895 = vpop.f32.mrf.mxu0
    %v2896 = vadd.f32 %v1415, %v2895
    %2897 = vmatmul.bf16.gmra.mxu0 %v1669
    %v2898 = vpop.f32.mrf.mxu0
    %v2899 = vadd.f32 %v1419, %v2898
    %v2900 = vpop.f32.mrf.mxu0
    %v2901 = vadd.f32 %v1423, %v2900
    %2902 = vmatmul.bf16.gmra.mxu0 %v1672
    %v2903 = vpop.f32.mrf.mxu0
    %v2904 = vadd.f32 %v1427, %v2903
    %v2905 = vpop.f32.mrf.mxu0
    %v2906 = vadd.f32 %v1431, %v2905
    %2907 = vmatmul.bf16.gmra.mxu0 %v1675
    %v2908 = vpop.f32.mrf.mxu0
    %v2909 = vadd.f32 %v1435, %v2908
    %v2910 = vpop.f32.mrf.mxu0
    %v2911 = vadd.f32 %v1439, %v2910
    %2912 = vmatmul.bf16.gmra.mxu0 %v1678
    %v2913 = vpop.f32.mrf.mxu0
    %v2914 = vadd.f32 %v1443, %v2913
    %v2915 = vpop.f32.mrf.mxu0
    %v2916 = vadd.f32 %v1447, %v2915
    %2917 = vmatmul.bf16.gmra.mxu0 %v1681
    %v2918 = vpop.f32.mrf.mxu0
    %v2919 = vadd.f32 %v1451, %v2918
    %v2920 = vpop.f32.mrf.mxu0
    %v2921 = vadd.f32 %v1455, %v2920
    %2922 = vmatmul.bf16.gmra.mxu0 %v1684
    %v2923 = vpop.f32.mrf.mxu0
    %v2924 = vadd.f32 %v1459, %v2923
    %v2925 = vpop.f32.mrf.mxu0
    %v2926 = vadd.f32 %v1463, %v2925
    %2927 = vmatmul.bf16.gmra.mxu0 %v1687
    %v2928 = vpop.f32.mrf.mxu0
    %v2929 = vadd.f32 %v1467, %v2928
    %v2930 = vpop.f32.mrf.mxu0
    %v2931 = vadd.f32 %v1471, %v2930
    %2932 = vmatmul.bf16.gmra.mxu0 %v1690
    %v2933 = vpop.f32.mrf.mxu0
    %v2934 = vadd.f32 %v1475, %v2933
    %v2935 = vpop.f32.mrf.mxu0
    %v2936 = vadd.f32 %v1479, %v2935
    %2937 = vmatmul.bf16.gmra.mxu0 %v1693
    %v2938 = vpop.f32.mrf.mxu0
    %v2939 = vadd.f32 %v1483, %v2938
    %v2940 = vpop.f32.mrf.mxu0
    %v2941 = vadd.f32 %v1487, %v2940
    %2942 = vmatmul.bf16.gmra.mxu0 %v1696
    %v2943 = vpop.f32.mrf.mxu0
    %v2944 = vadd.f32 %v1491, %v2943
    %v2945 = vpop.f32.mrf.mxu0
    %v2946 = vadd.f32 %v1495, %v2945
    %2947 = vmatmul.bf16.gmra.mxu0 %v1699
    %v2948 = vpop.f32.mrf.mxu0
    %v2949 = vadd.f32 %v1499, %v2948
    %v2950 = vpop.f32.mrf.mxu0
    %v2951 = vadd.f32 %v1503, %v2950
    %2952 = vmatmul.bf16.gmra.mxu0 %v1702
    %v2953 = vpop.f32.mrf.mxu0
    %v2954 = vadd.f32 %v1507, %v2953
    %v2955 = vpop.f32.mrf.mxu0
    %v2956 = vadd.f32 %v1511, %v2955
    %2957 = vmatmul.bf16.gmra.mxu0 %v1705
    %v2958 = vpop.f32.mrf.mxu0
    %v2959 = vadd.f32 %v1515, %v2958
    %v2960 = vpop.f32.mrf.mxu0
    %v2961 = vadd.f32 %v1519, %v2960
    %2962 = vmatmul.bf16.gmra.mxu0 %v1708
    %v2963 = vpop.f32.mrf.mxu0
    %v2964 = vadd.f32 %v1523, %v2963
    %v2965 = vpop.f32.mrf.mxu0
    %v2966 = vadd.f32 %v1527, %v2965
    %2967 = vmatmul.bf16.gmra.mxu0 %v1711
    %v2968 = vpop.f32.mrf.mxu0
    %v2969 = vadd.f32 %v1531, %v2968
    %v2970 = vpop.f32.mrf.mxu0
    %v2971 = vadd.f32 %v1535, %v2970
    %2972 = vmatmul.bf16.gmra.mxu0 %v1714
    %v2973 = vpop.f32.mrf.mxu0
    %v2974 = vadd.f32 %v1539, %v2973
    %v2975 = vpop.f32.mrf.mxu0
    %v2976 = vadd.f32 %v1543, %v2975
    %2977 = vmatmul.bf16.gmra.mxu0 %v1717
    %v2978 = vpop.f32.mrf.mxu0
    %v2979 = vadd.f32 %v1547, %v2978
    %v2980 = vpop.f32.mrf.mxu0
    %v2981 = vadd.f32 %v1551, %v2980
    %2982 = vmatmul.bf16.gmra.mxu0 %v1720
    %v2983 = vpop.f32.mrf.mxu0
    %v2984 = vadd.f32 %v1555, %v2983
    %v2985 = vpop.f32.mrf.mxu0
    %v2986 = vadd.f32 %v1559, %v2985
    %2987 = vdwg.mxu0
    %2988 = vmatpush.bf16.msra.mxu0 0
    %2989 = vmatpush.bf16.msra.mxu0 0
    %2990 = vmatpush.bf16.msra.mxu0 0
    %2991 = vmatpush.bf16.msra.mxu0 0
    %2992 = vmatpush.bf16.msra.mxu0 0
    %2993 = vmatpush.bf16.msra.mxu0 0
    %2994 = vmatpush.bf16.msra.mxu0 0
    %2995 = vmatpush.bf16.msra.mxu0 %v2817
    %2996 = vmatmul.bf16.gmra.mxu0 %v1627
    %v2997 = vpop.f32.mrf.mxu0
    %v2998 = vadd.f32 %v1307, %v2997
    %v2999 = vpop.f32.mrf.mxu0
    %v3000 = vadd.f32 %v1311, %v2999
    %3001 = vmatmul.bf16.gmra.mxu0 %v1630
    %v3002 = vpop.f32.mrf.mxu0
    %v3003 = vadd.f32 %v1315, %v3002
    %v3004 = vpop.f32.mrf.mxu0
    %v3005 = vadd.f32 %v1319, %v3004
    %3006 = vmatmul.bf16.gmra.mxu0 %v1633
    %v3007 = vpop.f32.mrf.mxu0
    %v3008 = vadd.f32 %v1323, %v3007
    %v3009 = vpop.f32.mrf.mxu0
    %v3010 = vadd.f32 %v1327, %v3009
    %3011 = vmatmul.bf16.gmra.mxu0 %v1636
    %v3012 = vpop.f32.mrf.mxu0
    %v3013 = vadd.f32 %v1331, %v3012
    %v3014 = vpop.f32.mrf.mxu0
    %v3015 = vadd.f32 %v1335, %v3014
    %3016 = vmatmul.bf16.gmra.mxu0 %v1639
    %v3017 = vpop.f32.mrf.mxu0
    %v3018 = vadd.f32 %v1339, %v3017
    %v3019 = vpop.f32.mrf.mxu0
    %v3020 = vadd.f32 %v1343, %v3019
    %3021 = vmatmul.bf16.gmra.mxu0 %v1642
    %v3022 = vpop.f32.mrf.mxu0
    %v3023 = vadd.f32 %v1347, %v3022
    %v3024 = vpop.f32.mrf.mxu0
    %v3025 = vadd.f32 %v1351, %v3024
    %3026 = vmatmul.bf16.gmra.mxu0 %v1645
    %v3027 = vpop.f32.mrf.mxu0
    %v3028 = vadd.f32 %v1355, %v3027
    %v3029 = vpop.f32.mrf.mxu0
    %v3030 = vadd.f32 %v1359, %v3029
    %3031 = vmatmul.bf16.gmra.mxu0 %v1648
    %v3032 = vpop.f32.mrf.mxu0
    %v3033 = vadd.f32 %v1363, %v3032
    %v3034 = vpop.f32.mrf.mxu0
    %v3035 = vadd.f32 %v1367, %v3034
    %3036 = vmatmul.bf16.gmra.mxu0 %v1651
    %v3037 = vpop.f32.mrf.mxu0
    %v3038 = vadd.f32 %v1371, %v3037
    %v3039 = vpop.f32.mrf.mxu0
    %v3040 = vadd.f32 %v1375, %v3039
    %3041 = vmatmul.bf16.gmra.mxu0 %v1654
    %v3042 = vpop.f32.mrf.mxu0
    %v3043 = vadd.f32 %v1379, %v3042
    %v3044 = vpop.f32.mrf.mxu0
    %v3045 = vadd.f32 %v1383, %v3044
    %3046 = vmatmul.bf16.gmra.mxu0 %v1657
    %v3047 = vpop.f32.mrf.mxu0
    %v3048 = vadd.f32 %v1387, %v3047
    %v3049 = vpop.f32.mrf.mxu0
    %v3050 = vadd.f32 %v1391, %v3049
    %3051 = vmatmul.bf16.gmra.mxu0 %v1660
    %v3052 = vpop.f32.mrf.mxu0
    %v3053 = vadd.f32 %v1395, %v3052
    %v3054 = vpop.f32.mrf.mxu0
    %v3055 = vadd.f32 %v1399, %v3054
    %3056 = vmatmul.bf16.gmra.mxu0 %v1663
    %v3057 = vpop.f32.mrf.mxu0
    %v3058 = vadd.f32 %v1403, %v3057
    %v3059 = vpop.f32.mrf.mxu0
    %v3060 = vadd.f32 %v1407, %v3059
    %3061 = vmatmul.bf16.gmra.mxu0 %v1666
    %v3062 = vpop.f32.mrf.mxu0
    %v3063 = vadd.f32 %v1411, %v3062
    %v3064 = vpop.f32.mrf.mxu0
    %v3065 = vadd.f32 %v1415, %v3064
    %3066 = vmatmul.bf16.gmra.mxu0 %v1669
    %v3067 = vpop.f32.mrf.mxu0
    %v3068 = vadd.f32 %v1419, %v3067
    %v3069 = vpop.f32.mrf.mxu0
    %v3070 = vadd.f32 %v1423, %v3069
    %3071 = vmatmul.bf16.gmra.mxu0 %v1672
    %v3072 = vpop.f32.mrf.mxu0
    %v3073 = vadd.f32 %v1427, %v3072
    %v3074 = vpop.f32.mrf.mxu0
    %v3075 = vadd.f32 %v1431, %v3074
    %3076 = vmatmul.bf16.gmra.mxu0 %v1675
    %v3077 = vpop.f32.mrf.mxu0
    %v3078 = vadd.f32 %v1435, %v3077
    %v3079 = vpop.f32.mrf.mxu0
    %v3080 = vadd.f32 %v1439, %v3079
    %3081 = vmatmul.bf16.gmra.mxu0 %v1678
    %v3082 = vpop.f32.mrf.mxu0
    %v3083 = vadd.f32 %v1443, %v3082
    %v3084 = vpop.f32.mrf.mxu0
    %v3085 = vadd.f32 %v1447, %v3084
    %3086 = vmatmul.bf16.gmra.mxu0 %v1681
    %v3087 = vpop.f32.mrf.mxu0
    %v3088 = vadd.f32 %v1451, %v3087
    %v3089 = vpop.f32.mrf.mxu0
    %v3090 = vadd.f32 %v1455, %v3089
    %3091 = vmatmul.bf16.gmra.mxu0 %v1684
    %v3092 = vpop.f32.mrf.mxu0
    %v3093 = vadd.f32 %v1459, %v3092
    %v3094 = vpop.f32.mrf.mxu0
    %v3095 = vadd.f32 %v1463, %v3094
    %3096 = vmatmul.bf16.gmra.mxu0 %v1687
    %v3097 = vpop.f32.mrf.mxu0
    %v3098 = vadd.f32 %v1467, %v3097
    %v3099 = vpop.f32.mrf.mxu0
    %v3100 = vadd.f32 %v1471, %v3099
    %3101 = vmatmul.bf16.gmra.mxu0 %v1690
    %v3102 = vpop.f32.mrf.mxu0
    %v3103 = vadd.f32 %v1475, %v3102
    %v3104 = vpop.f32.mrf.mxu0
    %v3105 = vadd.f32 %v1479, %v3104
    %3106 = vmatmul.bf16.gmra.mxu0 %v1693
    %v3107 = vpop.f32.mrf.mxu0
    %v3108 = vadd.f32 %v1483, %v3107
    %v3109 = vpop.f32.mrf.mxu0
    %v3110 = vadd.f32 %v1487, %v3109
    %3111 = vmatmul.bf16.gmra.mxu0 %v1696
    %v3112 = vpop.f32.mrf.mxu0
    %v3113 = vadd.f32 %v1491, %v3112
    %v3114 = vpop.f32.mrf.mxu0
    %v3115 = vadd.f32 %v1495, %v3114
    %3116 = vmatmul.bf16.gmra.mxu0 %v1699
    %v3117 = vpop.f32.mrf.mxu0
    %v3118 = vadd.f32 %v1499, %v3117
    %v3119 = vpop.f32.mrf.mxu0
    %v3120 = vadd.f32 %v1503, %v3119
    %3121 = vmatmul.bf16.gmra.mxu0 %v1702
    %v3122 = vpop.f32.mrf.mxu0
    %v3123 = vadd.f32 %v1507, %v3122
    %v3124 = vpop.f32.mrf.mxu0
    %v3125 = vadd.f32 %v1511, %v3124
    %3126 = vmatmul.bf16.gmra.mxu0 %v1705
    %v3127 = vpop.f32.mrf.mxu0
    %v3128 = vadd.f32 %v1515, %v3127
    %v3129 = vpop.f32.mrf.mxu0
    %v3130 = vadd.f32 %v1519, %v3129
    %3131 = vmatmul.bf16.gmra.mxu0 %v1708
    %v3132 = vpop.f32.mrf.mxu0
    %v3133 = vadd.f32 %v1523, %v3132
    %v3134 = vpop.f32.mrf.mxu0
    %v3135 = vadd.f32 %v1527, %v3134
    %3136 = vmatmul.bf16.gmra.mxu0 %v1711
    %v3137 = vpop.f32.mrf.mxu0
    %v3138 = vadd.f32 %v1531, %v3137
    %v3139 = vpop.f32.mrf.mxu0
    %v3140 = vadd.f32 %v1535, %v3139
    %3141 = vmatmul.bf16.gmra.mxu0 %v1714
    %v3142 = vpop.f32.mrf.mxu0
    %v3143 = vadd.f32 %v1539, %v3142
    %v3144 = vpop.f32.mrf.mxu0
    %v3145 = vadd.f32 %v1543, %v3144
    %3146 = vmatmul.bf16.gmra.mxu0 %v1717
    %v3147 = vpop.f32.mrf.mxu0
    %v3148 = vadd.f32 %v1547, %v3147
    %v3149 = vpop.f32.mrf.mxu0
    %v3150 = vadd.f32 %v1551, %v3149
    %3151 = vmatmul.bf16.gmra.mxu0 %v1720
    %v3152 = vpop.f32.mrf.mxu0
    %v3153 = vadd.f32 %v1555, %v3152
    %v3154 = vpop.f32.mrf.mxu0
    %v3155 = vadd.f32 %v1559, %v3154
    %3156 = vdwg.mxu0
    %v3157 = vpack.c.bf16 %v2831, %v2829
    %v3158 = vpack.c.bf16 %v3000, %v2998
    %v3159 = vpack.c.bf16 %v2836, %v2834
    %v3160 = vpack.c.bf16 %v3005, %v3003
    %v3161 = vpack.c.bf16 %v2841, %v2839
    %v3162 = vpack.c.bf16 %v3010, %v3008
    %v3163 = vpack.c.bf16 %v2846, %v2844
    %v3164 = vpack.c.bf16 %v3015, %v3013
    %v3165 = vpack.c.bf16 %v2851, %v2849
    %v3166 = vpack.c.bf16 %v3020, %v3018
    %v3167 = vpack.c.bf16 %v2856, %v2854
    %v3168 = vpack.c.bf16 %v3025, %v3023
    %v3169 = vpack.c.bf16 %v2861, %v2859
    %v3170 = vpack.c.bf16 %v3030, %v3028
    %v3171 = vpack.c.bf16 %v2866, %v2864
    %v3172 = vpack.c.bf16 %v3035, %v3033
    %v3173 = vpack.c.bf16 %v2871, %v2869
    %v3174 = vpack.c.bf16 %v3040, %v3038
    %v3175 = vpack.c.bf16 %v2876, %v2874
    %v3176 = vpack.c.bf16 %v3045, %v3043
    %v3177 = vpack.c.bf16 %v2881, %v2879
    %v3178 = vpack.c.bf16 %v3050, %v3048
    %v3179 = vpack.c.bf16 %v2886, %v2884
    %v3180 = vpack.c.bf16 %v3055, %v3053
    %v3181 = vpack.c.bf16 %v2891, %v2889
    %v3182 = vpack.c.bf16 %v3060, %v3058
    %v3183 = vpack.c.bf16 %v2896, %v2894
    %v3184 = vpack.c.bf16 %v3065, %v3063
    %v3185 = vpack.c.bf16 %v2901, %v2899
    %v3186 = vpack.c.bf16 %v3070, %v3068
    %v3187 = vpack.c.bf16 %v2906, %v2904
    %v3188 = vpack.c.bf16 %v3075, %v3073
    %v3189 = vpack.c.bf16 %v2911, %v2909
    %v3190 = vpack.c.bf16 %v3080, %v3078
    %v3191 = vpack.c.bf16 %v2916, %v2914
    %v3192 = vpack.c.bf16 %v3085, %v3083
    %v3193 = vpack.c.bf16 %v2921, %v2919
    %v3194 = vpack.c.bf16 %v3090, %v3088
    %v3195 = vpack.c.bf16 %v2926, %v2924
    %v3196 = vpack.c.bf16 %v3095, %v3093
    %v3197 = vpack.c.bf16 %v2931, %v2929
    %v3198 = vpack.c.bf16 %v3100, %v3098
    %v3199 = vpack.c.bf16 %v2936, %v2934
    %v3200 = vpack.c.bf16 %v3105, %v3103
    %v3201 = vpack.c.bf16 %v2941, %v2939
    %v3202 = vpack.c.bf16 %v3110, %v3108
    %v3203 = vpack.c.bf16 %v2946, %v2944
    %v3204 = vpack.c.bf16 %v3115, %v3113
    %v3205 = vpack.c.bf16 %v2951, %v2949
    %v3206 = vpack.c.bf16 %v3120, %v3118
    %v3207 = vpack.c.bf16 %v2956, %v2954
    %v3208 = vpack.c.bf16 %v3125, %v3123
    %v3209 = vpack.c.bf16 %v2961, %v2959
    %v3210 = vpack.c.bf16 %v3130, %v3128
    %v3211 = vpack.c.bf16 %v2966, %v2964
    %v3212 = vpack.c.bf16 %v3135, %v3133
    %v3213 = vpack.c.bf16 %v2971, %v2969
    %v3214 = vpack.c.bf16 %v3140, %v3138
    %v3215 = vpack.c.bf16 %v2976, %v2974
    %v3216 = vpack.c.bf16 %v3145, %v3143
    %v3217 = vpack.c.bf16 %v2981, %v2979
    %v3218 = vpack.c.bf16 %v3150, %v3148
    %v3219 = vpack.c.bf16 %v2986, %v2984
    %v3220 = vpack.c.bf16 %v3155, %v3153
    %3221 = vmatpush.bf16.msra.mxu0 %v3171
    %3222 = vmatpush.bf16.msra.mxu0 %v3169
    %3223 = vmatpush.bf16.msra.mxu0 %v3167
    %3224 = vmatpush.bf16.msra.mxu0 %v3165
    %3225 = vmatpush.bf16.msra.mxu0 %v3163
    %3226 = vmatpush.bf16.msra.mxu0 %v3161
    %3227 = vmatpush.bf16.msra.mxu0 %v3159
    %3228 = vmatpush.bf16.msra.mxu0 %v3157
    %3229 = vmatmul.bf16.gmra.mxu0 %v2152
    %v3230 = vpop.f32.mrf.mxu0
    %v3231 = vadd.f32 %v2134, %v3230
    %v3232 = vpop.f32.mrf.mxu0
    %3233 = vdwg.mxu0
    %3234 = vmatpush.bf16.msra.mxu0 %v3187
    %3235 = vmatpush.bf16.msra.mxu0 %v3185
    %3236 = vmatpush.bf16.msra.mxu0 %v3183
    %3237 = vmatpush.bf16.msra.mxu0 %v3181
    %3238 = vmatpush.bf16.msra.mxu0 %v3179
    %3239 = vmatpush.bf16.msra.mxu0 %v3177
    %3240 = vmatpush.bf16.msra.mxu0 %v3175
    %3241 = vmatpush.bf16.msra.mxu0 %v3173
    %3242 = vmatmul.bf16.gmra.mxu0 %v2153
    %v3243 = vpop.f32.mrf.mxu0
    %v3244 = vadd.f32 %v3231, %v3243
    %v3245 = vpop.f32.mrf.mxu0
    %3246 = vdwg.mxu0
    %3247 = vmatpush.bf16.msra.mxu0 %v3203
    %3248 = vmatpush.bf16.msra.mxu0 %v3201
    %3249 = vmatpush.bf16.msra.mxu0 %v3199
    %3250 = vmatpush.bf16.msra.mxu0 %v3197
    %3251 = vmatpush.bf16.msra.mxu0 %v3195
    %3252 = vmatpush.bf16.msra.mxu0 %v3193
    %3253 = vmatpush.bf16.msra.mxu0 %v3191
    %3254 = vmatpush.bf16.msra.mxu0 %v3189
    %3255 = vmatmul.bf16.gmra.mxu0 %v2154
    %v3256 = vpop.f32.mrf.mxu0
    %v3257 = vadd.f32 %v3244, %v3256
    %v3258 = vpop.f32.mrf.mxu0
    %3259 = vdwg.mxu0
    %3260 = vmatpush.bf16.msra.mxu0 %v3219
    %3261 = vmatpush.bf16.msra.mxu0 %v3217
    %3262 = vmatpush.bf16.msra.mxu0 %v3215
    %3263 = vmatpush.bf16.msra.mxu0 %v3213
    %3264 = vmatpush.bf16.msra.mxu0 %v3211
    %3265 = vmatpush.bf16.msra.mxu0 %v3209
    %3266 = vmatpush.bf16.msra.mxu0 %v3207
    %3267 = vmatpush.bf16.msra.mxu0 %v3205
    %3268 = vmatmul.bf16.gmra.mxu0 %v2155
    %v3269 = vpop.f32.mrf.mxu0
    %v3270 = vadd.f32 %v3257, %v3269
    %v3271 = vpop.f32.mrf.mxu0
    %3272 = vdwg.mxu0
    %3273 = vmatpush.bf16.msra.mxu0 %v3172
    %3274 = vmatpush.bf16.msra.mxu0 %v3170
    %3275 = vmatpush.bf16.msra.mxu0 %v3168
    %3276 = vmatpush.bf16.msra.mxu0 %v3166
    %3277 = vmatpush.bf16.msra.mxu0 %v3164
    %3278 = vmatpush.bf16.msra.mxu0 %v3162
    %3279 = vmatpush.bf16.msra.mxu0 %v3160
    %3280 = vmatpush.bf16.msra.mxu0 %v3158
    %3281 = vmatmul.bf16.gmra.mxu0 %v2152
    %v3282 = vpop.f32.mrf.mxu0
    %v3283 = vadd.f32 %v2134, %v3282
    %v3284 = vpop.f32.mrf.mxu0
    %3285 = vdwg.mxu0
    %3286 = vmatpush.bf16.msra.mxu0 %v3188
    %3287 = vmatpush.bf16.msra.mxu0 %v3186
    %3288 = vmatpush.bf16.msra.mxu0 %v3184
    %3289 = vmatpush.bf16.msra.mxu0 %v3182
    %3290 = vmatpush.bf16.msra.mxu0 %v3180
    %3291 = vmatpush.bf16.msra.mxu0 %v3178
    %3292 = vmatpush.bf16.msra.mxu0 %v3176
    %3293 = vmatpush.bf16.msra.mxu0 %v3174
    %3294 = vmatmul.bf16.gmra.mxu0 %v2153
    %v3295 = vpop.f32.mrf.mxu0
    %v3296 = vadd.f32 %v3283, %v3295
    %v3297 = vpop.f32.mrf.mxu0
    %3298 = vdwg.mxu0
    %3299 = vmatpush.bf16.msra.mxu0 %v3204
    %3300 = vmatpush.bf16.msra.mxu0 %v3202
    %3301 = vmatpush.bf16.msra.mxu0 %v3200
    %3302 = vmatpush.bf16.msra.mxu0 %v3198
    %3303 = vmatpush.bf16.msra.mxu0 %v3196
    %3304 = vmatpush.bf16.msra.mxu0 %v3194
    %3305 = vmatpush.bf16.msra.mxu0 %v3192
    %3306 = vmatpush.bf16.msra.mxu0 %v3190
    %3307 = vmatmul.bf16.gmra.mxu0 %v2154
    %v3308 = vpop.f32.mrf.mxu0
    %v3309 = vadd.f32 %v3296, %v3308
    %v3310 = vpop.f32.mrf.mxu0
    %3311 = vdwg.mxu0
    %3312 = vmatpush.bf16.msra.mxu0 %v3220
    %3313 = vmatpush.bf16.msra.mxu0 %v3218
    %3314 = vmatpush.bf16.msra.mxu0 %v3216
    %3315 = vmatpush.bf16.msra.mxu0 %v3214
    %3316 = vmatpush.bf16.msra.mxu0 %v3212
    %3317 = vmatpush.bf16.msra.mxu0 %v3210
    %3318 = vmatpush.bf16.msra.mxu0 %v3208
    %3319 = vmatpush.bf16.msra.mxu0 %v3206
    %3320 = vmatmul.bf16.gmra.mxu0 %v2155
    %v3321 = vpop.f32.mrf.mxu0
    %v3322 = vadd.f32 %v3309, %v3321
    %v3323 = vpop.f32.mrf.mxu0
    %3324 = vdwg.mxu0
    %v3325 = vsub.f32 %v3270, %v2287
    %v3326 = vsub.f32 %v3322, %v2288
    %v3327 = vmul.f32 %v3325, %v3325
    %v3328 = vmul.f32 %v3326, %v3326
    %v3329 = vadd.f32 %v3327, %v3328
    %3330 = vadd.xlane.f32.xlu0 %v3329
    %v3331 = vpop.xlane.xlu0 %3330
    %v3332 = vrot.slane %v3331, 4
    %v3333 = vadd.f32 %v3331, %v3332
    %v3334 = vrot.slane %v3333, 2
    %v3335 = vadd.f32 %v3333, %v3334
    %v3336 = vrot.slane %v3335, 1
    %v3337 = vadd.f32 %v3335, %v3336
    %v3338 = vstv %s2282
    %v3339 = vmul.f32 %v3338, %v3337
    %v3340 = vadd.f32 %v2279, %v3339
    %v3341 = vmul.f32 %v3340, 0.00024414063
    %vm3342 = vcmask 0
    %3343 = vst.msk [vmem:[#allocation5] sm:$0x1] %vm3342, %v3341
    // Predicated region
    $region34: #{audio_diffusion_forward.1} parent=1 // pred_check
      _
    $region35: #{audio_diffusion_forward.1} parent=1 // pred_check_branch
      %3345 = sbr.rel (0) target = $region37
    $region36: #{audio_diffusion_forward.1} parent=1 // pred_region
      %3347 = vsyncadd [#allocation3], 0
      %s3349 = sshll.u32 [#allocation5], 4
      %s3350 = int_to_ptr.vmem [resolvable:$true] %s3349
      %s3351 = sshll.u32 %s7, 4
      %s3352 = int_to_ptr.hbm [resolvable:$true] %s3351
      %3354 = dma.vmem_to_hbm [thread:$0]  %s3350, 16, %s3352, [#allocation3]
    $region37: #{audio_diffusion_forward.1} parent=1 // pred_fallthru
      _
    // Predicated region
    $region38: #{audio_diffusion_forward.1} parent=1 // pred_check
      _
    $region39: #{audio_diffusion_forward.1} parent=1 // pred_check_branch
      %3356 = sbr.rel (0) target = $region41
    $region40: #{audio_diffusion_forward.1} parent=1 // pred_region
      %3358 = dma.done [#allocation3], 16
    $region41: #{audio_diffusion_forward.1} parent=1 // pred_fallthru
      _
    %3359 = vsyncpa [#allocation3], 1
    %3360 = vsyncpa [#allocation4], 1

</llo_original>
